<compile_context>
chip_gen: v7x
topology: tpu7x:2x2x1
jax: 0.10.0
libtpu: 0.0.40
codegen_flags: <defaults>
</compile_context>

<pallas_src>
import functools

import jax
import jax.numpy as jnp
from jax import lax
from jax.experimental import pallas as pl
from jax.experimental.pallas import tpu as pltpu


# ----------------------------------------------------------------------------
# Fused Pallas kernel: encoder stem -> attention fusion -> classification head
# ----------------------------------------------------------------------------

def _mmfnet_kernel(patch_ref, struc_ref, pool_ref,
                   wconv_ref, bconv_ref,
                   wimg_ref, bimg_ref,
                   wsp_ref, bsp_ref,
                   wqkv_ref, wo_ref,
                   w1_ref, b1_ref, w2_ref, b2_ref, w3_ref, b3_ref,
                   seg_ref, segt_ref,
                   out_ref, *, num_heads):
    TB = out_ref.shape[0]                 # batch tile (multiple of 8)
    D = wo_ref.shape[0]                   # fusion dim (256)
    hd = D // num_heads
    scale = 1.0 / jnp.sqrt(jnp.float32(hd))

    def mm(x, w_ref):
        # bf16 x bf16 on the MXU, f32 accumulation.
        return jnp.dot(x.astype(jnp.bfloat16), w_ref[...],
                       preferred_element_type=jnp.float32)

    # ---- image encoder stem (TODO(synk): stand-in for the frozen
    #      InceptionResnetV1('vggface2') backbone: 3x3 conv -> ReLU -> GAP;
    #      the trailing FC to 512 is folded into wimg at init time) ----
    h = jnp.maximum(mm(patch_ref[...], wconv_ref) + bconv_ref[...], 0.0)   # [TB*P, C1]

    # Global average pool over the P patches of each sample, as a precomputed
    # block-diagonal [TB, TB*P] matmul (keeps everything 2-D, no reshapes).
    pooled = jnp.dot(pool_ref[...], h, preferred_element_type=jnp.float32)  # [TB, C1]

    # ---- fusion: project both modalities to D-dim tokens ----
    t_img = mm(pooled, wimg_ref) + bimg_ref[...]                            # [TB, D]
    t_str = mm(struc_ref[...], wsp_ref) + bsp_ref[...]                      # [TB, D]

    # Token slab: rows [0, TB) = image tokens, rows [TB, 2TB) = struct tokens.
    tokens = jnp.concatenate([t_img, t_str], axis=0)                        # [2TB, D]

    # Single merged QKV matmul.
    qkv = mm(tokens, wqkv_ref)                                              # [2TB, 3D]
    q_all = qkv[:, :D]
    k_img = qkv[:TB, D:2 * D]
    k_str = qkv[TB:, D:2 * D]
    v_img = qkv[:TB, 2 * D:]
    v_str = qkv[TB:, 2 * D:]

    # Difference form of the 2-key attention (exact): only the diffs and
    # v_str need to be tiled to cover both query halves.
    kd = k_img - k_str
    vd = v_img - v_str
    k_diff2 = jnp.concatenate([kd, kd], axis=0)                             # [2TB, D]
    v_diff2 = jnp.concatenate([vd, vd], axis=0)
    v_str2 = jnp.concatenate([v_str, v_str], axis=0)

    # Per-head score reduction via a precomputed one-hot segment matmul.
    s_diff = jnp.dot(q_all * k_diff2, seg_ref[...],
                     preferred_element_type=jnp.float32) * scale            # [2TB, H]
    # Softmax over 2 keys == sigmoid of the score difference (exact).
    p_img = 1.0 / (1.0 + jnp.exp(-s_diff))                                  # [2TB, H]
    # Broadcast per-head probabilities back across their head lanes.
    p_full = jnp.dot(p_img, segt_ref[...],
                     preferred_element_type=jnp.float32)                    # [2TB, D]
    attn = v_str2 + p_full * v_diff2                                        # [2TB, D]

    attn = mm(attn, wo_ref)
    fused = tokens + attn                                                   # residual
    feat = 0.5 * (fused[:TB, :] + fused[TB:, :])                            # mean over 2 tokens

    # ---- classification head: 256 -> 512 -> 128 -> (1 padded to 128 lanes) ----
    h1 = jnp.maximum(mm(feat, w1_ref) + b1_ref[...], 0.0)
    h2 = jnp.maximum(mm(h1, w2_ref) + b2_ref[...], 0.0)
    out_ref[...] = mm(h2, w3_ref) + b3_ref[...]                             # [TB, 128]


# ----------------------------------------------------------------------------
# Wrapper
# ----------------------------------------------------------------------------

def mmfnet_forward(folded_params, imgs_nchw, x_struc, output_logits=True,
                   block_rows=64):
    p = folded_params

    # NCHW (PyTorch) -> NHWC (kernel layout)
    x = jnp.transpose(imgs_nchw, (0, 2, 3, 1)).astype(jnp.float32)
    xs = x_struc.astype(jnp.float32)
    B = x.shape[0]

    # Batch tile: multiple of the f32 sublane tile (8); pad batch so the grid
    # divides evenly.  block_rows is kept modest so per-step VMEM stays flat.
    B8 = max(8, ((B + 7) // 8) * 8)
    TB = min(block_rows, B8)
    B_pad = ((B8 + TB - 1) // TB) * TB
    if B_pad != B:
        x = jnp.pad(x, ((0, B_pad - B), (0, 0), (0, 0), (0, 0)))
        xs = jnp.pad(xs, ((0, B_pad - B), (0, 0)))

    # im2col for the 3x3 stride-2 padding-1 conv stem (glue; matmul in Pallas).
    # Explicit symmetric padding matches PyTorch Conv2d(padding=1).
    patches = lax.conv_general_dilated_patches(
        x, filter_shape=(3, 3), window_strides=(2, 2),
        padding=((1, 1), (1, 1)),
        dimension_numbers=("NHWC", "HWIO", "NHWC"))
    P = patches.shape[1] * patches.shape[2]
    K = patches.shape[3]
    patches = patches.reshape(B_pad * P, K)            # [B_pad*P, K] 2-D slab

    # Precomputed per-tile block-diagonal average-pool mask [TB, TB*P].
    rows = jnp.arange(TB, dtype=jnp.int32)[:, None]
    cols = jnp.arange(TB * P, dtype=jnp.int32)[None, :] // P
    pool = jnp.where(rows == cols, jnp.float32(1.0 / P), jnp.float32(0.0))

    S = xs.shape[1]
    n_lanes_out = p["w3"].shape[1]                      # 128 (lane-dense output)
    grid = (B_pad // TB,)

    def resident(arr):
        # Whole-array block, constant index map -> DMA'd once, resident in
        # VMEM across all grid steps.
        return pl.BlockSpec(arr.shape, lambda i: (0, 0))

    weights = [p["wconv"], p["bconv"], p["wimg"], p["bimg"], p["wsp"], p["bsp"],
               p["wqkv"], p["wo"], p["w1"], p["b1"], p["w2"], p["b2"],
               p["w3"], p["b3"], p["seg"], p["segT"]]

    in_specs = ([pl.BlockSpec((TB * P, K), lambda i: (i, 0)),   # patches (tiled)
                 pl.BlockSpec((TB, S), lambda i: (i, 0)),       # struct feats (tiled)
                 resident(pool)]                                 # pool mask
                + [resident(w) for w in weights])

    # Crude cost hint so XLA can overlap this tiny call with the glue ops.
    wbytes = sum(int(w.size) * w.dtype.itemsize for w in weights)
    wbytes += int(pool.size) * 4
    ce = pl.CostEstimate(flops=1_600_000 * B_pad,
                         transcendentals=8 * B_pad,
                         bytes_accessed=wbytes + B_pad * 8 * 1024)

    kernel = functools.partial(_mmfnet_kernel, num_heads=4)
    y = pl.pallas_call(
        kernel,
        out_shape=jax.ShapeDtypeStruct((B_pad, n_lanes_out), jnp.float32),
        grid=grid,
        in_specs=in_specs,
        out_specs=pl.BlockSpec((TB, n_lanes_out), lambda i: (i, 0)),
        compiler_params=pltpu.CompilerParams(
            dimension_semantics=("parallel",),
            vmem_limit_bytes=48 * 1024 * 1024),
        cost_estimate=ce,
    )(patches, xs, pool, *weights)

    y = y[:B, 0:1]                                       # real logit is lane 0
    if not output_logits:
        y = 1.0 / (1.0 + jnp.exp(-y))                    # wrapper-side sigmoid
    return y


# ----------------------------------------------------------------------------
# Parameters
# ----------------------------------------------------------------------------

def init_params(key, in_ch=3, struc_dim=8, conv_out=16, embed_dim=512, fuse_dim=256):
    keys = jax.random.split(key, 16)

    def dense(k, fan_in, fan_out):
        s = 1.0 / jnp.sqrt(jnp.float32(fan_in))
        return jax.random.normal(k, (fan_in, fan_out), jnp.float32) * s

    K = in_ch * 3 * 3
    enc = dict(
        wconv=dense(keys[0], K, conv_out),
        bconv=jnp.zeros((1, conv_out), jnp.float32),
        wfc=dense(keys[1], conv_out, embed_dim),
        bfc=jnp.zeros((1, embed_dim), jnp.float32),
    )
    fuse = dict(
        wip=dense(keys[2], embed_dim, fuse_dim),
        bip=jnp.zeros((1, fuse_dim), jnp.float32),
        wsp=dense(keys[3], struc_dim, fuse_dim),
        bsp=jnp.zeros((1, fuse_dim), jnp.float32),
        wq=dense(keys[4], fuse_dim, fuse_dim),
        wk=dense(keys[5], fuse_dim, fuse_dim),
        wv=dense(keys[6], fuse_dim, fuse_dim),
        wo=dense(keys[7], fuse_dim, fuse_dim),
    )
    head = dict(
        w1=dense(keys[8], fuse_dim, 512),
        b1=jnp.zeros((1, 512), jnp.float32),
        w2=dense(keys[9], 512, 128),
        b2=jnp.zeros((1, 128), jnp.float32),
        w3=dense(keys[10], 128, 1),
        b3=jnp.zeros((1, 1), jnp.float32),
    )
    return dict(enc=enc, fuse=fuse, head=head)


def fold_params(params, num_heads=4):
    """Exact, one-time parameter fold for the fused kernel.

    * encoder FC folded into the fusion image projection (no nonlinearity in
      between -> mathematically identical);
    * wq/wk/wv concatenated into one [D, 3D] QKV weight;
    * all matmul weights cast to bf16 (f32 accumulation in-kernel);
    * final 128->1 layer zero-padded to 128 output lanes (lane-dense store);
    * one-hot per-head segment masks precomputed (must stay one-hot for the
      sigmoid-softmax / 1-p identities to remain exact).
    """
    enc, fuse, head = params["enc"], params["fuse"], params["head"]

    wimg = enc["wfc"] @ fuse["wip"]                    # [conv_out, fuse_dim]
    bimg = enc["bfc"] @ fuse["wip"] + fuse["bip"]      # [1, fuse_dim]
    wqkv = jnp.concatenate([fuse["wq"], fuse["wk"], fuse["wv"]], axis=1)

    D = fuse["wo"].shape[0]
    hd = D // num_heads
    head_id = jnp.arange(D, dtype=jnp.int32) // hd
    seg = (head_id[:, None] ==
           jnp.arange(num_heads, dtype=jnp.int32)[None, :]).astype(jnp.float32)  # [D, H]
    segT = seg.T                                                                  # [H, D]

    w3 = jnp.pad(head["w3"], ((0, 0), (0, 127)))       # [128, 128], lanes 1.. = 0
    b3 = jnp.pad(head["b3"], ((0, 0), (0, 127)))       # [1, 128]

    bf16 = lambda w: w.astype(jnp.bfloat16)
    return dict(
        wconv=bf16(enc["wconv"]), bconv=enc["bconv"],
        wimg=bf16(wimg), bimg=bimg,
        wsp=bf16(fuse["wsp"]), bsp=fuse["bsp"],
        wqkv=bf16(wqkv), wo=bf16(fuse["wo"]),
        w1=bf16(head["w1"]), b1=head["b1"],
        w2=bf16(head["w2"]), b2=head["b2"],
        w3=bf16(w3), b3=b3,
        seg=seg, segT=segT,
    )


# ----------------------------------------------------------------------------

if __name__ == "__main__":
    key = jax.random.PRNGKey(0)
    k_img, k_struc, k_param = jax.random.split(key, 3)

    imgs = jax.random.normal(k_img, (2, 3, 16, 16), jnp.float32)   # PyTorch NCHW
    x_struc = jax.random.normal(k_struc, (2, 8), jnp.float32)      # structured features
    params = fold_params(init_params(k_param))

    y_logits = mmfnet_forward(params, imgs, x_struc, output_logits=True)
    y_probs = mmfnet_forward(params, imgs, x_struc, output_logits=False)
    jax.block_until_ready((y_logits, y_probs))

    assert y_logits.shape == (2, 1) and y_probs.shape == (2, 1)
    assert bool(jnp.all(jnp.isfinite(y_logits)))
    assert bool(jnp.all((y_probs >= 0.0) & (y_probs <= 1.0)))
    assert bool(jnp.allclose(1.0 / (1.0 + jnp.exp(-y_logits)), y_probs, atol=1e-6))
    print("KERNEL_OK")
</pallas_src>

<mosaic_0001>
module attributes {stable_mosaic.version = 11 : i64} {
  func.func @_mmfnet_kernel(%arg0: i32, %arg1: memref<512x27xf32, #tpu.memory_space<vmem>>, %arg2: memref<8x8xf32, #tpu.memory_space<vmem>>, %arg3: memref<8x512xf32, #tpu.memory_space<vmem>>, %arg4: memref<27x16xbf16, #tpu.memory_space<vmem>>, %arg5: memref<1x16xf32, #tpu.memory_space<vmem>>, %arg6: memref<16x256xbf16, #tpu.memory_space<vmem>>, %arg7: memref<1x256xf32, #tpu.memory_space<vmem>>, %arg8: memref<8x256xbf16, #tpu.memory_space<vmem>>, %arg9: memref<1x256xf32, #tpu.memory_space<vmem>>, %arg10: memref<256x768xbf16, #tpu.memory_space<vmem>>, %arg11: memref<256x256xbf16, #tpu.memory_space<vmem>>, %arg12: memref<256x512xbf16, #tpu.memory_space<vmem>>, %arg13: memref<1x512xf32, #tpu.memory_space<vmem>>, %arg14: memref<512x128xbf16, #tpu.memory_space<vmem>>, %arg15: memref<1x128xf32, #tpu.memory_space<vmem>>, %arg16: memref<128x128xbf16, #tpu.memory_space<vmem>>, %arg17: memref<1x128xf32, #tpu.memory_space<vmem>>, %arg18: memref<256x4xf32, #tpu.memory_space<vmem>>, %arg19: memref<4x256xf32, #tpu.memory_space<vmem>>, %arg20: memref<8x128xf32, #tpu.memory_space<vmem>>) attributes {dimension_semantics = [#tpu.dimension_semantics<parallel>], iteration_bounds = array<i64: 1>, scalar_prefetch = 0 : i64, scratch_operands = 0 : i64, tpu.core_type = #tpu.core_type<tc>, window_params = [{transform_indices = @transform_0, window_bounds = array<i64: 512, 27>}, {transform_indices = @transform_1, window_bounds = array<i64: 8, 8>}, {pipeline_mode = #tpu.pipeline_mode<synchronous>, transform_indices = @transform_2, window_bounds = array<i64: 8, 512>}, {pipeline_mode = #tpu.pipeline_mode<synchronous>, transform_indices = @transform_3, window_bounds = array<i64: 27, 16>}, {pipeline_mode = #tpu.pipeline_mode<synchronous>, transform_indices = @transform_4, window_bounds = array<i64: 1, 16>}, {pipeline_mode = #tpu.pipeline_mode<synchronous>, transform_indices = @transform_5, window_bounds = array<i64: 16, 256>}, {pipeline_mode = #tpu.pipeline_mode<synchronous>, transform_indices = @transform_6, window_bounds = array<i64: 1, 256>}, {pipeline_mode = #tpu.pipeline_mode<synchronous>, transform_indices = @transform_7, window_bounds = array<i64: 8, 256>}, {pipeline_mode = #tpu.pipeline_mode<synchronous>, transform_indices = @transform_8, window_bounds = array<i64: 1, 256>}, {pipeline_mode = #tpu.pipeline_mode<synchronous>, transform_indices = @transform_9, window_bounds = array<i64: 256, 768>}, {pipeline_mode = #tpu.pipeline_mode<synchronous>, transform_indices = @transform_10, window_bounds = array<i64: 256, 256>}, {pipeline_mode = #tpu.pipeline_mode<synchronous>, transform_indices = @transform_11, window_bounds = array<i64: 256, 512>}, {pipeline_mode = #tpu.pipeline_mode<synchronous>, transform_indices = @transform_12, window_bounds = array<i64: 1, 512>}, {pipeline_mode = #tpu.pipeline_mode<synchronous>, transform_indices = @transform_13, window_bounds = array<i64: 512, 128>}, {pipeline_mode = #tpu.pipeline_mode<synchronous>, transform_indices = @transform_14, window_bounds = array<i64: 1, 128>}, {pipeline_mode = #tpu.pipeline_mode<synchronous>, transform_indices = @transform_15, window_bounds = array<i64: 128, 128>}, {pipeline_mode = #tpu.pipeline_mode<synchronous>, transform_indices = @transform_16, window_bounds = array<i64: 1, 128>}, {pipeline_mode = #tpu.pipeline_mode<synchronous>, transform_indices = @transform_17, window_bounds = array<i64: 256, 4>}, {pipeline_mode = #tpu.pipeline_mode<synchronous>, transform_indices = @transform_18, window_bounds = array<i64: 4, 256>}, {transform_indices = @transform_19, window_bounds = array<i64: 8, 128>}]} {
    %cst = arith.constant 6.400000e+01 : f32
    %0 = math.sqrt %cst : f32
    %cst_0 = arith.constant 1.000000e+00 : f32
    %1 = arith.divf %cst_0, %0 : f32
    %c0 = arith.constant 0 : index
    %c0_1 = arith.constant 0 : index
    %2 = vector.load %arg1[%c0, %c0_1] : memref<512x27xf32, #tpu.memory_space<vmem>>, vector<512x27xf32>
    %3 = arith.truncf %2 : vector<512x27xf32> to vector<512x27xbf16>
    %c0_2 = arith.constant 0 : index
    %c0_3 = arith.constant 0 : index
    %4 = vector.load %arg4[%c0_2, %c0_3] : memref<27x16xbf16, #tpu.memory_space<vmem>>, vector<27x16xbf16>
    %cst_4 = arith.constant dense<0.000000e+00> : vector<512x16xf32>
    %5 = tpu.matmul %3, %4, %cst_4 {dimension_numbers = #tpu.dot_dimension_numbers<[1], [0], [0], [1], [0, 0, 1, 1], [], []>} : vector<512x27xbf16>, vector<27x16xbf16>, vector<512x16xf32> -> vector<512x16xf32>
    %c0_5 = arith.constant 0 : index
    %c0_6 = arith.constant 0 : index
    %6 = vector.load %arg5[%c0_5, %c0_6] : memref<1x16xf32, #tpu.memory_space<vmem>>, vector<1x16xf32>
    %7 = vector.broadcast %6 : vector<1x16xf32> to vector<512x16xf32>
    %8 = arith.addf %5, %7 : vector<512x16xf32>
    %cst_7 = arith.constant 0.000000e+00 : f32
    %9 = vector.broadcast %cst_7 : f32 to vector<512x16xf32>
    %10 = arith.maximumf %8, %9 : vector<512x16xf32>
    %c0_8 = arith.constant 0 : index
    %c0_9 = arith.constant 0 : index
    %11 = vector.load %arg3[%c0_8, %c0_9] : memref<8x512xf32, #tpu.memory_space<vmem>>, vector<8x512xf32>
    %cst_10 = arith.constant dense<0.000000e+00> : vector<8x16xf32>
    %12 = tpu.matmul %11, %10, %cst_10 {dimension_numbers = #tpu.dot_dimension_numbers<[1], [0], [0], [1], [0, 0, 1, 1], [], []>} : vector<8x512xf32>, vector<512x16xf32>, vector<8x16xf32> -> vector<8x16xf32>
    %13 = arith.truncf %12 : vector<8x16xf32> to vector<8x16xbf16>
    %c0_11 = arith.constant 0 : index
    %c0_12 = arith.constant 0 : index
    %14 = vector.load %arg6[%c0_11, %c0_12] : memref<16x256xbf16, #tpu.memory_space<vmem>>, vector<16x256xbf16>
    %cst_13 = arith.constant dense<0.000000e+00> : vector<8x256xf32>
    %15 = tpu.matmul %13, %14, %cst_13 {dimension_numbers = #tpu.dot_dimension_numbers<[1], [0], [0], [1], [0, 0, 1, 1], [], []>} : vector<8x16xbf16>, vector<16x256xbf16>, vector<8x256xf32> -> vector<8x256xf32>
    %c0_14 = arith.constant 0 : index
    %c0_15 = arith.constant 0 : index
    %16 = vector.load %arg7[%c0_14, %c0_15] : memref<1x256xf32, #tpu.memory_space<vmem>>, vector<1x256xf32>
    %17 = vector.broadcast %16 : vector<1x256xf32> to vector<8x256xf32>
    %18 = arith.addf %15, %17 : vector<8x256xf32>
    %c0_16 = arith.constant 0 : index
    %c0_17 = arith.constant 0 : index
    %19 = vector.load %arg2[%c0_16, %c0_17] : memref<8x8xf32, #tpu.memory_space<vmem>>, vector<8x8xf32>
    %20 = arith.truncf %19 : vector<8x8xf32> to vector<8x8xbf16>
    %c0_18 = arith.constant 0 : index
    %c0_19 = arith.constant 0 : index
    %21 = vector.load %arg8[%c0_18, %c0_19] : memref<8x256xbf16, #tpu.memory_space<vmem>>, vector<8x256xbf16>
    %cst_20 = arith.constant dense<0.000000e+00> : vector<8x256xf32>
    %22 = tpu.matmul %20, %21, %cst_20 {dimension_numbers = #tpu.dot_dimension_numbers<[1], [0], [0], [1], [0, 0, 1, 1], [], []>} : vector<8x8xbf16>, vector<8x256xbf16>, vector<8x256xf32> -> vector<8x256xf32>
    %c0_21 = arith.constant 0 : index
    %c0_22 = arith.constant 0 : index
    %23 = vector.load %arg9[%c0_21, %c0_22] : memref<1x256xf32, #tpu.memory_space<vmem>>, vector<1x256xf32>
    %24 = vector.broadcast %23 : vector<1x256xf32> to vector<8x256xf32>
    %25 = arith.addf %22, %24 : vector<8x256xf32>
    %26 = tpu.concatenate %18, %25 in 0 : vector<8x256xf32>, vector<8x256xf32> -> vector<16x256xf32>
    %27 = arith.truncf %26 : vector<16x256xf32> to vector<16x256xbf16>
    %c0_23 = arith.constant 0 : index
    %c0_24 = arith.constant 0 : index
    %28 = vector.load %arg10[%c0_23, %c0_24] : memref<256x768xbf16, #tpu.memory_space<vmem>>, vector<256x768xbf16>
    %cst_25 = arith.constant dense<0.000000e+00> : vector<16x768xf32>
    %29 = tpu.matmul %27, %28, %cst_25 {dimension_numbers = #tpu.dot_dimension_numbers<[1], [0], [0], [1], [0, 0, 1, 1], [], []>} : vector<16x256xbf16>, vector<256x768xbf16>, vector<16x768xf32> -> vector<16x768xf32>
    %30 = vector.extract_strided_slice %29 {offsets = [0, 0], sizes = [16, 256], strides = [1, 1]} : vector<16x768xf32> to vector<16x256xf32>
    %31 = vector.extract_strided_slice %29 {offsets = [0, 256], sizes = [8, 256], strides = [1, 1]} : vector<16x768xf32> to vector<8x256xf32>
    %32 = vector.extract_strided_slice %29 {offsets = [8, 256], sizes = [8, 256], strides = [1, 1]} : vector<16x768xf32> to vector<8x256xf32>
    %33 = vector.extract_strided_slice %29 {offsets = [0, 512], sizes = [8, 256], strides = [1, 1]} : vector<16x768xf32> to vector<8x256xf32>
    %34 = vector.extract_strided_slice %29 {offsets = [8, 512], sizes = [8, 256], strides = [1, 1]} : vector<16x768xf32> to vector<8x256xf32>
    %35 = arith.subf %31, %32 : vector<8x256xf32>
    %36 = arith.subf %33, %34 : vector<8x256xf32>
    %37 = tpu.concatenate %35, %35 in 0 : vector<8x256xf32>, vector<8x256xf32> -> vector<16x256xf32>
    %38 = tpu.concatenate %36, %36 in 0 : vector<8x256xf32>, vector<8x256xf32> -> vector<16x256xf32>
    %39 = tpu.concatenate %34, %34 in 0 : vector<8x256xf32>, vector<8x256xf32> -> vector<16x256xf32>
    %40 = arith.mulf %30, %37 : vector<16x256xf32>
    %c0_26 = arith.constant 0 : index
    %c0_27 = arith.constant 0 : index
    %41 = vector.load %arg18[%c0_26, %c0_27] : memref<256x4xf32, #tpu.memory_space<vmem>>, vector<256x4xf32>
    %cst_28 = arith.constant dense<0.000000e+00> : vector<16x4xf32>
    %42 = tpu.matmul %40, %41, %cst_28 {dimension_numbers = #tpu.dot_dimension_numbers<[1], [0], [0], [1], [0, 0, 1, 1], [], []>} : vector<16x256xf32>, vector<256x4xf32>, vector<16x4xf32> -> vector<16x4xf32>
    %43 = vector.broadcast %1 : f32 to vector<16x4xf32>
    %44 = arith.mulf %42, %43 : vector<16x4xf32>
    %cst_29 = arith.constant 0.000000e+00 : f32
    %45 = vector.broadcast %cst_29 : f32 to vector<16x4xf32>
    %46 = arith.subf %45, %44 : vector<16x4xf32>
    %47 = math.exp %46 : vector<16x4xf32>
    %cst_30 = arith.constant 1.000000e+00 : f32
    %48 = vector.broadcast %cst_30 : f32 to vector<16x4xf32>
    %49 = arith.addf %48, %47 : vector<16x4xf32>
    %cst_31 = arith.constant 1.000000e+00 : f32
    %50 = vector.broadcast %cst_31 : f32 to vector<16x4xf32>
    %51 = arith.divf %50, %49 : vector<16x4xf32>
    %c0_32 = arith.constant 0 : index
    %c0_33 = arith.constant 0 : index
    %52 = vector.load %arg19[%c0_32, %c0_33] : memref<4x256xf32, #tpu.memory_space<vmem>>, vector<4x256xf32>
    %cst_34 = arith.constant dense<0.000000e+00> : vector<16x256xf32>
    %53 = tpu.matmul %51, %52, %cst_34 {dimension_numbers = #tpu.dot_dimension_numbers<[1], [0], [0], [1], [0, 0, 1, 1], [], []>} : vector<16x4xf32>, vector<4x256xf32>, vector<16x256xf32> -> vector<16x256xf32>
    %54 = arith.mulf %53, %38 : vector<16x256xf32>
    %55 = arith.addf %39, %54 : vector<16x256xf32>
    %56 = arith.truncf %55 : vector<16x256xf32> to vector<16x256xbf16>
    %c0_35 = arith.constant 0 : index
    %c0_36 = arith.constant 0 : index
    %57 = vector.load %arg11[%c0_35, %c0_36] : memref<256x256xbf16, #tpu.memory_space<vmem>>, vector<256x256xbf16>
    %cst_37 = arith.constant dense<0.000000e+00> : vector<16x256xf32>
    %58 = tpu.matmul %56, %57, %cst_37 {dimension_numbers = #tpu.dot_dimension_numbers<[1], [0], [0], [1], [0, 0, 1, 1], [], []>} : vector<16x256xbf16>, vector<256x256xbf16>, vector<16x256xf32> -> vector<16x256xf32>
    %59 = arith.addf %26, %58 : vector<16x256xf32>
    %60 = vector.extract_strided_slice %59 {offsets = [0, 0], sizes = [8, 256], strides = [1, 1]} : vector<16x256xf32> to vector<8x256xf32>
    %61 = vector.extract_strided_slice %59 {offsets = [8, 0], sizes = [8, 256], strides = [1, 1]} : vector<16x256xf32> to vector<8x256xf32>
    %62 = arith.addf %60, %61 : vector<8x256xf32>
    %cst_38 = arith.constant 5.000000e-01 : f32
    %63 = vector.broadcast %cst_38 : f32 to vector<8x256xf32>
    %64 = arith.mulf %63, %62 : vector<8x256xf32>
    %65 = arith.truncf %64 : vector<8x256xf32> to vector<8x256xbf16>
    %c0_39 = arith.constant 0 : index
    %c0_40 = arith.constant 0 : index
    %66 = vector.load %arg12[%c0_39, %c0_40] : memref<256x512xbf16, #tpu.memory_space<vmem>>, vector<256x512xbf16>
    %cst_41 = arith.constant dense<0.000000e+00> : vector<8x512xf32>
    %67 = tpu.matmul %65, %66, %cst_41 {dimension_numbers = #tpu.dot_dimension_numbers<[1], [0], [0], [1], [0, 0, 1, 1], [], []>} : vector<8x256xbf16>, vector<256x512xbf16>, vector<8x512xf32> -> vector<8x512xf32>
    %c0_42 = arith.constant 0 : index
    %c0_43 = arith.constant 0 : index
    %68 = vector.load %arg13[%c0_42, %c0_43] : memref<1x512xf32, #tpu.memory_space<vmem>>, vector<1x512xf32>
    %69 = vector.broadcast %68 : vector<1x512xf32> to vector<8x512xf32>
    %70 = arith.addf %67, %69 : vector<8x512xf32>
    %cst_44 = arith.constant 0.000000e+00 : f32
    %71 = vector.broadcast %cst_44 : f32 to vector<8x512xf32>
    %72 = arith.maximumf %70, %71 : vector<8x512xf32>
    %73 = arith.truncf %72 : vector<8x512xf32> to vector<8x512xbf16>
    %c0_45 = arith.constant 0 : index
    %c0_46 = arith.constant 0 : index
    %74 = vector.load %arg14[%c0_45, %c0_46] : memref<512x128xbf16, #tpu.memory_space<vmem>>, vector<512x128xbf16>
    %cst_47 = arith.constant dense<0.000000e+00> : vector<8x128xf32>
    %75 = tpu.matmul %73, %74, %cst_47 {dimension_numbers = #tpu.dot_dimension_numbers<[1], [0], [0], [1], [0, 0, 1, 1], [], []>} : vector<8x512xbf16>, vector<512x128xbf16>, vector<8x128xf32> -> vector<8x128xf32>
    %c0_48 = arith.constant 0 : index
    %c0_49 = arith.constant 0 : index
    %76 = vector.load %arg15[%c0_48, %c0_49] : memref<1x128xf32, #tpu.memory_space<vmem>>, vector<1x128xf32>
    %77 = vector.broadcast %76 : vector<1x128xf32> to vector<8x128xf32>
    %78 = arith.addf %75, %77 : vector<8x128xf32>
    %cst_50 = arith.constant 0.000000e+00 : f32
    %79 = vector.broadcast %cst_50 : f32 to vector<8x128xf32>
    %80 = arith.maximumf %78, %79 : vector<8x128xf32>
    %81 = arith.truncf %80 : vector<8x128xf32> to vector<8x128xbf16>
    %c0_51 = arith.constant 0 : index
    %c0_52 = arith.constant 0 : index
    %82 = vector.load %arg16[%c0_51, %c0_52] : memref<128x128xbf16, #tpu.memory_space<vmem>>, vector<128x128xbf16>
    %cst_53 = arith.constant dense<0.000000e+00> : vector<8x128xf32>
    %83 = tpu.matmul %81, %82, %cst_53 {dimension_numbers = #tpu.dot_dimension_numbers<[1], [0], [0], [1], [0, 0, 1, 1], [], []>} : vector<8x128xbf16>, vector<128x128xbf16>, vector<8x128xf32> -> vector<8x128xf32>
    %c0_54 = arith.constant 0 : index
    %c0_55 = arith.constant 0 : index
    %84 = vector.load %arg17[%c0_54, %c0_55] : memref<1x128xf32, #tpu.memory_space<vmem>>, vector<1x128xf32>
    %85 = vector.broadcast %84 : vector<1x128xf32> to vector<8x128xf32>
    %86 = arith.addf %83, %85 : vector<8x128xf32>
    %c0_56 = arith.constant 0 : index
    %c0_57 = arith.constant 0 : index
    %87 = vector.load %arg20[%c0_56, %c0_57] : memref<8x128xf32, #tpu.memory_space<vmem>>, vector<8x128xf32>
    tpu.vector_store %arg20[%c0_56, %c0_57], %86 {strides = array<i32>} : memref<8x128xf32, #tpu.memory_space<vmem>>, vector<8x128xf32>,
    return
  }
  func.func @transform_0(%arg0: i32) -> (i32, i32) {
    %c0_i32 = arith.constant 0 : i32
    %c0_i32_0 = arith.constant 0 : i32
    return %arg0, %c0_i32 : i32, i32
  }
  func.func @transform_1(%arg0: i32) -> (i32, i32) {
    %c0_i32 = arith.constant 0 : i32
    %c0_i32_0 = arith.constant 0 : i32
    return %arg0, %c0_i32 : i32, i32
  }
  func.func @transform_2(%arg0: i32) -> (i32, i32) {
    %c0_i32 = arith.constant 0 : i32
    %c0_i32_0 = arith.constant 0 : i32
    %c0_i32_1 = arith.constant 0 : i32
    return %c0_i32, %c0_i32_0 : i32, i32
  }
  func.func @transform_3(%arg0: i32) -> (i32, i32) {
    %c0_i32 = arith.constant 0 : i32
    %c0_i32_0 = arith.constant 0 : i32
    %c0_i32_1 = arith.constant 0 : i32
    return %c0_i32, %c0_i32_0 : i32, i32
  }
  func.func @transform_4(%arg0: i32) -> (i32, i32) {
    %c0_i32 = arith.constant 0 : i32
    %c0_i32_0 = arith.constant 0 : i32
    %c0_i32_1 = arith.constant 0 : i32
    return %c0_i32, %c0_i32_0 : i32, i32
  }
  func.func @transform_5(%arg0: i32) -> (i32, i32) {
    %c0_i32 = arith.constant 0 : i32
    %c0_i32_0 = arith.constant 0 : i32
    %c0_i32_1 = arith.constant 0 : i32
    return %c0_i32, %c0_i32_0 : i32, i32
  }
  func.func @transform_6(%arg0: i32) -> (i32, i32) {
    %c0_i32 = arith.constant 0 : i32
    %c0_i32_0 = arith.constant 0 : i32
    %c0_i32_1 = arith.constant 0 : i32
    return %c0_i32, %c0_i32_0 : i32, i32
  }
  func.func @transform_7(%arg0: i32) -> (i32, i32) {
    %c0_i32 = arith.constant 0 : i32
    %c0_i32_0 = arith.constant 0 : i32
    %c0_i32_1 = arith.constant 0 : i32
    return %c0_i32, %c0_i32_0 : i32, i32
  }
  func.func @transform_8(%arg0: i32) -> (i32, i32) {
    %c0_i32 = arith.constant 0 : i32
    %c0_i32_0 = arith.constant 0 : i32
    %c0_i32_1 = arith.constant 0 : i32
    return %c0_i32, %c0_i32_0 : i32, i32
  }
  func.func @transform_9(%arg0: i32) -> (i32, i32) {
    %c0_i32 = arith.constant 0 : i32
    %c0_i32_0 = arith.constant 0 : i32
    %c0_i32_1 = arith.constant 0 : i32
    return %c0_i32, %c0_i32_0 : i32, i32
  }
  func.func @transform_10(%arg0: i32) -> (i32, i32) {
    %c0_i32 = arith.constant 0 : i32
    %c0_i32_0 = arith.constant 0 : i32
    %c0_i32_1 = arith.constant 0 : i32
    return %c0_i32, %c0_i32_0 : i32, i32
  }
  func.func @transform_11(%arg0: i32) -> (i32, i32) {
    %c0_i32 = arith.constant 0 : i32
    %c0_i32_0 = arith.constant 0 : i32
    %c0_i32_1 = arith.constant 0 : i32
    return %c0_i32, %c0_i32_0 : i32, i32
  }
  func.func @transform_12(%arg0: i32) -> (i32, i32) {
    %c0_i32 = arith.constant 0 : i32
    %c0_i32_0 = arith.constant 0 : i32
    %c0_i32_1 = arith.constant 0 : i32
    return %c0_i32, %c0_i32_0 : i32, i32
  }
  func.func @transform_13(%arg0: i32) -> (i32, i32) {
    %c0_i32 = arith.constant 0 : i32
    %c0_i32_0 = arith.constant 0 : i32
    %c0_i32_1 = arith.constant 0 : i32
    return %c0_i32, %c0_i32_0 : i32, i32
  }
  func.func @transform_14(%arg0: i32) -> (i32, i32) {
    %c0_i32 = arith.constant 0 : i32
    %c0_i32_0 = arith.constant 0 : i32
    %c0_i32_1 = arith.constant 0 : i32
    return %c0_i32, %c0_i32_0 : i32, i32
  }
  func.func @transform_15(%arg0: i32) -> (i32, i32) {
    %c0_i32 = arith.constant 0 : i32
    %c0_i32_0 = arith.constant 0 : i32
    %c0_i32_1 = arith.constant 0 : i32
    return %c0_i32, %c0_i32_0 : i32, i32
  }
  func.func @transform_16(%arg0: i32) -> (i32, i32) {
    %c0_i32 = arith.constant 0 : i32
    %c0_i32_0 = arith.constant 0 : i32
    %c0_i32_1 = arith.constant 0 : i32
    return %c0_i32, %c0_i32_0 : i32, i32
  }
  func.func @transform_17(%arg0: i32) -> (i32, i32) {
    %c0_i32 = arith.constant 0 : i32
    %c0_i32_0 = arith.constant 0 : i32
    %c0_i32_1 = arith.constant 0 : i32
    return %c0_i32, %c0_i32_0 : i32, i32
  }
  func.func @transform_18(%arg0: i32) -> (i32, i32) {
    %c0_i32 = arith.constant 0 : i32
    %c0_i32_0 = arith.constant 0 : i32
    %c0_i32_1 = arith.constant 0 : i32
    return %c0_i32, %c0_i32_0 : i32, i32
  }
  func.func @transform_19(%arg0: i32) -> (i32, i32) {
    %c0_i32 = arith.constant 0 : i32
    %c0_i32_0 = arith.constant 0 : i32
    return %arg0, %c0_i32 : i32, i32
  }
}

</mosaic_0001>

<llo_original>
// kernel: tpu_custom_call.1
$region0: #{tpu_custom_call.1}
  #allocation0 [shape = 'u32[]', space=smem, size = 0x4, offset = 0x4, fixed_abs, tag = 'smem constant byte address 0x4 - core index']
  #allocation1 [shape = 'u32[144,128]{1,0:T(1,128)}', space=vmem, size = 0x12000, scoped, tag = 'internal scratch']
  %s0 = inlined_call_operand.vmem [shape: f32[512,27], index: 0, kind: input, shape index: {}]
  %s1 = inlined_call_operand.vmem [shape: f32[8,8], index: 1, kind: input, shape index: {}]
  %s2 = inlined_call_operand.vmem [shape: f32[8,512], index: 2, kind: input, shape index: {}]
  %s3 = inlined_call_operand.vmem [shape: bf16[27,16], index: 3, kind: input, shape index: {}]
  %s4 = inlined_call_operand.vmem [shape: f32[1,16], index: 4, kind: input, shape index: {}]
  %s5 = inlined_call_operand.vmem [shape: bf16[16,256], index: 5, kind: input, shape index: {}]
  %s6 = inlined_call_operand.vmem [shape: f32[1,256], index: 6, kind: input, shape index: {}]
  %s7 = inlined_call_operand.vmem [shape: bf16[8,256], index: 7, kind: input, shape index: {}]
  %s8 = inlined_call_operand.vmem [shape: f32[1,256], index: 8, kind: input, shape index: {}]
  %s9 = inlined_call_operand.vmem [shape: bf16[256,768], index: 9, kind: input, shape index: {}]
  %s10 = inlined_call_operand.hbm [shape: bf16[256,256], index: 10, kind: input, shape index: {}]
  %s11 = inlined_call_operand.hbm [shape: bf16[256,512], index: 11, kind: input, shape index: {}]
  %s12 = inlined_call_operand.vmem [shape: f32[1,512], index: 12, kind: input, shape index: {}]
  %s13 = inlined_call_operand.hbm [shape: bf16[512,128], index: 13, kind: input, shape index: {}]
  %s14 = inlined_call_operand.vmem [shape: f32[1,128], index: 14, kind: input, shape index: {}]
  %s15 = inlined_call_operand.vmem [shape: bf16[128,128], index: 15, kind: input, shape index: {}]
  %s16 = inlined_call_operand.vmem [shape: f32[1,128], index: 16, kind: input, shape index: {}]
  %s17 = inlined_call_operand.vmem [shape: f32[256,4], index: 17, kind: input, shape index: {}]
  %s18 = inlined_call_operand.vmem [shape: f32[4,256], index: 18, kind: input, shape index: {}]
  %s19 = inlined_call_operand.hbm [shape: f32[8,128], index: 19, kind: output, shape index: {}]
  %s20 = sld [smem:[#allocation0]]
  $region98: #{tpu_custom_call.1} parent=0
    _
  %s22 = ssub.s32 1, %s20
  %s23 = scalar_select 0, %s22, %s20
  $region1: #{tpu_custom_call.1} parent=0
    #allocation2 [shape = 'u8[131072]{0}', space=vmem, size = 0x20000, scoped, tag = 'input window, operand 10, single buffered']
    #allocation3 [shape = 's32[1]{0}', space=sflag, size = 0x4, scoped, tag = 'scoped memory for tpu_custom_call.1']
    #allocation4 [shape = 's32[1]{0}', space=sflag, size = 0x4, scoped, tag = 'scoped memory for tpu_custom_call.1']
    #allocation5 [shape = 'u8[262144]{0}', space=vmem, size = 0x40000, scoped, tag = 'input window, operand 11, single buffered']
    #allocation6 [shape = 's32[1]{0}', space=sflag, size = 0x4, scoped, tag = 'scoped memory for tpu_custom_call.1']
    #allocation7 [shape = 'u8[131072]{0}', space=vmem, size = 0x20000, scoped, tag = 'input window, operand 13, single buffered']
    #allocation8 [shape = 'u8[4096]{0}', space=vmem, size = 0x1000, scoped, tag = 'output window, operand 0, single buffered']
    %24 = vsyncpa [#allocation3], 0
    %25 = vsyncpa [#allocation6], 0
    %26 = vsyncpa [#allocation4], 0
    // Predicated region
    $region2: #{tpu_custom_call.1} parent=1 // pred_check
      _
    $region3: #{tpu_custom_call.1} parent=1 // pred_check_branch
      %28 = sbr.rel (0) target = $region5
    $region4: #{tpu_custom_call.1} parent=1 // pred_region
      _
    $region5: #{tpu_custom_call.1} parent=1 // pred_fallthru
      _
    // Predicated region
    $region6: #{tpu_custom_call.1} parent=1 // pred_check
      _
    $region7: #{tpu_custom_call.1} parent=1 // pred_check_branch
      %30 = sbr.rel (0) target = $region9
    $region8: #{tpu_custom_call.1} parent=1 // pred_region
      _
    $region9: #{tpu_custom_call.1} parent=1 // pred_fallthru
      _
    // Predicated region
    $region10: #{tpu_custom_call.1} parent=1 // pred_check
      _
    $region11: #{tpu_custom_call.1} parent=1 // pred_check_branch
      %32 = sbr.rel (0) target = $region13
    $region12: #{tpu_custom_call.1} parent=1 // pred_region
      _
    $region13: #{tpu_custom_call.1} parent=1 // pred_fallthru
      _
    // Predicated region
    $region14: #{tpu_custom_call.1} parent=1 // pred_check
      _
    $region15: #{tpu_custom_call.1} parent=1 // pred_check_branch
      %34 = sbr.rel (0) target = $region17
    $region16: #{tpu_custom_call.1} parent=1 // pred_region
      _
    $region17: #{tpu_custom_call.1} parent=1 // pred_fallthru
      _
    // Predicated region
    $region18: #{tpu_custom_call.1} parent=1 // pred_check
      _
    $region19: #{tpu_custom_call.1} parent=1 // pred_check_branch
      %36 = sbr.rel (0) target = $region21
    $region20: #{tpu_custom_call.1} parent=1 // pred_region
      _
    $region21: #{tpu_custom_call.1} parent=1 // pred_fallthru
      _
    // Predicated region
    $region22: #{tpu_custom_call.1} parent=1 // pred_check
      _
    $region23: #{tpu_custom_call.1} parent=1 // pred_check_branch
      %38 = sbr.rel (0) target = $region25
    $region24: #{tpu_custom_call.1} parent=1 // pred_region
      _
    $region25: #{tpu_custom_call.1} parent=1 // pred_fallthru
      _
    // Predicated region
    $region26: #{tpu_custom_call.1} parent=1 // pred_check
      _
    $region27: #{tpu_custom_call.1} parent=1 // pred_check_branch
      %40 = sbr.rel (0) target = $region29
    $region28: #{tpu_custom_call.1} parent=1 // pred_region
      _
    $region29: #{tpu_custom_call.1} parent=1 // pred_fallthru
      _
    // Predicated region
    $region30: #{tpu_custom_call.1} parent=1 // pred_check
      _
    $region31: #{tpu_custom_call.1} parent=1 // pred_check_branch
      %42 = sbr.rel (0) target = $region33
    $region32: #{tpu_custom_call.1} parent=1 // pred_region
      _
    $region33: #{tpu_custom_call.1} parent=1 // pred_fallthru
      _
    // Predicated region
    $region34: #{tpu_custom_call.1} parent=1 // pred_check
      _
    $region35: #{tpu_custom_call.1} parent=1 // pred_check_branch
      %44 = sbr.rel (0) target = $region37
    $region36: #{tpu_custom_call.1} parent=1 // pred_region
      _
    $region37: #{tpu_custom_call.1} parent=1 // pred_fallthru
      _
    // Predicated region
    $region38: #{tpu_custom_call.1} parent=1 // pred_check
      _
    $region39: #{tpu_custom_call.1} parent=1 // pred_check_branch
      %46 = sbr.rel (0) target = $region41
    $region40: #{tpu_custom_call.1} parent=1 // pred_region
      _
    $region41: #{tpu_custom_call.1} parent=1 // pred_fallthru
      _
    // Predicated region
    $region42: #{tpu_custom_call.1} parent=1 // pred_check
      _
    $region43: #{tpu_custom_call.1} parent=1 // pred_check_branch
      %48 = sbr.rel (0) target = $region45
    $region44: #{tpu_custom_call.1} parent=1 // pred_region
      %s50 = ssub.s32 4096, 4096
      %51 = vsyncadd [#allocation3], %s50
      %s52 = sshll.u32 [#allocation2], 4
      %s53 = int_to_ptr.vmem [resolvable:$true] %s52
      %58 = dma.hbm_to_vmem [thread:$0]  %s10, 4096, %s53, [#allocation3], 128, 128, 8
    $region45: #{tpu_custom_call.1} parent=1 // pred_fallthru
      _
    // Predicated region
    $region46: #{tpu_custom_call.1} parent=1 // pred_check
      _
    $region47: #{tpu_custom_call.1} parent=1 // pred_check_branch
      %60 = sbr.rel (0) target = $region49
    $region48: #{tpu_custom_call.1} parent=1 // pred_region
      %s62 = ssub.s32 8192, 8192
      %63 = vsyncadd [#allocation6], %s62
      %s64 = sshll.u32 [#allocation5], 4
      %s65 = int_to_ptr.vmem [resolvable:$true] %s64
      %70 = dma.hbm_to_vmem [thread:$0]  %s11, 8192, %s65, [#allocation6], 256, 256, 16
    $region49: #{tpu_custom_call.1} parent=1 // pred_fallthru
      _
    // Predicated region
    $region50: #{tpu_custom_call.1} parent=1 // pred_check
      _
    $region51: #{tpu_custom_call.1} parent=1 // pred_check_branch
      %72 = sbr.rel (0) target = $region53
    $region52: #{tpu_custom_call.1} parent=1 // pred_region
      _
    $region53: #{tpu_custom_call.1} parent=1 // pred_fallthru
      _
    // Predicated region
    $region54: #{tpu_custom_call.1} parent=1 // pred_check
      _
    $region55: #{tpu_custom_call.1} parent=1 // pred_check_branch
      %74 = sbr.rel (0) target = $region57
    $region56: #{tpu_custom_call.1} parent=1 // pred_region
      %s76 = ssub.s32 4096, 4096
      %77 = vsyncadd [#allocation6], %s76
      %s78 = sshll.u32 [#allocation7], 4
      %s79 = int_to_ptr.vmem [resolvable:$true] %s78
      %84 = dma.hbm_to_vmem [thread:$0]  %s13, 4096, %s79, [#allocation6], 64, 64, 4
    $region57: #{tpu_custom_call.1} parent=1 // pred_fallthru
      _
    // Predicated region
    $region58: #{tpu_custom_call.1} parent=1 // pred_check
      _
    $region59: #{tpu_custom_call.1} parent=1 // pred_check_branch
      %86 = sbr.rel (0) target = $region61
    $region60: #{tpu_custom_call.1} parent=1 // pred_region
      _
    $region61: #{tpu_custom_call.1} parent=1 // pred_fallthru
      _
    // Predicated region
    $region62: #{tpu_custom_call.1} parent=1 // pred_check
      _
    $region63: #{tpu_custom_call.1} parent=1 // pred_check_branch
      %88 = sbr.rel (0) target = $region65
    $region64: #{tpu_custom_call.1} parent=1 // pred_region
      _
    $region65: #{tpu_custom_call.1} parent=1 // pred_fallthru
      _
    // Predicated region
    $region66: #{tpu_custom_call.1} parent=1 // pred_check
      _
    $region67: #{tpu_custom_call.1} parent=1 // pred_check_branch
      %90 = sbr.rel (0) target = $region69
    $region68: #{tpu_custom_call.1} parent=1 // pred_region
      _
    $region69: #{tpu_custom_call.1} parent=1 // pred_fallthru
      _
    // Predicated region
    $region70: #{tpu_custom_call.1} parent=1 // pred_check
      _
    $region71: #{tpu_custom_call.1} parent=1 // pred_check_branch
      %92 = sbr.rel (0) target = $region73
    $region72: #{tpu_custom_call.1} parent=1 // pred_region
      _
    $region73: #{tpu_custom_call.1} parent=1 // pred_fallthru
      _
    // Predicated region
    $region74: #{tpu_custom_call.1} parent=1 // pred_check
      _
    $region75: #{tpu_custom_call.1} parent=1 // pred_check_branch
      %94 = sbr.rel (0) target = $region77
    $region76: #{tpu_custom_call.1} parent=1 // pred_region
      _
    $region77: #{tpu_custom_call.1} parent=1 // pred_fallthru
      _
    // Predicated region
    $region78: #{tpu_custom_call.1} parent=1 // pred_check
      _
    $region79: #{tpu_custom_call.1} parent=1 // pred_check_branch
      %96 = sbr.rel (0) target = $region81
    $region80: #{tpu_custom_call.1} parent=1 // pred_region
      %97 = dma.done [#allocation3], 4096
    $region81: #{tpu_custom_call.1} parent=1 // pred_fallthru
      _
    // Predicated region
    $region82: #{tpu_custom_call.1} parent=1 // pred_check
      _
    $region83: #{tpu_custom_call.1} parent=1 // pred_check_branch
      %99 = sbr.rel (0) target = $region85
    $region84: #{tpu_custom_call.1} parent=1 // pred_region
      %100 = dma.done [#allocation6], 8192
    $region85: #{tpu_custom_call.1} parent=1 // pred_fallthru
      _
    // Predicated region
    $region86: #{tpu_custom_call.1} parent=1 // pred_check
      _
    $region87: #{tpu_custom_call.1} parent=1 // pred_check_branch
      %102 = sbr.rel (0) target = $region89
    $region88: #{tpu_custom_call.1} parent=1 // pred_region
      %103 = dma.done [#allocation6], 4096
    $region89: #{tpu_custom_call.1} parent=1 // pred_fallthru
      _
    %v105 = vld [vmem:[%s0] sm:$0xff]
    %v106 = vld [vmem:[%s0 + $0x8] sm:$0xff]
    %v107 = vld [vmem:[%s0 + $0x10] sm:$0xff]
    %v108 = vld [vmem:[%s0 + $0x18] sm:$0xff]
    %v109 = vld [vmem:[%s0 + $0x20] sm:$0xff]
    %v110 = vld [vmem:[%s0 + $0x28] sm:$0xff]
    %v111 = vld [vmem:[%s0 + $0x30] sm:$0xff]
    %v112 = vld [vmem:[%s0 + $0x38] sm:$0xff]
    %v113 = vld [vmem:[%s0 + $0x40] sm:$0xff]
    %v114 = vld [vmem:[%s0 + $0x48] sm:$0xff]
    %v115 = vld [vmem:[%s0 + $0x50] sm:$0xff]
    %v116 = vld [vmem:[%s0 + $0x58] sm:$0xff]
    %v117 = vld [vmem:[%s0 + $0x60] sm:$0xff]
    %v118 = vld [vmem:[%s0 + $0x68] sm:$0xff]
    %v119 = vld [vmem:[%s0 + $0x70] sm:$0xff]
    %v120 = vld [vmem:[%s0 + $0x78] sm:$0xff]
    %v121 = vld [vmem:[%s0 + $0x80] sm:$0xff]
    %v122 = vld [vmem:[%s0 + $0x88] sm:$0xff]
    %v123 = vld [vmem:[%s0 + $0x90] sm:$0xff]
    %v124 = vld [vmem:[%s0 + $0x98] sm:$0xff]
    %v125 = vld [vmem:[%s0 + $0xa0] sm:$0xff]
    %v126 = vld [vmem:[%s0 + $0xa8] sm:$0xff]
    %v127 = vld [vmem:[%s0 + $0xb0] sm:$0xff]
    %v128 = vld [vmem:[%s0 + $0xb8] sm:$0xff]
    %v129 = vld [vmem:[%s0 + $0xc0] sm:$0xff]
    %v130 = vld [vmem:[%s0 + $0xc8] sm:$0xff]
    %v131 = vld [vmem:[%s0 + $0xd0] sm:$0xff]
    %v132 = vld [vmem:[%s0 + $0xd8] sm:$0xff]
    %v133 = vld [vmem:[%s0 + $0xe0] sm:$0xff]
    %v134 = vld [vmem:[%s0 + $0xe8] sm:$0xff]
    %v135 = vld [vmem:[%s0 + $0xf0] sm:$0xff]
    %v136 = vld [vmem:[%s0 + $0xf8] sm:$0xff]
    %v137 = vld [vmem:[%s0 + $0x100] sm:$0xff]
    %v138 = vld [vmem:[%s0 + $0x108] sm:$0xff]
    %v139 = vld [vmem:[%s0 + $0x110] sm:$0xff]
    %v140 = vld [vmem:[%s0 + $0x118] sm:$0xff]
    %v141 = vld [vmem:[%s0 + $0x120] sm:$0xff]
    %v142 = vld [vmem:[%s0 + $0x128] sm:$0xff]
    %v143 = vld [vmem:[%s0 + $0x130] sm:$0xff]
    %v144 = vld [vmem:[%s0 + $0x138] sm:$0xff]
    %v145 = vld [vmem:[%s0 + $0x140] sm:$0xff]
    %v146 = vld [vmem:[%s0 + $0x148] sm:$0xff]
    %v147 = vld [vmem:[%s0 + $0x150] sm:$0xff]
    %v148 = vld [vmem:[%s0 + $0x158] sm:$0xff]
    %v149 = vld [vmem:[%s0 + $0x160] sm:$0xff]
    %v150 = vld [vmem:[%s0 + $0x168] sm:$0xff]
    %v151 = vld [vmem:[%s0 + $0x170] sm:$0xff]
    %v152 = vld [vmem:[%s0 + $0x178] sm:$0xff]
    %v153 = vld [vmem:[%s0 + $0x180] sm:$0xff]
    %v154 = vld [vmem:[%s0 + $0x188] sm:$0xff]
    %v155 = vld [vmem:[%s0 + $0x190] sm:$0xff]
    %v156 = vld [vmem:[%s0 + $0x198] sm:$0xff]
    %v157 = vld [vmem:[%s0 + $0x1a0] sm:$0xff]
    %v158 = vld [vmem:[%s0 + $0x1a8] sm:$0xff]
    %v159 = vld [vmem:[%s0 + $0x1b0] sm:$0xff]
    %v160 = vld [vmem:[%s0 + $0x1b8] sm:$0xff]
    %v161 = vld [vmem:[%s0 + $0x1c0] sm:$0xff]
    %v162 = vld [vmem:[%s0 + $0x1c8] sm:$0xff]
    %v163 = vld [vmem:[%s0 + $0x1d0] sm:$0xff]
    %v164 = vld [vmem:[%s0 + $0x1d8] sm:$0xff]
    %v165 = vld [vmem:[%s0 + $0x1e0] sm:$0xff]
    %v166 = vld [vmem:[%s0 + $0x1e8] sm:$0xff]
    %v167 = vld [vmem:[%s0 + $0x1f0] sm:$0xff]
    %v168 = vld [vmem:[%s0 + $0x1f8] sm:$0xff]
    %v169 = vpack.c.bf16 %v106, %v105
    %v170 = vpack.c.bf16 %v108, %v107
    %v171 = vpack.c.bf16 %v110, %v109
    %v172 = vpack.c.bf16 %v112, %v111
    %v173 = vpack.c.bf16 %v114, %v113
    %v174 = vpack.c.bf16 %v116, %v115
    %v175 = vpack.c.bf16 %v118, %v117
    %v176 = vpack.c.bf16 %v120, %v119
    %v177 = vpack.c.bf16 %v122, %v121
    %v178 = vpack.c.bf16 %v124, %v123
    %v179 = vpack.c.bf16 %v126, %v125
    %v180 = vpack.c.bf16 %v128, %v127
    %v181 = vpack.c.bf16 %v130, %v129
    %v182 = vpack.c.bf16 %v132, %v131
    %v183 = vpack.c.bf16 %v134, %v133
    %v184 = vpack.c.bf16 %v136, %v135
    %v185 = vpack.c.bf16 %v138, %v137
    %v186 = vpack.c.bf16 %v140, %v139
    %v187 = vpack.c.bf16 %v142, %v141
    %v188 = vpack.c.bf16 %v144, %v143
    %v189 = vpack.c.bf16 %v146, %v145
    %v190 = vpack.c.bf16 %v148, %v147
    %v191 = vpack.c.bf16 %v150, %v149
    %v192 = vpack.c.bf16 %v152, %v151
    %v193 = vpack.c.bf16 %v154, %v153
    %v194 = vpack.c.bf16 %v156, %v155
    %v195 = vpack.c.bf16 %v158, %v157
    %v196 = vpack.c.bf16 %v160, %v159
    %v197 = vpack.c.bf16 %v162, %v161
    %v198 = vpack.c.bf16 %v164, %v163
    %v199 = vpack.c.bf16 %v166, %v165
    %v200 = vpack.c.bf16 %v168, %v167
    %v201 = vld [vmem:[%s3] sm:$0xf]
    %v202 = vld [vmem:[%s3 + $0x4] sm:$0xf]
    %v203 = vld [vmem:[%s3 + $0x8] sm:$0xf]
    %v204 = vld [vmem:[%s3 + $0xc] sm:$0x3]
    %v205 = vld [vmem:[%s4] sm:$0x1]
    %v207 = vlaneseq
    %v208 = vshrl.u32 %v207, 7
    %v209 = vsub.s32 0, %v208
    %v210 = vrot.slane %v205, %v209
    %v216 = vunpack.c.l.b16 %v201
    %v217 = vunpack.c.l.b16 %v202
    %v218 = vunpack.c.l.b16 %v203
    %v219 = vunpack.c.l.b16 %v204
    %v220 = vpack.c.b16 %v217, %v216
    %v221 = vpack.c.b16 %v219, %v218
    %vm223 = vcmask 220160
    %v225 = vsel %vm223, %v169, 0
    %v228 = vsel %vm223, %v170, 0
    %v231 = vsel %vm223, %v171, 0
    %v234 = vsel %vm223, %v172, 0
    %v237 = vsel %vm223, %v173, 0
    %v240 = vsel %vm223, %v174, 0
    %v243 = vsel %vm223, %v175, 0
    %v246 = vsel %vm223, %v176, 0
    %v249 = vsel %vm223, %v177, 0
    %v252 = vsel %vm223, %v178, 0
    %v255 = vsel %vm223, %v179, 0
    %v258 = vsel %vm223, %v180, 0
    %v261 = vsel %vm223, %v181, 0
    %v264 = vsel %vm223, %v182, 0
    %v267 = vsel %vm223, %v183, 0
    %v270 = vsel %vm223, %v184, 0
    %v273 = vsel %vm223, %v185, 0
    %v276 = vsel %vm223, %v186, 0
    %v279 = vsel %vm223, %v187, 0
    %v282 = vsel %vm223, %v188, 0
    %v285 = vsel %vm223, %v189, 0
    %v288 = vsel %vm223, %v190, 0
    %v291 = vsel %vm223, %v191, 0
    %v294 = vsel %vm223, %v192, 0
    %v297 = vsel %vm223, %v193, 0
    %v300 = vsel %vm223, %v194, 0
    %v303 = vsel %vm223, %v195, 0
    %v306 = vsel %vm223, %v196, 0
    %v309 = vsel %vm223, %v197, 0
    %v312 = vsel %vm223, %v198, 0
    %v315 = vsel %vm223, %v199, 0
    %v318 = vsel %vm223, %v200, 0
    %vm320 = vcmask 1044480
    %vm321 = vcmask 1045504
    %v322 = vsel %vm320, 4294967295, 65535
    %v323 = vsel %vm321, %v322, 0
    %v325 = vand.u32 %v221, %v323
    %327 = vmatprep.subr.bf16.mxu0 0
    %328 = vmatpush1.bf16.msra.mxu0 %v220
    %329 = vmatprep.subr.bf16.mxu0 0
    %330 = vmatpush1.bf16.msra.mxu0 %v325
    %331 = vmatprep.subr.bf16.mxu0 0
    %332 = vmatpush1.bf16.msra.mxu0 0
    %333 = vmatprep.subr.bf16.mxu0 0
    %334 = vmatpush1.bf16.msra.mxu0 0
    %335 = vmatprep.subr.bf16.mxu0 0
    %336 = vmatpush1.bf16.msra.mxu0 0
    %337 = vmatprep.subr.bf16.mxu0 0
    %338 = vmatpush1.bf16.msra.mxu0 0
    %339 = vmatprep.subr.bf16.mxu0 0
    %340 = vmatpush1.bf16.msra.mxu0 0
    %341 = vmatprep.subr.bf16.mxu0 0
    %342 = vmatpush1.bf16.msra.mxu0 0
    %343 = vmatprep.subr.bf16.mxu0 0
    %344 = vmatpush1.bf16.msra.mxu0 0
    %345 = vmatprep.subr.bf16.mxu0 0
    %346 = vmatpush1.bf16.msra.mxu0 0
    %347 = vmatprep.subr.bf16.mxu0 0
    %348 = vmatpush1.bf16.msra.mxu0 0
    %349 = vmatprep.subr.bf16.mxu0 0
    %350 = vmatpush1.bf16.msra.mxu0 0
    %351 = vmatprep.subr.bf16.mxu0 0
    %352 = vmatpush1.bf16.msra.mxu0 0
    %353 = vmatprep.subr.bf16.mxu0 0
    %354 = vmatpush1.bf16.msra.mxu0 0
    %355 = vmatprep.subr.bf16.mxu0 0
    %356 = vmatpush1.bf16.msra.mxu0 0
    %357 = vmatprep.subr.bf16.mxu0 0
    %358 = vmatpush1.bf16.msra.mxu0 0
    %359 = vmatprep.mubr.bf16.mxu0 0
    %360 = vmatmul.mubr.bf16.gmra.mrb[0].mxu0 %v225
    %v361 = vpop.f32.mrb[0].mxu0
    %v362 = vadd.f32 %v210, %v361
    %v363 = vpop.f32.mrb[0].mxu0
    %v364 = vpop.f32.mrb[0].mxu0
    %v365 = vadd.f32 %v210, %v364
    %v366 = vpop.f32.mrb[0].mxu0
    %367 = vmatprep.mubr.bf16.mxu0 0
    %368 = vmatmul.mubr.bf16.gmra.mrb[0].mxu0 %v228
    %v369 = vpop.f32.mrb[0].mxu0
    %v370 = vadd.f32 %v210, %v369
    %v371 = vpop.f32.mrb[0].mxu0
    %v372 = vpop.f32.mrb[0].mxu0
    %v373 = vadd.f32 %v210, %v372
    %v374 = vpop.f32.mrb[0].mxu0
    %375 = vmatprep.mubr.bf16.mxu0 0
    %376 = vmatmul.mubr.bf16.gmra.mrb[0].mxu0 %v231
    %v377 = vpop.f32.mrb[0].mxu0
    %v378 = vadd.f32 %v210, %v377
    %v379 = vpop.f32.mrb[0].mxu0
    %v380 = vpop.f32.mrb[0].mxu0
    %v381 = vadd.f32 %v210, %v380
    %v382 = vpop.f32.mrb[0].mxu0
    %383 = vmatprep.mubr.bf16.mxu0 0
    %384 = vmatmul.mubr.bf16.gmra.mrb[0].mxu0 %v234
    %v385 = vpop.f32.mrb[0].mxu0
    %v386 = vadd.f32 %v210, %v385
    %v387 = vpop.f32.mrb[0].mxu0
    %v388 = vpop.f32.mrb[0].mxu0
    %v389 = vadd.f32 %v210, %v388
    %v390 = vpop.f32.mrb[0].mxu0
    %391 = vmatprep.mubr.bf16.mxu0 0
    %392 = vmatmul.mubr.bf16.gmra.mrb[0].mxu0 %v237
    %v393 = vpop.f32.mrb[0].mxu0
    %v394 = vadd.f32 %v210, %v393
    %v395 = vpop.f32.mrb[0].mxu0
    %v396 = vpop.f32.mrb[0].mxu0
    %v397 = vadd.f32 %v210, %v396
    %v398 = vpop.f32.mrb[0].mxu0
    %399 = vmatprep.mubr.bf16.mxu0 0
    %400 = vmatmul.mubr.bf16.gmra.mrb[0].mxu0 %v240
    %v401 = vpop.f32.mrb[0].mxu0
    %v402 = vadd.f32 %v210, %v401
    %v403 = vpop.f32.mrb[0].mxu0
    %v404 = vpop.f32.mrb[0].mxu0
    %v405 = vadd.f32 %v210, %v404
    %v406 = vpop.f32.mrb[0].mxu0
    %407 = vmatprep.mubr.bf16.mxu0 0
    %408 = vmatmul.mubr.bf16.gmra.mrb[0].mxu0 %v243
    %v409 = vpop.f32.mrb[0].mxu0
    %v410 = vadd.f32 %v210, %v409
    %v411 = vpop.f32.mrb[0].mxu0
    %v412 = vpop.f32.mrb[0].mxu0
    %v413 = vadd.f32 %v210, %v412
    %v414 = vpop.f32.mrb[0].mxu0
    %415 = vmatprep.mubr.bf16.mxu0 0
    %416 = vmatmul.mubr.bf16.gmra.mrb[0].mxu0 %v246
    %v417 = vpop.f32.mrb[0].mxu0
    %v418 = vadd.f32 %v210, %v417
    %v419 = vpop.f32.mrb[0].mxu0
    %v420 = vpop.f32.mrb[0].mxu0
    %v421 = vadd.f32 %v210, %v420
    %v422 = vpop.f32.mrb[0].mxu0
    %423 = vmatprep.mubr.bf16.mxu0 0
    %424 = vmatmul.mubr.bf16.gmra.mrb[0].mxu0 %v249
    %v425 = vpop.f32.mrb[0].mxu0
    %v426 = vadd.f32 %v210, %v425
    %v427 = vpop.f32.mrb[0].mxu0
    %v428 = vpop.f32.mrb[0].mxu0
    %v429 = vadd.f32 %v210, %v428
    %v430 = vpop.f32.mrb[0].mxu0
    %431 = vmatprep.mubr.bf16.mxu0 0
    %432 = vmatmul.mubr.bf16.gmra.mrb[0].mxu0 %v252
    %v433 = vpop.f32.mrb[0].mxu0
    %v434 = vadd.f32 %v210, %v433
    %v435 = vpop.f32.mrb[0].mxu0
    %v436 = vpop.f32.mrb[0].mxu0
    %v437 = vadd.f32 %v210, %v436
    %v438 = vpop.f32.mrb[0].mxu0
    %439 = vmatprep.mubr.bf16.mxu0 0
    %440 = vmatmul.mubr.bf16.gmra.mrb[0].mxu0 %v255
    %v441 = vpop.f32.mrb[0].mxu0
    %v442 = vadd.f32 %v210, %v441
    %v443 = vpop.f32.mrb[0].mxu0
    %v444 = vpop.f32.mrb[0].mxu0
    %v445 = vadd.f32 %v210, %v444
    %v446 = vpop.f32.mrb[0].mxu0
    %447 = vmatprep.mubr.bf16.mxu0 0
    %448 = vmatmul.mubr.bf16.gmra.mrb[0].mxu0 %v258
    %v449 = vpop.f32.mrb[0].mxu0
    %v450 = vadd.f32 %v210, %v449
    %v451 = vpop.f32.mrb[0].mxu0
    %v452 = vpop.f32.mrb[0].mxu0
    %v453 = vadd.f32 %v210, %v452
    %v454 = vpop.f32.mrb[0].mxu0
    %455 = vmatprep.mubr.bf16.mxu0 0
    %456 = vmatmul.mubr.bf16.gmra.mrb[0].mxu0 %v261
    %v457 = vpop.f32.mrb[0].mxu0
    %v458 = vadd.f32 %v210, %v457
    %v459 = vpop.f32.mrb[0].mxu0
    %v460 = vpop.f32.mrb[0].mxu0
    %v461 = vadd.f32 %v210, %v460
    %v462 = vpop.f32.mrb[0].mxu0
    %463 = vmatprep.mubr.bf16.mxu0 0
    %464 = vmatmul.mubr.bf16.gmra.mrb[0].mxu0 %v264
    %v465 = vpop.f32.mrb[0].mxu0
    %v466 = vadd.f32 %v210, %v465
    %v467 = vpop.f32.mrb[0].mxu0
    %v468 = vpop.f32.mrb[0].mxu0
    %v469 = vadd.f32 %v210, %v468
    %v470 = vpop.f32.mrb[0].mxu0
    %471 = vmatprep.mubr.bf16.mxu0 0
    %472 = vmatmul.mubr.bf16.gmra.mrb[0].mxu0 %v267
    %v473 = vpop.f32.mrb[0].mxu0
    %v474 = vadd.f32 %v210, %v473
    %v475 = vpop.f32.mrb[0].mxu0
    %v476 = vpop.f32.mrb[0].mxu0
    %v477 = vadd.f32 %v210, %v476
    %v478 = vpop.f32.mrb[0].mxu0
    %479 = vmatprep.mubr.bf16.mxu0 0
    %480 = vmatmul.mubr.bf16.gmra.mrb[0].mxu0 %v270
    %v481 = vpop.f32.mrb[0].mxu0
    %v482 = vadd.f32 %v210, %v481
    %v483 = vpop.f32.mrb[0].mxu0
    %v484 = vpop.f32.mrb[0].mxu0
    %v485 = vadd.f32 %v210, %v484
    %v486 = vpop.f32.mrb[0].mxu0
    %487 = vmatprep.mubr.bf16.mxu0 0
    %488 = vmatmul.mubr.bf16.gmra.mrb[0].mxu0 %v273
    %v489 = vpop.f32.mrb[0].mxu0
    %v490 = vadd.f32 %v210, %v489
    %v491 = vpop.f32.mrb[0].mxu0
    %v492 = vpop.f32.mrb[0].mxu0
    %v493 = vadd.f32 %v210, %v492
    %v494 = vpop.f32.mrb[0].mxu0
    %495 = vmatprep.mubr.bf16.mxu0 0
    %496 = vmatmul.mubr.bf16.gmra.mrb[0].mxu0 %v276
    %v497 = vpop.f32.mrb[0].mxu0
    %v498 = vadd.f32 %v210, %v497
    %v499 = vpop.f32.mrb[0].mxu0
    %v500 = vpop.f32.mrb[0].mxu0
    %v501 = vadd.f32 %v210, %v500
    %v502 = vpop.f32.mrb[0].mxu0
    %503 = vmatprep.mubr.bf16.mxu0 0
    %504 = vmatmul.mubr.bf16.gmra.mrb[0].mxu0 %v279
    %v505 = vpop.f32.mrb[0].mxu0
    %v506 = vadd.f32 %v210, %v505
    %v507 = vpop.f32.mrb[0].mxu0
    %v508 = vpop.f32.mrb[0].mxu0
    %v509 = vadd.f32 %v210, %v508
    %v510 = vpop.f32.mrb[0].mxu0
    %511 = vmatprep.mubr.bf16.mxu0 0
    %512 = vmatmul.mubr.bf16.gmra.mrb[0].mxu0 %v282
    %v513 = vpop.f32.mrb[0].mxu0
    %v514 = vadd.f32 %v210, %v513
    %v515 = vpop.f32.mrb[0].mxu0
    %v516 = vpop.f32.mrb[0].mxu0
    %v517 = vadd.f32 %v210, %v516
    %v518 = vpop.f32.mrb[0].mxu0
    %519 = vmatprep.mubr.bf16.mxu0 0
    %520 = vmatmul.mubr.bf16.gmra.mrb[0].mxu0 %v285
    %v521 = vpop.f32.mrb[0].mxu0
    %v522 = vadd.f32 %v210, %v521
    %v523 = vpop.f32.mrb[0].mxu0
    %v524 = vpop.f32.mrb[0].mxu0
    %v525 = vadd.f32 %v210, %v524
    %v526 = vpop.f32.mrb[0].mxu0
    %527 = vmatprep.mubr.bf16.mxu0 0
    %528 = vmatmul.mubr.bf16.gmra.mrb[0].mxu0 %v288
    %v529 = vpop.f32.mrb[0].mxu0
    %v530 = vadd.f32 %v210, %v529
    %v531 = vpop.f32.mrb[0].mxu0
    %v532 = vpop.f32.mrb[0].mxu0
    %v533 = vadd.f32 %v210, %v532
    %v534 = vpop.f32.mrb[0].mxu0
    %535 = vmatprep.mubr.bf16.mxu0 0
    %536 = vmatmul.mubr.bf16.gmra.mrb[0].mxu0 %v291
    %v537 = vpop.f32.mrb[0].mxu0
    %v538 = vadd.f32 %v210, %v537
    %v539 = vpop.f32.mrb[0].mxu0
    %v540 = vpop.f32.mrb[0].mxu0
    %v541 = vadd.f32 %v210, %v540
    %v542 = vpop.f32.mrb[0].mxu0
    %543 = vmatprep.mubr.bf16.mxu0 0
    %544 = vmatmul.mubr.bf16.gmra.mrb[0].mxu0 %v294
    %v545 = vpop.f32.mrb[0].mxu0
    %v546 = vadd.f32 %v210, %v545
    %v547 = vpop.f32.mrb[0].mxu0
    %v548 = vpop.f32.mrb[0].mxu0
    %v549 = vadd.f32 %v210, %v548
    %v550 = vpop.f32.mrb[0].mxu0
    %551 = vmatprep.mubr.bf16.mxu0 0
    %552 = vmatmul.mubr.bf16.gmra.mrb[0].mxu0 %v297
    %v553 = vpop.f32.mrb[0].mxu0
    %v554 = vadd.f32 %v210, %v553
    %v555 = vpop.f32.mrb[0].mxu0
    %v556 = vpop.f32.mrb[0].mxu0
    %v557 = vadd.f32 %v210, %v556
    %v558 = vpop.f32.mrb[0].mxu0
    %559 = vmatprep.mubr.bf16.mxu0 0
    %560 = vmatmul.mubr.bf16.gmra.mrb[0].mxu0 %v300
    %v561 = vpop.f32.mrb[0].mxu0
    %v562 = vadd.f32 %v210, %v561
    %v563 = vpop.f32.mrb[0].mxu0
    %v564 = vpop.f32.mrb[0].mxu0
    %v565 = vadd.f32 %v210, %v564
    %v566 = vpop.f32.mrb[0].mxu0
    %567 = vmatprep.mubr.bf16.mxu0 0
    %568 = vmatmul.mubr.bf16.gmra.mrb[0].mxu0 %v303
    %v569 = vpop.f32.mrb[0].mxu0
    %v570 = vadd.f32 %v210, %v569
    %v571 = vpop.f32.mrb[0].mxu0
    %v572 = vpop.f32.mrb[0].mxu0
    %v573 = vadd.f32 %v210, %v572
    %v574 = vpop.f32.mrb[0].mxu0
    %575 = vmatprep.mubr.bf16.mxu0 0
    %576 = vmatmul.mubr.bf16.gmra.mrb[0].mxu0 %v306
    %v577 = vpop.f32.mrb[0].mxu0
    %v578 = vadd.f32 %v210, %v577
    %v579 = vpop.f32.mrb[0].mxu0
    %v580 = vpop.f32.mrb[0].mxu0
    %v581 = vadd.f32 %v210, %v580
    %v582 = vpop.f32.mrb[0].mxu0
    %583 = vmatprep.mubr.bf16.mxu0 0
    %584 = vmatmul.mubr.bf16.gmra.mrb[0].mxu0 %v309
    %v585 = vpop.f32.mrb[0].mxu0
    %v586 = vadd.f32 %v210, %v585
    %v587 = vpop.f32.mrb[0].mxu0
    %v588 = vpop.f32.mrb[0].mxu0
    %v589 = vadd.f32 %v210, %v588
    %v590 = vpop.f32.mrb[0].mxu0
    %591 = vmatprep.mubr.bf16.mxu0 0
    %592 = vmatmul.mubr.bf16.gmra.mrb[0].mxu0 %v312
    %v593 = vpop.f32.mrb[0].mxu0
    %v594 = vadd.f32 %v210, %v593
    %v595 = vpop.f32.mrb[0].mxu0
    %v596 = vpop.f32.mrb[0].mxu0
    %v597 = vadd.f32 %v210, %v596
    %v598 = vpop.f32.mrb[0].mxu0
    %599 = vmatprep.mubr.bf16.mxu0 0
    %600 = vmatmul.mubr.bf16.gmra.mrb[0].mxu0 %v315
    %v601 = vpop.f32.mrb[0].mxu0
    %v602 = vadd.f32 %v210, %v601
    %v603 = vpop.f32.mrb[0].mxu0
    %v604 = vpop.f32.mrb[0].mxu0
    %v605 = vadd.f32 %v210, %v604
    %v606 = vpop.f32.mrb[0].mxu0
    %607 = vmatprep.mubr.bf16.mxu0 0
    %608 = vmatmul.mubr.bf16.gmra.mrb[0].mxu0 %v318
    %v609 = vpop.f32.mrb[0].mxu0
    %v610 = vadd.f32 %v210, %v609
    %v611 = vpop.f32.mrb[0].mxu0
    %v612 = vpop.f32.mrb[0].mxu0
    %v613 = vadd.f32 %v210, %v612
    %v614 = vpop.f32.mrb[0].mxu0
    %615 = vdwg.mxu0
    %v616 = vmax.f32 %v362, 0.0
    %v617 = vmax.f32 %v365, 0.0
    %v618 = vmax.f32 %v370, 0.0
    %v619 = vmax.f32 %v373, 0.0
    %v620 = vmax.f32 %v378, 0.0
    %v621 = vmax.f32 %v381, 0.0
    %v622 = vmax.f32 %v386, 0.0
    %v623 = vmax.f32 %v389, 0.0
    %v624 = vmax.f32 %v394, 0.0
    %v625 = vmax.f32 %v397, 0.0
    %v626 = vmax.f32 %v402, 0.0
    %v627 = vmax.f32 %v405, 0.0
    %v628 = vmax.f32 %v410, 0.0
    %v629 = vmax.f32 %v413, 0.0
    %v630 = vmax.f32 %v418, 0.0
    %v631 = vmax.f32 %v421, 0.0
    %v632 = vmax.f32 %v426, 0.0
    %v633 = vmax.f32 %v429, 0.0
    %v634 = vmax.f32 %v434, 0.0
    %v635 = vmax.f32 %v437, 0.0
    %v636 = vmax.f32 %v442, 0.0
    %v637 = vmax.f32 %v445, 0.0
    %v638 = vmax.f32 %v450, 0.0
    %v639 = vmax.f32 %v453, 0.0
    %v640 = vmax.f32 %v458, 0.0
    %v641 = vmax.f32 %v461, 0.0
    %v642 = vmax.f32 %v466, 0.0
    %v643 = vmax.f32 %v469, 0.0
    %v644 = vmax.f32 %v474, 0.0
    %v645 = vmax.f32 %v477, 0.0
    %v646 = vmax.f32 %v482, 0.0
    %v647 = vmax.f32 %v485, 0.0
    %v648 = vmax.f32 %v490, 0.0
    %v649 = vmax.f32 %v493, 0.0
    %v650 = vmax.f32 %v498, 0.0
    %v651 = vmax.f32 %v501, 0.0
    %v652 = vmax.f32 %v506, 0.0
    %v653 = vmax.f32 %v509, 0.0
    %v654 = vmax.f32 %v514, 0.0
    %v655 = vmax.f32 %v517, 0.0
    %v656 = vmax.f32 %v522, 0.0
    %v657 = vmax.f32 %v525, 0.0
    %v658 = vmax.f32 %v530, 0.0
    %v659 = vmax.f32 %v533, 0.0
    %v660 = vmax.f32 %v538, 0.0
    %v661 = vmax.f32 %v541, 0.0
    %v662 = vmax.f32 %v546, 0.0
    %v663 = vmax.f32 %v549, 0.0
    %v664 = vmax.f32 %v554, 0.0
    %v665 = vmax.f32 %v557, 0.0
    %v666 = vmax.f32 %v562, 0.0
    %v667 = vmax.f32 %v565, 0.0
    %v668 = vmax.f32 %v570, 0.0
    %v669 = vmax.f32 %v573, 0.0
    %v670 = vmax.f32 %v578, 0.0
    %v671 = vmax.f32 %v581, 0.0
    %v672 = vmax.f32 %v586, 0.0
    %v673 = vmax.f32 %v589, 0.0
    %v674 = vmax.f32 %v594, 0.0
    %v675 = vmax.f32 %v597, 0.0
    %v676 = vmax.f32 %v602, 0.0
    %v677 = vmax.f32 %v605, 0.0
    %v678 = vmax.f32 %v610, 0.0
    %v679 = vmax.f32 %v613, 0.0
    %v680 = vld [vmem:[%s2] sm:$0xff]
    %v681 = vld [vmem:[%s2 + $0x8] sm:$0xff]
    %v682 = vld [vmem:[%s2 + $0x10] sm:$0xff]
    %v683 = vld [vmem:[%s2 + $0x18] sm:$0xff]
    %684 = vmatprep.subr.mxu0 0.0
    %685 = vmatpush1.msra.mxu0 %v616
    %686 = vmatprep.subr.mxu0 0.0
    %687 = vmatpush1.msra.mxu0 %v617
    %688 = vmatprep.subr.mxu0 0.0
    %689 = vmatpush1.msra.mxu0 %v618
    %690 = vmatprep.subr.mxu0 0.0
    %691 = vmatpush1.msra.mxu0 %v619
    %692 = vmatprep.subr.mxu0 0.0
    %693 = vmatpush1.msra.mxu0 %v620
    %694 = vmatprep.subr.mxu0 0.0
    %695 = vmatpush1.msra.mxu0 %v621
    %696 = vmatprep.subr.mxu0 0.0
    %697 = vmatpush1.msra.mxu0 %v622
    %698 = vmatprep.subr.mxu0 0.0
    %699 = vmatpush1.msra.mxu0 %v623
    %700 = vmatprep.subr.mxu0 0.0
    %701 = vmatpush1.msra.mxu0 %v624
    %702 = vmatprep.subr.mxu0 0.0
    %703 = vmatpush1.msra.mxu0 %v625
    %704 = vmatprep.subr.mxu0 0.0
    %705 = vmatpush1.msra.mxu0 %v626
    %706 = vmatprep.subr.mxu0 0.0
    %707 = vmatpush1.msra.mxu0 %v627
    %708 = vmatprep.subr.mxu0 0.0
    %709 = vmatpush1.msra.mxu0 %v628
    %710 = vmatprep.subr.mxu0 0.0
    %711 = vmatpush1.msra.mxu0 %v629
    %712 = vmatprep.subr.mxu0 0.0
    %713 = vmatpush1.msra.mxu0 %v630
    %714 = vmatprep.subr.mxu0 0.0
    %715 = vmatpush1.msra.mxu0 %v631
    %716 = vmatprep.subr.mxu0 0.0
    %717 = vmatpush1.msra.mxu0 %v632
    %718 = vmatprep.subr.mxu0 0.0
    %719 = vmatpush1.msra.mxu0 %v633
    %720 = vmatprep.subr.mxu0 0.0
    %721 = vmatpush1.msra.mxu0 %v634
    %722 = vmatprep.subr.mxu0 0.0
    %723 = vmatpush1.msra.mxu0 %v635
    %724 = vmatprep.subr.mxu0 0.0
    %725 = vmatpush1.msra.mxu0 %v636
    %726 = vmatprep.subr.mxu0 0.0
    %727 = vmatpush1.msra.mxu0 %v637
    %728 = vmatprep.subr.mxu0 0.0
    %729 = vmatpush1.msra.mxu0 %v638
    %730 = vmatprep.subr.mxu0 0.0
    %731 = vmatpush1.msra.mxu0 %v639
    %732 = vmatprep.subr.mxu0 0.0
    %733 = vmatpush1.msra.mxu0 %v640
    %734 = vmatprep.subr.mxu0 0.0
    %735 = vmatpush1.msra.mxu0 %v641
    %736 = vmatprep.subr.mxu0 0.0
    %737 = vmatpush1.msra.mxu0 %v642
    %738 = vmatprep.subr.mxu0 0.0
    %739 = vmatpush1.msra.mxu0 %v643
    %740 = vmatprep.subr.mxu0 0.0
    %741 = vmatpush1.msra.mxu0 %v644
    %742 = vmatprep.subr.mxu0 0.0
    %743 = vmatpush1.msra.mxu0 %v645
    %744 = vmatprep.subr.mxu0 0.0
    %745 = vmatpush1.msra.mxu0 %v646
    %746 = vmatprep.subr.mxu0 0.0
    %747 = vmatpush1.msra.mxu0 %v647
    %748 = vmatprep.mubr.f32.mxu0 %v681
    %749 = vmatmul.mubr.f32.gmra.mrb[0].mxu0 %v680
    %v750 = vpop.f32.mrb[0].mxu0
    %v751 = vadd.f32 0.0, %v750
    %v752 = vpop.f32.mrb[0].mxu0
    %753 = vdwg.mxu0
    %754 = vmatprep.subr.mxu0 0.0
    %755 = vmatpush1.msra.mxu0 %v648
    %756 = vmatprep.subr.mxu0 0.0
    %757 = vmatpush1.msra.mxu0 %v649
    %758 = vmatprep.subr.mxu0 0.0
    %759 = vmatpush1.msra.mxu0 %v650
    %760 = vmatprep.subr.mxu0 0.0
    %761 = vmatpush1.msra.mxu0 %v651
    %762 = vmatprep.subr.mxu0 0.0
    %763 = vmatpush1.msra.mxu0 %v652
    %764 = vmatprep.subr.mxu0 0.0
    %765 = vmatpush1.msra.mxu0 %v653
    %766 = vmatprep.subr.mxu0 0.0
    %767 = vmatpush1.msra.mxu0 %v654
    %768 = vmatprep.subr.mxu0 0.0
    %769 = vmatpush1.msra.mxu0 %v655
    %770 = vmatprep.subr.mxu0 0.0
    %771 = vmatpush1.msra.mxu0 %v656
    %772 = vmatprep.subr.mxu0 0.0
    %773 = vmatpush1.msra.mxu0 %v657
    %774 = vmatprep.subr.mxu0 0.0
    %775 = vmatpush1.msra.mxu0 %v658
    %776 = vmatprep.subr.mxu0 0.0
    %777 = vmatpush1.msra.mxu0 %v659
    %778 = vmatprep.subr.mxu0 0.0
    %779 = vmatpush1.msra.mxu0 %v660
    %780 = vmatprep.subr.mxu0 0.0
    %781 = vmatpush1.msra.mxu0 %v661
    %782 = vmatprep.subr.mxu0 0.0
    %783 = vmatpush1.msra.mxu0 %v662
    %784 = vmatprep.subr.mxu0 0.0
    %785 = vmatpush1.msra.mxu0 %v663
    %786 = vmatprep.subr.mxu0 0.0
    %787 = vmatpush1.msra.mxu0 %v664
    %788 = vmatprep.subr.mxu0 0.0
    %789 = vmatpush1.msra.mxu0 %v665
    %790 = vmatprep.subr.mxu0 0.0
    %791 = vmatpush1.msra.mxu0 %v666
    %792 = vmatprep.subr.mxu0 0.0
    %793 = vmatpush1.msra.mxu0 %v667
    %794 = vmatprep.subr.mxu0 0.0
    %795 = vmatpush1.msra.mxu0 %v668
    %796 = vmatprep.subr.mxu0 0.0
    %797 = vmatpush1.msra.mxu0 %v669
    %798 = vmatprep.subr.mxu0 0.0
    %799 = vmatpush1.msra.mxu0 %v670
    %800 = vmatprep.subr.mxu0 0.0
    %801 = vmatpush1.msra.mxu0 %v671
    %802 = vmatprep.subr.mxu0 0.0
    %803 = vmatpush1.msra.mxu0 %v672
    %804 = vmatprep.subr.mxu0 0.0
    %805 = vmatpush1.msra.mxu0 %v673
    %806 = vmatprep.subr.mxu0 0.0
    %807 = vmatpush1.msra.mxu0 %v674
    %808 = vmatprep.subr.mxu0 0.0
    %809 = vmatpush1.msra.mxu0 %v675
    %810 = vmatprep.subr.mxu0 0.0
    %811 = vmatpush1.msra.mxu0 %v676
    %812 = vmatprep.subr.mxu0 0.0
    %813 = vmatpush1.msra.mxu0 %v677
    %814 = vmatprep.subr.mxu0 0.0
    %815 = vmatpush1.msra.mxu0 %v678
    %816 = vmatprep.subr.mxu0 0.0
    %817 = vmatpush1.msra.mxu0 %v679
    %818 = vmatprep.mubr.f32.mxu0 %v683
    %819 = vmatmul.mubr.f32.gmra.mrb[0].mxu0 %v682
    %v820 = vpop.f32.mrb[0].mxu0
    %v821 = vadd.f32 %v751, %v820
    %v822 = vpop.f32.mrb[0].mxu0
    %823 = vdwg.mxu0
    %v824 = vpack.c.bf16 %v821, %v821
    %v825 = vld [vmem:[%s5] sm:$0xff]
    %v826 = vld [vmem:[%s5 + $0x8] sm:$0xff]
    %v827 = vld [vmem:[%s6] sm:$0x3]
    %v829 = vlaneseq
    %v830 = vshrl.u32 %v829, 7
    %v831 = vsub.s32 0, %v830
    %v832 = vrot.slane %v827, %v831
    %v833 = vlaneseq
    %v834 = vshrl.u32 %v833, 7
    %v835 = vsub.s32 1, %v834
    %v836 = vrot.slane %v827, %v835
    %v841 = vunpack.c.l.b16 %v825
    %v842 = vunpack.c.h.b16 %v825
    %v843 = vunpack.c.l.b16 %v826
    %v844 = vunpack.c.h.b16 %v826
    %v845 = vpack.c.b16 %v843, %v841
    %v846 = vpack.c.b16 %v844, %v842
    %vm849 = vcmask 130048
    %v851 = vsel %vm849, %v824, 0
    %853 = vmatprep.subr.bf16.mxu0 %v846
    %854 = vmatpush1.bf16.msra.mxu0 %v845
    %855 = vmatprep.subr.bf16.mxu0 0
    %856 = vmatpush1.bf16.msra.mxu0 0
    %857 = vmatprep.subr.bf16.mxu0 0
    %858 = vmatpush1.bf16.msra.mxu0 0
    %859 = vmatprep.subr.bf16.mxu0 0
    %860 = vmatpush1.bf16.msra.mxu0 0
    %861 = vmatprep.subr.bf16.mxu0 0
    %862 = vmatpush1.bf16.msra.mxu0 0
    %863 = vmatprep.subr.bf16.mxu0 0
    %864 = vmatpush1.bf16.msra.mxu0 0
    %865 = vmatprep.subr.bf16.mxu0 0
    %866 = vmatpush1.bf16.msra.mxu0 0
    %867 = vmatprep.subr.bf16.mxu0 0
    %868 = vmatpush1.bf16.msra.mxu0 0
    %869 = vmatprep.subr.bf16.mxu0 0
    %870 = vmatpush1.bf16.msra.mxu0 0
    %871 = vmatprep.subr.bf16.mxu0 0
    %872 = vmatpush1.bf16.msra.mxu0 0
    %873 = vmatprep.subr.bf16.mxu0 0
    %874 = vmatpush1.bf16.msra.mxu0 0
    %875 = vmatprep.subr.bf16.mxu0 0
    %876 = vmatpush1.bf16.msra.mxu0 0
    %877 = vmatprep.subr.bf16.mxu0 0
    %878 = vmatpush1.bf16.msra.mxu0 0
    %879 = vmatprep.subr.bf16.mxu0 0
    %880 = vmatpush1.bf16.msra.mxu0 0
    %881 = vmatprep.subr.bf16.mxu0 0
    %882 = vmatpush1.bf16.msra.mxu0 0
    %883 = vmatprep.subr.bf16.mxu0 0
    %884 = vmatpush1.bf16.msra.mxu0 0
    %885 = vmatprep.mubr.bf16.mxu0 0
    %886 = vmatmul.mubr.bf16.gmra.mrb[0].mxu0 %v851
    %v887 = vpop.f32.mrb[0].mxu0
    %v888 = vadd.f32 %v832, %v887
    %v889 = vpop.f32.mrb[0].mxu0
    %v890 = vadd.f32 %v836, %v889
    %v891 = vpop.f32.mrb[0].mxu0
    %v892 = vpop.f32.mrb[0].mxu0
    %893 = vdwg.mxu0
    %v894 = vld [vmem:[%s1] sm:$0xff]
    %v895 = vpack.c.bf16 %v894, %v894
    %v896 = vld [vmem:[%s7] sm:$0xff]
    %v897 = vld [vmem:[%s8] sm:$0x3]
    %v899 = vlaneseq
    %v900 = vshrl.u32 %v899, 7
    %v901 = vsub.s32 0, %v900
    %v902 = vrot.slane %v897, %v901
    %v903 = vlaneseq
    %v904 = vshrl.u32 %v903, 7
    %v905 = vsub.s32 1, %v904
    %v906 = vrot.slane %v897, %v905
    %v910 = vunpack.c.l.b16 %v896
    %v911 = vunpack.c.h.b16 %v896
    %v912 = vpack.c.b16 %v910, %v910
    %v913 = vpack.c.b16 %v911, %v911
    %vm914 = vcmask 64512
    %v916 = vsel %vm914, %v895, 0
    %vm918 = vcmask 1043456
    %v920 = vsel %vm918, %v912, 0
    %v923 = vsel %vm918, %v913, 0
    %925 = vmatprep.subr.bf16.mxu0 %v923
    %926 = vmatpush1.bf16.msra.mxu0 %v920
    %927 = vmatprep.subr.bf16.mxu0 0
    %928 = vmatpush1.bf16.msra.mxu0 0
    %929 = vmatprep.subr.bf16.mxu0 0
    %930 = vmatpush1.bf16.msra.mxu0 0
    %931 = vmatprep.subr.bf16.mxu0 0
    %932 = vmatpush1.bf16.msra.mxu0 0
    %933 = vmatprep.subr.bf16.mxu0 0
    %934 = vmatpush1.bf16.msra.mxu0 0
    %935 = vmatprep.subr.bf16.mxu0 0
    %936 = vmatpush1.bf16.msra.mxu0 0
    %937 = vmatprep.subr.bf16.mxu0 0
    %938 = vmatpush1.bf16.msra.mxu0 0
    %939 = vmatprep.subr.bf16.mxu0 0
    %940 = vmatpush1.bf16.msra.mxu0 0
    %941 = vmatprep.subr.bf16.mxu0 0
    %942 = vmatpush1.bf16.msra.mxu0 0
    %943 = vmatprep.subr.bf16.mxu0 0
    %944 = vmatpush1.bf16.msra.mxu0 0
    %945 = vmatprep.subr.bf16.mxu0 0
    %946 = vmatpush1.bf16.msra.mxu0 0
    %947 = vmatprep.subr.bf16.mxu0 0
    %948 = vmatpush1.bf16.msra.mxu0 0
    %949 = vmatprep.subr.bf16.mxu0 0
    %950 = vmatpush1.bf16.msra.mxu0 0
    %951 = vmatprep.subr.bf16.mxu0 0
    %952 = vmatpush1.bf16.msra.mxu0 0
    %953 = vmatprep.subr.bf16.mxu0 0
    %954 = vmatpush1.bf16.msra.mxu0 0
    %955 = vmatprep.subr.bf16.mxu0 0
    %956 = vmatpush1.bf16.msra.mxu0 0
    %957 = vmatprep.mubr.bf16.mxu0 0
    %958 = vmatmul.mubr.bf16.gmra.mrb[0].mxu0 %v916
    %v959 = vpop.f32.mrb[0].mxu0
    %v960 = vadd.f32 %v902, %v959
    %v961 = vpop.f32.mrb[0].mxu0
    %v962 = vadd.f32 %v906, %v961
    %v963 = vpop.f32.mrb[0].mxu0
    %v964 = vpop.f32.mrb[0].mxu0
    %965 = vdwg.mxu0
    %v966 = vpack.c.bf16 %v960, %v888
    %v967 = vpack.c.bf16 %v962, %v890
    %v968 = vld [vmem:[%s9] sm:$0xff]
    %v969 = vld [vmem:[%s9 + $0x8] sm:$0xff]
    %v970 = vld [vmem:[%s9 + $0x10] sm:$0xff]
    %v971 = vld [vmem:[%s9 + $0x18] sm:$0xff]
    %v972 = vld [vmem:[%s9 + $0x20] sm:$0xff]
    %v973 = vld [vmem:[%s9 + $0x28] sm:$0xff]
    %v974 = vld [vmem:[%s9 + $0x30] sm:$0xff]
    %v975 = vld [vmem:[%s9 + $0x38] sm:$0xff]
    %v976 = vld [vmem:[%s9 + $0x40] sm:$0xff]
    %v977 = vld [vmem:[%s9 + $0x48] sm:$0xff]
    %v978 = vld [vmem:[%s9 + $0x50] sm:$0xff]
    %v979 = vld [vmem:[%s9 + $0x58] sm:$0xff]
    %v980 = vld [vmem:[%s9 + $0x60] sm:$0xff]
    %v981 = vld [vmem:[%s9 + $0x68] sm:$0xff]
    %v982 = vld [vmem:[%s9 + $0x70] sm:$0xff]
    %v983 = vld [vmem:[%s9 + $0x78] sm:$0xff]
    %v984 = vld [vmem:[%s9 + $0x80] sm:$0xff]
    %v985 = vld [vmem:[%s9 + $0x88] sm:$0xff]
    %v986 = vld [vmem:[%s9 + $0x90] sm:$0xff]
    %v987 = vld [vmem:[%s9 + $0x98] sm:$0xff]
    %v988 = vld [vmem:[%s9 + $0xa0] sm:$0xff]
    %v989 = vld [vmem:[%s9 + $0xa8] sm:$0xff]
    %v990 = vld [vmem:[%s9 + $0xb0] sm:$0xff]
    %v991 = vld [vmem:[%s9 + $0xb8] sm:$0xff]
    %v992 = vld [vmem:[%s9 + $0xc0] sm:$0xff]
    %v993 = vld [vmem:[%s9 + $0xc8] sm:$0xff]
    %v994 = vld [vmem:[%s9 + $0xd0] sm:$0xff]
    %v995 = vld [vmem:[%s9 + $0xd8] sm:$0xff]
    %v996 = vld [vmem:[%s9 + $0xe0] sm:$0xff]
    %v997 = vld [vmem:[%s9 + $0xe8] sm:$0xff]
    %v998 = vld [vmem:[%s9 + $0xf0] sm:$0xff]
    %v999 = vld [vmem:[%s9 + $0xf8] sm:$0xff]
    %v1000 = vld [vmem:[%s9 + $0x100] sm:$0xff]
    %v1001 = vld [vmem:[%s9 + $0x108] sm:$0xff]
    %v1002 = vld [vmem:[%s9 + $0x110] sm:$0xff]
    %v1003 = vld [vmem:[%s9 + $0x118] sm:$0xff]
    %v1004 = vld [vmem:[%s9 + $0x120] sm:$0xff]
    %v1005 = vld [vmem:[%s9 + $0x128] sm:$0xff]
    %v1006 = vld [vmem:[%s9 + $0x130] sm:$0xff]
    %v1007 = vld [vmem:[%s9 + $0x138] sm:$0xff]
    %v1008 = vld [vmem:[%s9 + $0x140] sm:$0xff]
    %v1009 = vld [vmem:[%s9 + $0x148] sm:$0xff]
    %v1010 = vld [vmem:[%s9 + $0x150] sm:$0xff]
    %v1011 = vld [vmem:[%s9 + $0x158] sm:$0xff]
    %v1012 = vld [vmem:[%s9 + $0x160] sm:$0xff]
    %v1013 = vld [vmem:[%s9 + $0x168] sm:$0xff]
    %v1014 = vld [vmem:[%s9 + $0x170] sm:$0xff]
    %v1015 = vld [vmem:[%s9 + $0x178] sm:$0xff]
    %v1016 = vld [vmem:[%s9 + $0x180] sm:$0xff]
    %v1017 = vld [vmem:[%s9 + $0x188] sm:$0xff]
    %v1018 = vld [vmem:[%s9 + $0x190] sm:$0xff]
    %v1019 = vld [vmem:[%s9 + $0x198] sm:$0xff]
    %v1020 = vld [vmem:[%s9 + $0x1a0] sm:$0xff]
    %v1021 = vld [vmem:[%s9 + $0x1a8] sm:$0xff]
    %v1022 = vld [vmem:[%s9 + $0x1b0] sm:$0xff]
    %v1023 = vld [vmem:[%s9 + $0x1b8] sm:$0xff]
    %v1024 = vld [vmem:[%s9 + $0x1c0] sm:$0xff]
    %v1025 = vld [vmem:[%s9 + $0x1c8] sm:$0xff]
    %v1026 = vld [vmem:[%s9 + $0x1d0] sm:$0xff]
    %v1027 = vld [vmem:[%s9 + $0x1d8] sm:$0xff]
    %v1028 = vld [vmem:[%s9 + $0x1e0] sm:$0xff]
    %v1029 = vld [vmem:[%s9 + $0x1e8] sm:$0xff]
    %v1030 = vld [vmem:[%s9 + $0x1f0] sm:$0xff]
    %v1031 = vld [vmem:[%s9 + $0x1f8] sm:$0xff]
    %v1032 = vld [vmem:[%s9 + $0x200] sm:$0xff]
    %v1033 = vld [vmem:[%s9 + $0x208] sm:$0xff]
    %v1034 = vld [vmem:[%s9 + $0x210] sm:$0xff]
    %v1035 = vld [vmem:[%s9 + $0x218] sm:$0xff]
    %v1036 = vld [vmem:[%s9 + $0x220] sm:$0xff]
    %v1037 = vld [vmem:[%s9 + $0x228] sm:$0xff]
    %v1038 = vld [vmem:[%s9 + $0x230] sm:$0xff]
    %v1039 = vld [vmem:[%s9 + $0x238] sm:$0xff]
    %v1040 = vld [vmem:[%s9 + $0x240] sm:$0xff]
    %v1041 = vld [vmem:[%s9 + $0x248] sm:$0xff]
    %v1042 = vld [vmem:[%s9 + $0x250] sm:$0xff]
    %v1043 = vld [vmem:[%s9 + $0x258] sm:$0xff]
    %v1044 = vld [vmem:[%s9 + $0x260] sm:$0xff]
    %v1045 = vld [vmem:[%s9 + $0x268] sm:$0xff]
    %v1046 = vld [vmem:[%s9 + $0x270] sm:$0xff]
    %v1047 = vld [vmem:[%s9 + $0x278] sm:$0xff]
    %v1048 = vld [vmem:[%s9 + $0x280] sm:$0xff]
    %v1049 = vld [vmem:[%s9 + $0x288] sm:$0xff]
    %v1050 = vld [vmem:[%s9 + $0x290] sm:$0xff]
    %v1051 = vld [vmem:[%s9 + $0x298] sm:$0xff]
    %v1052 = vld [vmem:[%s9 + $0x2a0] sm:$0xff]
    %v1053 = vld [vmem:[%s9 + $0x2a8] sm:$0xff]
    %v1054 = vld [vmem:[%s9 + $0x2b0] sm:$0xff]
    %v1055 = vld [vmem:[%s9 + $0x2b8] sm:$0xff]
    %v1056 = vld [vmem:[%s9 + $0x2c0] sm:$0xff]
    %v1057 = vld [vmem:[%s9 + $0x2c8] sm:$0xff]
    %v1058 = vld [vmem:[%s9 + $0x2d0] sm:$0xff]
    %v1059 = vld [vmem:[%s9 + $0x2d8] sm:$0xff]
    %v1060 = vld [vmem:[%s9 + $0x2e0] sm:$0xff]
    %v1061 = vld [vmem:[%s9 + $0x2e8] sm:$0xff]
    %v1062 = vld [vmem:[%s9 + $0x2f0] sm:$0xff]
    %v1063 = vld [vmem:[%s9 + $0x2f8] sm:$0xff]
    %v1160 = vunpack.c.l.b16 %v968
    %v1161 = vunpack.c.h.b16 %v968
    %v1162 = vunpack.c.l.b16 %v969
    %v1163 = vunpack.c.h.b16 %v969
    %v1164 = vunpack.c.l.b16 %v970
    %v1165 = vunpack.c.h.b16 %v970
    %v1166 = vunpack.c.l.b16 %v971
    %v1167 = vunpack.c.h.b16 %v971
    %v1168 = vunpack.c.l.b16 %v972
    %v1169 = vunpack.c.h.b16 %v972
    %v1170 = vunpack.c.l.b16 %v973
    %v1171 = vunpack.c.h.b16 %v973
    %v1172 = vunpack.c.l.b16 %v974
    %v1173 = vunpack.c.h.b16 %v974
    %v1174 = vunpack.c.l.b16 %v975
    %v1175 = vunpack.c.h.b16 %v975
    %v1176 = vunpack.c.l.b16 %v976
    %v1177 = vunpack.c.h.b16 %v976
    %v1178 = vunpack.c.l.b16 %v977
    %v1179 = vunpack.c.h.b16 %v977
    %v1180 = vunpack.c.l.b16 %v978
    %v1181 = vunpack.c.h.b16 %v978
    %v1182 = vunpack.c.l.b16 %v979
    %v1183 = vunpack.c.h.b16 %v979
    %v1184 = vunpack.c.l.b16 %v980
    %v1185 = vunpack.c.h.b16 %v980
    %v1186 = vunpack.c.l.b16 %v981
    %v1187 = vunpack.c.h.b16 %v981
    %v1188 = vunpack.c.l.b16 %v982
    %v1189 = vunpack.c.h.b16 %v982
    %v1190 = vunpack.c.l.b16 %v983
    %v1191 = vunpack.c.h.b16 %v983
    %v1192 = vunpack.c.l.b16 %v984
    %v1193 = vunpack.c.h.b16 %v984
    %v1194 = vunpack.c.l.b16 %v985
    %v1195 = vunpack.c.h.b16 %v985
    %v1196 = vunpack.c.l.b16 %v986
    %v1197 = vunpack.c.h.b16 %v986
    %v1198 = vunpack.c.l.b16 %v987
    %v1199 = vunpack.c.h.b16 %v987
    %v1200 = vunpack.c.l.b16 %v988
    %v1201 = vunpack.c.h.b16 %v988
    %v1202 = vunpack.c.l.b16 %v989
    %v1203 = vunpack.c.h.b16 %v989
    %v1204 = vunpack.c.l.b16 %v990
    %v1205 = vunpack.c.h.b16 %v990
    %v1206 = vunpack.c.l.b16 %v991
    %v1207 = vunpack.c.h.b16 %v991
    %v1208 = vunpack.c.l.b16 %v992
    %v1209 = vunpack.c.h.b16 %v992
    %v1210 = vunpack.c.l.b16 %v993
    %v1211 = vunpack.c.h.b16 %v993
    %v1212 = vunpack.c.l.b16 %v994
    %v1213 = vunpack.c.h.b16 %v994
    %v1214 = vunpack.c.l.b16 %v995
    %v1215 = vunpack.c.h.b16 %v995
    %v1216 = vunpack.c.l.b16 %v996
    %v1217 = vunpack.c.h.b16 %v996
    %v1218 = vunpack.c.l.b16 %v997
    %v1219 = vunpack.c.h.b16 %v997
    %v1220 = vunpack.c.l.b16 %v998
    %v1221 = vunpack.c.h.b16 %v998
    %v1222 = vunpack.c.l.b16 %v999
    %v1223 = vunpack.c.h.b16 %v999
    %v1224 = vunpack.c.l.b16 %v1000
    %v1225 = vunpack.c.h.b16 %v1000
    %v1226 = vunpack.c.l.b16 %v1001
    %v1227 = vunpack.c.h.b16 %v1001
    %v1228 = vunpack.c.l.b16 %v1002
    %v1229 = vunpack.c.h.b16 %v1002
    %v1230 = vunpack.c.l.b16 %v1003
    %v1231 = vunpack.c.h.b16 %v1003
    %v1232 = vunpack.c.l.b16 %v1004
    %v1233 = vunpack.c.h.b16 %v1004
    %v1234 = vunpack.c.l.b16 %v1005
    %v1235 = vunpack.c.h.b16 %v1005
    %v1236 = vunpack.c.l.b16 %v1006
    %v1237 = vunpack.c.h.b16 %v1006
    %v1238 = vunpack.c.l.b16 %v1007
    %v1239 = vunpack.c.h.b16 %v1007
    %v1240 = vunpack.c.l.b16 %v1008
    %v1241 = vunpack.c.h.b16 %v1008
    %v1242 = vunpack.c.l.b16 %v1009
    %v1243 = vunpack.c.h.b16 %v1009
    %v1244 = vunpack.c.l.b16 %v1010
    %v1245 = vunpack.c.h.b16 %v1010
    %v1246 = vunpack.c.l.b16 %v1011
    %v1247 = vunpack.c.h.b16 %v1011
    %v1248 = vunpack.c.l.b16 %v1012
    %v1249 = vunpack.c.h.b16 %v1012
    %v1250 = vunpack.c.l.b16 %v1013
    %v1251 = vunpack.c.h.b16 %v1013
    %v1252 = vunpack.c.l.b16 %v1014
    %v1253 = vunpack.c.h.b16 %v1014
    %v1254 = vunpack.c.l.b16 %v1015
    %v1255 = vunpack.c.h.b16 %v1015
    %v1256 = vunpack.c.l.b16 %v1016
    %v1257 = vunpack.c.h.b16 %v1016
    %v1258 = vunpack.c.l.b16 %v1017
    %v1259 = vunpack.c.h.b16 %v1017
    %v1260 = vunpack.c.l.b16 %v1018
    %v1261 = vunpack.c.h.b16 %v1018
    %v1262 = vunpack.c.l.b16 %v1019
    %v1263 = vunpack.c.h.b16 %v1019
    %v1264 = vunpack.c.l.b16 %v1020
    %v1265 = vunpack.c.h.b16 %v1020
    %v1266 = vunpack.c.l.b16 %v1021
    %v1267 = vunpack.c.h.b16 %v1021
    %v1268 = vunpack.c.l.b16 %v1022
    %v1269 = vunpack.c.h.b16 %v1022
    %v1270 = vunpack.c.l.b16 %v1023
    %v1271 = vunpack.c.h.b16 %v1023
    %v1272 = vunpack.c.l.b16 %v1024
    %v1273 = vunpack.c.h.b16 %v1024
    %v1274 = vunpack.c.l.b16 %v1025
    %v1275 = vunpack.c.h.b16 %v1025
    %v1276 = vunpack.c.l.b16 %v1026
    %v1277 = vunpack.c.h.b16 %v1026
    %v1278 = vunpack.c.l.b16 %v1027
    %v1279 = vunpack.c.h.b16 %v1027
    %v1280 = vunpack.c.l.b16 %v1028
    %v1281 = vunpack.c.h.b16 %v1028
    %v1282 = vunpack.c.l.b16 %v1029
    %v1283 = vunpack.c.h.b16 %v1029
    %v1284 = vunpack.c.l.b16 %v1030
    %v1285 = vunpack.c.h.b16 %v1030
    %v1286 = vunpack.c.l.b16 %v1031
    %v1287 = vunpack.c.h.b16 %v1031
    %v1288 = vunpack.c.l.b16 %v1032
    %v1289 = vunpack.c.h.b16 %v1032
    %v1290 = vunpack.c.l.b16 %v1033
    %v1291 = vunpack.c.h.b16 %v1033
    %v1292 = vunpack.c.l.b16 %v1034
    %v1293 = vunpack.c.h.b16 %v1034
    %v1294 = vunpack.c.l.b16 %v1035
    %v1295 = vunpack.c.h.b16 %v1035
    %v1296 = vunpack.c.l.b16 %v1036
    %v1297 = vunpack.c.h.b16 %v1036
    %v1298 = vunpack.c.l.b16 %v1037
    %v1299 = vunpack.c.h.b16 %v1037
    %v1300 = vunpack.c.l.b16 %v1038
    %v1301 = vunpack.c.h.b16 %v1038
    %v1302 = vunpack.c.l.b16 %v1039
    %v1303 = vunpack.c.h.b16 %v1039
    %v1304 = vunpack.c.l.b16 %v1040
    %v1305 = vunpack.c.h.b16 %v1040
    %v1306 = vunpack.c.l.b16 %v1041
    %v1307 = vunpack.c.h.b16 %v1041
    %v1308 = vunpack.c.l.b16 %v1042
    %v1309 = vunpack.c.h.b16 %v1042
    %v1310 = vunpack.c.l.b16 %v1043
    %v1311 = vunpack.c.h.b16 %v1043
    %v1312 = vunpack.c.l.b16 %v1044
    %v1313 = vunpack.c.h.b16 %v1044
    %v1314 = vunpack.c.l.b16 %v1045
    %v1315 = vunpack.c.h.b16 %v1045
    %v1316 = vunpack.c.l.b16 %v1046
    %v1317 = vunpack.c.h.b16 %v1046
    %v1318 = vunpack.c.l.b16 %v1047
    %v1319 = vunpack.c.h.b16 %v1047
    %v1320 = vunpack.c.l.b16 %v1048
    %v1321 = vunpack.c.h.b16 %v1048
    %v1322 = vunpack.c.l.b16 %v1049
    %v1323 = vunpack.c.h.b16 %v1049
    %v1324 = vunpack.c.l.b16 %v1050
    %v1325 = vunpack.c.h.b16 %v1050
    %v1326 = vunpack.c.l.b16 %v1051
    %v1327 = vunpack.c.h.b16 %v1051
    %v1328 = vunpack.c.l.b16 %v1052
    %v1329 = vunpack.c.h.b16 %v1052
    %v1330 = vunpack.c.l.b16 %v1053
    %v1331 = vunpack.c.h.b16 %v1053
    %v1332 = vunpack.c.l.b16 %v1054
    %v1333 = vunpack.c.h.b16 %v1054
    %v1334 = vunpack.c.l.b16 %v1055
    %v1335 = vunpack.c.h.b16 %v1055
    %v1336 = vunpack.c.l.b16 %v1056
    %v1337 = vunpack.c.h.b16 %v1056
    %v1338 = vunpack.c.l.b16 %v1057
    %v1339 = vunpack.c.h.b16 %v1057
    %v1340 = vunpack.c.l.b16 %v1058
    %v1341 = vunpack.c.h.b16 %v1058
    %v1342 = vunpack.c.l.b16 %v1059
    %v1343 = vunpack.c.h.b16 %v1059
    %v1344 = vunpack.c.l.b16 %v1060
    %v1345 = vunpack.c.h.b16 %v1060
    %v1346 = vunpack.c.l.b16 %v1061
    %v1347 = vunpack.c.h.b16 %v1061
    %v1348 = vunpack.c.l.b16 %v1062
    %v1349 = vunpack.c.h.b16 %v1062
    %v1350 = vunpack.c.l.b16 %v1063
    %v1351 = vunpack.c.h.b16 %v1063
    %v1352 = vpack.c.b16 %v1166, %v1160
    %v1353 = vpack.c.b16 %v1167, %v1161
    %v1354 = vpack.c.b16 %v1168, %v1162
    %v1355 = vpack.c.b16 %v1169, %v1163
    %v1356 = vpack.c.b16 %v1170, %v1164
    %v1357 = vpack.c.b16 %v1171, %v1165
    %v1358 = vpack.c.b16 %v1178, %v1172
    %v1359 = vpack.c.b16 %v1179, %v1173
    %v1360 = vpack.c.b16 %v1180, %v1174
    %v1361 = vpack.c.b16 %v1181, %v1175
    %v1362 = vpack.c.b16 %v1182, %v1176
    %v1363 = vpack.c.b16 %v1183, %v1177
    %v1364 = vpack.c.b16 %v1190, %v1184
    %v1365 = vpack.c.b16 %v1191, %v1185
    %v1366 = vpack.c.b16 %v1192, %v1186
    %v1367 = vpack.c.b16 %v1193, %v1187
    %v1368 = vpack.c.b16 %v1194, %v1188
    %v1369 = vpack.c.b16 %v1195, %v1189
    %v1370 = vpack.c.b16 %v1202, %v1196
    %v1371 = vpack.c.b16 %v1203, %v1197
    %v1372 = vpack.c.b16 %v1204, %v1198
    %v1373 = vpack.c.b16 %v1205, %v1199
    %v1374 = vpack.c.b16 %v1206, %v1200
    %v1375 = vpack.c.b16 %v1207, %v1201
    %v1376 = vpack.c.b16 %v1214, %v1208
    %v1377 = vpack.c.b16 %v1215, %v1209
    %v1378 = vpack.c.b16 %v1216, %v1210
    %v1379 = vpack.c.b16 %v1217, %v1211
    %v1380 = vpack.c.b16 %v1218, %v1212
    %v1381 = vpack.c.b16 %v1219, %v1213
    %v1382 = vpack.c.b16 %v1226, %v1220
    %v1383 = vpack.c.b16 %v1227, %v1221
    %v1384 = vpack.c.b16 %v1228, %v1222
    %v1385 = vpack.c.b16 %v1229, %v1223
    %v1386 = vpack.c.b16 %v1230, %v1224
    %v1387 = vpack.c.b16 %v1231, %v1225
    %v1388 = vpack.c.b16 %v1238, %v1232
    %v1389 = vpack.c.b16 %v1239, %v1233
    %v1390 = vpack.c.b16 %v1240, %v1234
    %v1391 = vpack.c.b16 %v1241, %v1235
    %v1392 = vpack.c.b16 %v1242, %v1236
    %v1393 = vpack.c.b16 %v1243, %v1237
    %v1394 = vpack.c.b16 %v1250, %v1244
    %v1395 = vpack.c.b16 %v1251, %v1245
    %v1396 = vpack.c.b16 %v1252, %v1246
    %v1397 = vpack.c.b16 %v1253, %v1247
    %v1398 = vpack.c.b16 %v1254, %v1248
    %v1399 = vpack.c.b16 %v1255, %v1249
    %v1400 = vpack.c.b16 %v1262, %v1256
    %v1401 = vpack.c.b16 %v1263, %v1257
    %v1402 = vpack.c.b16 %v1264, %v1258
    %v1403 = vpack.c.b16 %v1265, %v1259
    %v1404 = vpack.c.b16 %v1266, %v1260
    %v1405 = vpack.c.b16 %v1267, %v1261
    %v1406 = vpack.c.b16 %v1274, %v1268
    %v1407 = vpack.c.b16 %v1275, %v1269
    %v1408 = vpack.c.b16 %v1276, %v1270
    %v1409 = vpack.c.b16 %v1277, %v1271
    %v1410 = vpack.c.b16 %v1278, %v1272
    %v1411 = vpack.c.b16 %v1279, %v1273
    %v1412 = vpack.c.b16 %v1286, %v1280
    %v1413 = vpack.c.b16 %v1287, %v1281
    %v1414 = vpack.c.b16 %v1288, %v1282
    %v1415 = vpack.c.b16 %v1289, %v1283
    %v1416 = vpack.c.b16 %v1290, %v1284
    %v1417 = vpack.c.b16 %v1291, %v1285
    %v1418 = vpack.c.b16 %v1298, %v1292
    %v1419 = vpack.c.b16 %v1299, %v1293
    %v1420 = vpack.c.b16 %v1300, %v1294
    %v1421 = vpack.c.b16 %v1301, %v1295
    %v1422 = vpack.c.b16 %v1302, %v1296
    %v1423 = vpack.c.b16 %v1303, %v1297
    %v1424 = vpack.c.b16 %v1310, %v1304
    %v1425 = vpack.c.b16 %v1311, %v1305
    %v1426 = vpack.c.b16 %v1312, %v1306
    %v1427 = vpack.c.b16 %v1313, %v1307
    %v1428 = vpack.c.b16 %v1314, %v1308
    %v1429 = vpack.c.b16 %v1315, %v1309
    %v1430 = vpack.c.b16 %v1322, %v1316
    %v1431 = vpack.c.b16 %v1323, %v1317
    %v1432 = vpack.c.b16 %v1324, %v1318
    %v1433 = vpack.c.b16 %v1325, %v1319
    %v1434 = vpack.c.b16 %v1326, %v1320
    %v1435 = vpack.c.b16 %v1327, %v1321
    %v1436 = vpack.c.b16 %v1334, %v1328
    %v1437 = vpack.c.b16 %v1335, %v1329
    %v1438 = vpack.c.b16 %v1336, %v1330
    %v1439 = vpack.c.b16 %v1337, %v1331
    %v1440 = vpack.c.b16 %v1338, %v1332
    %v1441 = vpack.c.b16 %v1339, %v1333
    %v1442 = vpack.c.b16 %v1346, %v1340
    %v1443 = vpack.c.b16 %v1347, %v1341
    %v1444 = vpack.c.b16 %v1348, %v1342
    %v1445 = vpack.c.b16 %v1349, %v1343
    %v1446 = vpack.c.b16 %v1350, %v1344
    %v1447 = vpack.c.b16 %v1351, %v1345
    %1544 = vmatprep.subr.bf16.mxu0 %v1353
    %1545 = vmatpush1.bf16.msra.mxu0 %v1352
    %1546 = vmatprep.subr.bf16.mxu0 %v1359
    %1547 = vmatpush1.bf16.msra.mxu0 %v1358
    %1548 = vmatprep.subr.bf16.mxu0 %v1365
    %1549 = vmatpush1.bf16.msra.mxu0 %v1364
    %1550 = vmatprep.subr.bf16.mxu0 %v1371
    %1551 = vmatpush1.bf16.msra.mxu0 %v1370
    %1552 = vmatprep.subr.bf16.mxu0 %v1377
    %1553 = vmatpush1.bf16.msra.mxu0 %v1376
    %1554 = vmatprep.subr.bf16.mxu0 %v1383
    %1555 = vmatpush1.bf16.msra.mxu0 %v1382
    %1556 = vmatprep.subr.bf16.mxu0 %v1389
    %1557 = vmatpush1.bf16.msra.mxu0 %v1388
    %1558 = vmatprep.subr.bf16.mxu0 %v1395
    %1559 = vmatpush1.bf16.msra.mxu0 %v1394
    %1560 = vmatprep.subr.bf16.mxu0 %v1401
    %1561 = vmatpush1.bf16.msra.mxu0 %v1400
    %1562 = vmatprep.subr.bf16.mxu0 %v1407
    %1563 = vmatpush1.bf16.msra.mxu0 %v1406
    %1564 = vmatprep.subr.bf16.mxu0 %v1413
    %1565 = vmatpush1.bf16.msra.mxu0 %v1412
    %1566 = vmatprep.subr.bf16.mxu0 %v1419
    %1567 = vmatpush1.bf16.msra.mxu0 %v1418
    %1568 = vmatprep.subr.bf16.mxu0 %v1425
    %1569 = vmatpush1.bf16.msra.mxu0 %v1424
    %1570 = vmatprep.subr.bf16.mxu0 %v1431
    %1571 = vmatpush1.bf16.msra.mxu0 %v1430
    %1572 = vmatprep.subr.bf16.mxu0 %v1437
    %1573 = vmatpush1.bf16.msra.mxu0 %v1436
    %1574 = vmatprep.subr.bf16.mxu0 %v1443
    %1575 = vmatpush1.bf16.msra.mxu0 %v1442
    %1576 = vmatprep.mubr.bf16.mxu0 %v967
    %1577 = vmatmul.mubr.bf16.gmra.mrb[0].mxu0 %v966
    %v1578 = vpop.f32.mrb[0].mxu0
    %v1579 = vadd.f32 0.0, %v1578
    %v1580 = vpop.f32.mrb[0].mxu0
    %v1581 = vadd.f32 0.0, %v1580
    %v1582 = vpop.f32.mrb[0].mxu0
    %v1583 = vadd.f32 0.0, %v1582
    %v1584 = vpop.f32.mrb[0].mxu0
    %v1585 = vadd.f32 0.0, %v1584
    %1586 = vdwg.mxu0
    %1587 = vmatprep.subr.bf16.mxu0 %v1355
    %1588 = vmatpush1.bf16.msra.mxu0 %v1354
    %1589 = vmatprep.subr.bf16.mxu0 %v1361
    %1590 = vmatpush1.bf16.msra.mxu0 %v1360
    %1591 = vmatprep.subr.bf16.mxu0 %v1367
    %1592 = vmatpush1.bf16.msra.mxu0 %v1366
    %1593 = vmatprep.subr.bf16.mxu0 %v1373
    %1594 = vmatpush1.bf16.msra.mxu0 %v1372
    %1595 = vmatprep.subr.bf16.mxu0 %v1379
    %1596 = vmatpush1.bf16.msra.mxu0 %v1378
    %1597 = vmatprep.subr.bf16.mxu0 %v1385
    %1598 = vmatpush1.bf16.msra.mxu0 %v1384
    %1599 = vmatprep.subr.bf16.mxu0 %v1391
    %1600 = vmatpush1.bf16.msra.mxu0 %v1390
    %1601 = vmatprep.subr.bf16.mxu0 %v1397
    %1602 = vmatpush1.bf16.msra.mxu0 %v1396
    %1603 = vmatprep.subr.bf16.mxu0 %v1403
    %1604 = vmatpush1.bf16.msra.mxu0 %v1402
    %1605 = vmatprep.subr.bf16.mxu0 %v1409
    %1606 = vmatpush1.bf16.msra.mxu0 %v1408
    %1607 = vmatprep.subr.bf16.mxu0 %v1415
    %1608 = vmatpush1.bf16.msra.mxu0 %v1414
    %1609 = vmatprep.subr.bf16.mxu0 %v1421
    %1610 = vmatpush1.bf16.msra.mxu0 %v1420
    %1611 = vmatprep.subr.bf16.mxu0 %v1427
    %1612 = vmatpush1.bf16.msra.mxu0 %v1426
    %1613 = vmatprep.subr.bf16.mxu0 %v1433
    %1614 = vmatpush1.bf16.msra.mxu0 %v1432
    %1615 = vmatprep.subr.bf16.mxu0 %v1439
    %1616 = vmatpush1.bf16.msra.mxu0 %v1438
    %1617 = vmatprep.subr.bf16.mxu0 %v1445
    %1618 = vmatpush1.bf16.msra.mxu0 %v1444
    %1619 = vmatprep.mubr.bf16.mxu0 %v967
    %1620 = vmatmul.mubr.bf16.gmra.mrb[0].mxu0 %v966
    %v1621 = vpop.f32.mrb[0].mxu0
    %v1622 = vadd.f32 0.0, %v1621
    %v1623 = vpop.f32.mrb[0].mxu0
    %v1624 = vadd.f32 0.0, %v1623
    %v1625 = vpop.f32.mrb[0].mxu0
    %v1626 = vadd.f32 0.0, %v1625
    %v1627 = vpop.f32.mrb[0].mxu0
    %v1628 = vadd.f32 0.0, %v1627
    %1629 = vdwg.mxu0
    %1630 = vmatprep.subr.bf16.mxu0 %v1357
    %1631 = vmatpush1.bf16.msra.mxu0 %v1356
    %1632 = vmatprep.subr.bf16.mxu0 %v1363
    %1633 = vmatpush1.bf16.msra.mxu0 %v1362
    %1634 = vmatprep.subr.bf16.mxu0 %v1369
    %1635 = vmatpush1.bf16.msra.mxu0 %v1368
    %1636 = vmatprep.subr.bf16.mxu0 %v1375
    %1637 = vmatpush1.bf16.msra.mxu0 %v1374
    %1638 = vmatprep.subr.bf16.mxu0 %v1381
    %1639 = vmatpush1.bf16.msra.mxu0 %v1380
    %1640 = vmatprep.subr.bf16.mxu0 %v1387
    %1641 = vmatpush1.bf16.msra.mxu0 %v1386
    %1642 = vmatprep.subr.bf16.mxu0 %v1393
    %1643 = vmatpush1.bf16.msra.mxu0 %v1392
    %1644 = vmatprep.subr.bf16.mxu0 %v1399
    %1645 = vmatpush1.bf16.msra.mxu0 %v1398
    %1646 = vmatprep.subr.bf16.mxu0 %v1405
    %1647 = vmatpush1.bf16.msra.mxu0 %v1404
    %1648 = vmatprep.subr.bf16.mxu0 %v1411
    %1649 = vmatpush1.bf16.msra.mxu0 %v1410
    %1650 = vmatprep.subr.bf16.mxu0 %v1417
    %1651 = vmatpush1.bf16.msra.mxu0 %v1416
    %1652 = vmatprep.subr.bf16.mxu0 %v1423
    %1653 = vmatpush1.bf16.msra.mxu0 %v1422
    %1654 = vmatprep.subr.bf16.mxu0 %v1429
    %1655 = vmatpush1.bf16.msra.mxu0 %v1428
    %1656 = vmatprep.subr.bf16.mxu0 %v1435
    %1657 = vmatpush1.bf16.msra.mxu0 %v1434
    %1658 = vmatprep.subr.bf16.mxu0 %v1441
    %1659 = vmatpush1.bf16.msra.mxu0 %v1440
    %1660 = vmatprep.subr.bf16.mxu0 %v1447
    %1661 = vmatpush1.bf16.msra.mxu0 %v1446
    %1662 = vmatprep.mubr.bf16.mxu0 %v967
    %1663 = vmatmul.mubr.bf16.gmra.mrb[0].mxu0 %v966
    %v1664 = vpop.f32.mrb[0].mxu0
    %v1665 = vadd.f32 0.0, %v1664
    %v1666 = vpop.f32.mrb[0].mxu0
    %v1667 = vadd.f32 0.0, %v1666
    %v1668 = vpop.f32.mrb[0].mxu0
    %v1669 = vadd.f32 0.0, %v1668
    %v1670 = vpop.f32.mrb[0].mxu0
    %v1671 = vadd.f32 0.0, %v1670
    %1672 = vdwg.mxu0
    %v1673 = vsub.f32 %v1622, %v1626
    %v1674 = vsub.f32 %v1624, %v1628
    %v1675 = vsub.f32 %v1665, %v1669
    %v1676 = vsub.f32 %v1667, %v1671
    %v1677 = vmul.f32 %v1579, %v1673
    %v1678 = vmul.f32 %v1581, %v1674
    %v1679 = vmul.f32 %v1583, %v1673
    %v1680 = vmul.f32 %v1585, %v1674
    %v1681 = vld [vmem:[%s17] sm:$0xff]
    %v1682 = vld [vmem:[%s17 + $0x8] sm:$0xff]
    %v1683 = vld [vmem:[%s17 + $0x10] sm:$0xff]
    %v1684 = vld [vmem:[%s17 + $0x18] sm:$0xff]
    %v1685 = vld [vmem:[%s17 + $0x20] sm:$0xff]
    %v1686 = vld [vmem:[%s17 + $0x28] sm:$0xff]
    %v1687 = vld [vmem:[%s17 + $0x30] sm:$0xff]
    %v1688 = vld [vmem:[%s17 + $0x38] sm:$0xff]
    %v1689 = vld [vmem:[%s17 + $0x40] sm:$0xff]
    %v1690 = vld [vmem:[%s17 + $0x48] sm:$0xff]
    %v1691 = vld [vmem:[%s17 + $0x50] sm:$0xff]
    %v1692 = vld [vmem:[%s17 + $0x58] sm:$0xff]
    %v1693 = vld [vmem:[%s17 + $0x60] sm:$0xff]
    %v1694 = vld [vmem:[%s17 + $0x68] sm:$0xff]
    %v1695 = vld [vmem:[%s17 + $0x70] sm:$0xff]
    %v1696 = vld [vmem:[%s17 + $0x78] sm:$0xff]
    %v1697 = vld [vmem:[%s17 + $0x80] sm:$0xff]
    %v1698 = vld [vmem:[%s17 + $0x88] sm:$0xff]
    %v1699 = vld [vmem:[%s17 + $0x90] sm:$0xff]
    %v1700 = vld [vmem:[%s17 + $0x98] sm:$0xff]
    %v1701 = vld [vmem:[%s17 + $0xa0] sm:$0xff]
    %v1702 = vld [vmem:[%s17 + $0xa8] sm:$0xff]
    %v1703 = vld [vmem:[%s17 + $0xb0] sm:$0xff]
    %v1704 = vld [vmem:[%s17 + $0xb8] sm:$0xff]
    %v1705 = vld [vmem:[%s17 + $0xc0] sm:$0xff]
    %v1706 = vld [vmem:[%s17 + $0xc8] sm:$0xff]
    %v1707 = vld [vmem:[%s17 + $0xd0] sm:$0xff]
    %v1708 = vld [vmem:[%s17 + $0xd8] sm:$0xff]
    %v1709 = vld [vmem:[%s17 + $0xe0] sm:$0xff]
    %v1710 = vld [vmem:[%s17 + $0xe8] sm:$0xff]
    %v1711 = vld [vmem:[%s17 + $0xf0] sm:$0xff]
    %v1712 = vld [vmem:[%s17 + $0xf8] sm:$0xff]
    %1713 = vmatprep.subr.mxu0 0.0
    %1714 = vmatpush1.msra.mxu0 %v1681
    %1715 = vmatprep.subr.mxu0 0.0
    %1716 = vmatpush1.msra.mxu0 %v1682
    %1717 = vmatprep.subr.mxu0 0.0
    %1718 = vmatpush1.msra.mxu0 %v1683
    %1719 = vmatprep.subr.mxu0 0.0
    %1720 = vmatpush1.msra.mxu0 %v1684
    %1721 = vmatprep.subr.mxu0 0.0
    %1722 = vmatpush1.msra.mxu0 %v1685
    %1723 = vmatprep.subr.mxu0 0.0
    %1724 = vmatpush1.msra.mxu0 %v1686
    %1725 = vmatprep.subr.mxu0 0.0
    %1726 = vmatpush1.msra.mxu0 %v1687
    %1727 = vmatprep.subr.mxu0 0.0
    %1728 = vmatpush1.msra.mxu0 %v1688
    %1729 = vmatprep.subr.mxu0 0.0
    %1730 = vmatpush1.msra.mxu0 %v1689
    %1731 = vmatprep.subr.mxu0 0.0
    %1732 = vmatpush1.msra.mxu0 %v1690
    %1733 = vmatprep.subr.mxu0 0.0
    %1734 = vmatpush1.msra.mxu0 %v1691
    %1735 = vmatprep.subr.mxu0 0.0
    %1736 = vmatpush1.msra.mxu0 %v1692
    %1737 = vmatprep.subr.mxu0 0.0
    %1738 = vmatpush1.msra.mxu0 %v1693
    %1739 = vmatprep.subr.mxu0 0.0
    %1740 = vmatpush1.msra.mxu0 %v1694
    %1741 = vmatprep.subr.mxu0 0.0
    %1742 = vmatpush1.msra.mxu0 %v1695
    %1743 = vmatprep.subr.mxu0 0.0
    %1744 = vmatpush1.msra.mxu0 %v1696
    %1745 = vmatprep.subr.mxu0 0.0
    %1746 = vmatpush1.msra.mxu0 %v1697
    %1747 = vmatprep.subr.mxu0 0.0
    %1748 = vmatpush1.msra.mxu0 %v1698
    %1749 = vmatprep.subr.mxu0 0.0
    %1750 = vmatpush1.msra.mxu0 %v1699
    %1751 = vmatprep.subr.mxu0 0.0
    %1752 = vmatpush1.msra.mxu0 %v1700
    %1753 = vmatprep.subr.mxu0 0.0
    %1754 = vmatpush1.msra.mxu0 %v1701
    %1755 = vmatprep.subr.mxu0 0.0
    %1756 = vmatpush1.msra.mxu0 %v1702
    %1757 = vmatprep.subr.mxu0 0.0
    %1758 = vmatpush1.msra.mxu0 %v1703
    %1759 = vmatprep.subr.mxu0 0.0
    %1760 = vmatpush1.msra.mxu0 %v1704
    %1761 = vmatprep.subr.mxu0 0.0
    %1762 = vmatpush1.msra.mxu0 %v1705
    %1763 = vmatprep.subr.mxu0 0.0
    %1764 = vmatpush1.msra.mxu0 %v1706
    %1765 = vmatprep.subr.mxu0 0.0
    %1766 = vmatpush1.msra.mxu0 %v1707
    %1767 = vmatprep.subr.mxu0 0.0
    %1768 = vmatpush1.msra.mxu0 %v1708
    %1769 = vmatprep.subr.mxu0 0.0
    %1770 = vmatpush1.msra.mxu0 %v1709
    %1771 = vmatprep.subr.mxu0 0.0
    %1772 = vmatpush1.msra.mxu0 %v1710
    %1773 = vmatprep.subr.mxu0 0.0
    %1774 = vmatpush1.msra.mxu0 %v1711
    %1775 = vmatprep.subr.mxu0 0.0
    %1776 = vmatpush1.msra.mxu0 %v1712
    %1777 = vmatprep.mubr.f32.mxu0 %v1678
    %1778 = vmatmul.mubr.f32.gmra.mrb[0].mxu0 %v1677
    %v1779 = vpop.f32.mrb[0].mxu0
    %v1780 = vadd.f32 0.0, %v1779
    %v1781 = vpop.f32.mrb[0].mxu0
    %1782 = vmatprep.mubr.f32.mxu0 %v1680
    %1783 = vmatmul.mubr.f32.gmra.mrb[0].mxu0 %v1679
    %v1784 = vpop.f32.mrb[0].mxu0
    %v1785 = vadd.f32 0.0, %v1784
    %v1786 = vpop.f32.mrb[0].mxu0
    %1787 = vdwg.mxu0
    %v1788 = vmul.f32 %v1780, 0.125
    %v1789 = vmul.f32 %v1785, 0.125
    %v1790 = vsub.f32 0.0, %v1788
    %v1791 = vsub.f32 0.0, %v1789
    %v1792 = vmul.f32 %v1790, 1.442695
    %v1793 = vpow.pop %v1792
    %v1794 = vmul.f32 %v1791, 1.442695
    %v1795 = vpow.pop %v1794
    %v1796 = vadd.f32 %v1793, 1.0
    %v1797 = vadd.f32 %v1795, 1.0
    %v1798 = vrcp.pop %v1796
    %v1799 = vmul.f32 1.0, %v1798
    %v1800 = vrcp.pop %v1797
    %v1801 = vmul.f32 1.0, %v1800
    %v1802 = vld [vmem:[%s18] sm:$0xff]
    %v1804 = vcombine.high %v1802, %v1802
    %vm1805 = vcmask 31744
    %v1807 = vsel %vm1805, %v1799, 0
    %v1810 = vsel %vm1805, %v1801, 0
    %v1812 = vsel %vm918, %v1802, 0
    %v1814 = vsel %vm918, %v1804, 0
    %1816 = vmatprep.subr.mxu0 %v1814
    %1817 = vmatpush1.msra.mxu0 %v1812
    %1818 = vmatprep.subr.mxu0 0.0
    %1819 = vmatpush1.msra.mxu0 0.0
    %1820 = vmatprep.subr.mxu0 0.0
    %1821 = vmatpush1.msra.mxu0 0.0
    %1822 = vmatprep.subr.mxu0 0.0
    %1823 = vmatpush1.msra.mxu0 0.0
    %1824 = vmatprep.subr.mxu0 0.0
    %1825 = vmatpush1.msra.mxu0 0.0
    %1826 = vmatprep.subr.mxu0 0.0
    %1827 = vmatpush1.msra.mxu0 0.0
    %1828 = vmatprep.subr.mxu0 0.0
    %1829 = vmatpush1.msra.mxu0 0.0
    %1830 = vmatprep.subr.mxu0 0.0
    %1831 = vmatpush1.msra.mxu0 0.0
    %1832 = vmatprep.subr.mxu0 0.0
    %1833 = vmatpush1.msra.mxu0 0.0
    %1834 = vmatprep.subr.mxu0 0.0
    %1835 = vmatpush1.msra.mxu0 0.0
    %1836 = vmatprep.subr.mxu0 0.0
    %1837 = vmatpush1.msra.mxu0 0.0
    %1838 = vmatprep.subr.mxu0 0.0
    %1839 = vmatpush1.msra.mxu0 0.0
    %1840 = vmatprep.subr.mxu0 0.0
    %1841 = vmatpush1.msra.mxu0 0.0
    %1842 = vmatprep.subr.mxu0 0.0
    %1843 = vmatpush1.msra.mxu0 0.0
    %1844 = vmatprep.subr.mxu0 0.0
    %1845 = vmatpush1.msra.mxu0 0.0
    %1846 = vmatprep.subr.mxu0 0.0
    %1847 = vmatpush1.msra.mxu0 0.0
    %1848 = vmatprep.subr.mxu0 0.0
    %1849 = vmatpush1.msra.mxu0 0.0
    %1850 = vmatprep.subr.mxu0 0.0
    %1851 = vmatpush1.msra.mxu0 0.0
    %1852 = vmatprep.subr.mxu0 0.0
    %1853 = vmatpush1.msra.mxu0 0.0
    %1854 = vmatprep.subr.mxu0 0.0
    %1855 = vmatpush1.msra.mxu0 0.0
    %1856 = vmatprep.subr.mxu0 0.0
    %1857 = vmatpush1.msra.mxu0 0.0
    %1858 = vmatprep.subr.mxu0 0.0
    %1859 = vmatpush1.msra.mxu0 0.0
    %1860 = vmatprep.subr.mxu0 0.0
    %1861 = vmatpush1.msra.mxu0 0.0
    %1862 = vmatprep.subr.mxu0 0.0
    %1863 = vmatpush1.msra.mxu0 0.0
    %1864 = vmatprep.subr.mxu0 0.0
    %1865 = vmatpush1.msra.mxu0 0.0
    %1866 = vmatprep.subr.mxu0 0.0
    %1867 = vmatpush1.msra.mxu0 0.0
    %1868 = vmatprep.subr.mxu0 0.0
    %1869 = vmatpush1.msra.mxu0 0.0
    %1870 = vmatprep.subr.mxu0 0.0
    %1871 = vmatpush1.msra.mxu0 0.0
    %1872 = vmatprep.subr.mxu0 0.0
    %1873 = vmatpush1.msra.mxu0 0.0
    %1874 = vmatprep.subr.mxu0 0.0
    %1875 = vmatpush1.msra.mxu0 0.0
    %1876 = vmatprep.subr.mxu0 0.0
    %1877 = vmatpush1.msra.mxu0 0.0
    %1878 = vmatprep.subr.mxu0 0.0
    %1879 = vmatpush1.msra.mxu0 0.0
    %1880 = vmatprep.mubr.f32.mxu0 0.0
    %1881 = vmatmul.mubr.f32.gmra.mrb[0].mxu0 %v1807
    %v1882 = vpop.f32.mrb[0].mxu0
    %v1883 = vadd.f32 0.0, %v1882
    %v1884 = vpop.f32.mrb[0].mxu0
    %v1885 = vadd.f32 0.0, %v1884
    %1886 = vmatprep.mubr.f32.mxu0 0.0
    %1887 = vmatmul.mubr.f32.gmra.mrb[0].mxu0 %v1810
    %v1888 = vpop.f32.mrb[0].mxu0
    %v1889 = vadd.f32 0.0, %v1888
    %v1890 = vpop.f32.mrb[0].mxu0
    %v1891 = vadd.f32 0.0, %v1890
    %1892 = vdwg.mxu0
    %v1893 = vmul.f32 %v1883, %v1675
    %v1894 = vmul.f32 %v1885, %v1676
    %v1895 = vmul.f32 %v1889, %v1675
    %v1896 = vmul.f32 %v1891, %v1676
    %v1897 = vadd.f32 %v1669, %v1893
    %v1898 = vadd.f32 %v1671, %v1894
    %v1899 = vadd.f32 %v1669, %v1895
    %v1900 = vadd.f32 %v1671, %v1896
    %v1901 = vpack.c.bf16 %v1899, %v1897
    %v1902 = vpack.c.bf16 %v1900, %v1898
    %v1903 = vld [vmem:[#allocation2] sm:$0xff]
    %v1904 = vld [vmem:[#allocation2 + $0x8] sm:$0xff]
    %v1905 = vld [vmem:[#allocation2 + $0x10] sm:$0xff]
    %v1906 = vld [vmem:[#allocation2 + $0x18] sm:$0xff]
    %v1907 = vld [vmem:[#allocation2 + $0x20] sm:$0xff]
    %v1908 = vld [vmem:[#allocation2 + $0x28] sm:$0xff]
    %v1909 = vld [vmem:[#allocation2 + $0x30] sm:$0xff]
    %v1910 = vld [vmem:[#allocation2 + $0x38] sm:$0xff]
    %v1911 = vld [vmem:[#allocation2 + $0x40] sm:$0xff]
    %v1912 = vld [vmem:[#allocation2 + $0x48] sm:$0xff]
    %v1913 = vld [vmem:[#allocation2 + $0x50] sm:$0xff]
    %v1914 = vld [vmem:[#allocation2 + $0x58] sm:$0xff]
    %v1915 = vld [vmem:[#allocation2 + $0x60] sm:$0xff]
    %v1916 = vld [vmem:[#allocation2 + $0x68] sm:$0xff]
    %v1917 = vld [vmem:[#allocation2 + $0x70] sm:$0xff]
    %v1918 = vld [vmem:[#allocation2 + $0x78] sm:$0xff]
    %v1919 = vld [vmem:[#allocation2 + $0x80] sm:$0xff]
    %v1920 = vld [vmem:[#allocation2 + $0x88] sm:$0xff]
    %v1921 = vld [vmem:[#allocation2 + $0x90] sm:$0xff]
    %v1922 = vld [vmem:[#allocation2 + $0x98] sm:$0xff]
    %v1923 = vld [vmem:[#allocation2 + $0xa0] sm:$0xff]
    %v1924 = vld [vmem:[#allocation2 + $0xa8] sm:$0xff]
    %v1925 = vld [vmem:[#allocation2 + $0xb0] sm:$0xff]
    %v1926 = vld [vmem:[#allocation2 + $0xb8] sm:$0xff]
    %v1927 = vld [vmem:[#allocation2 + $0xc0] sm:$0xff]
    %v1928 = vld [vmem:[#allocation2 + $0xc8] sm:$0xff]
    %v1929 = vld [vmem:[#allocation2 + $0xd0] sm:$0xff]
    %v1930 = vld [vmem:[#allocation2 + $0xd8] sm:$0xff]
    %v1931 = vld [vmem:[#allocation2 + $0xe0] sm:$0xff]
    %v1932 = vld [vmem:[#allocation2 + $0xe8] sm:$0xff]
    %v1933 = vld [vmem:[#allocation2 + $0xf0] sm:$0xff]
    %v1934 = vld [vmem:[#allocation2 + $0xf8] sm:$0xff]
    %v1967 = vunpack.c.l.b16 %v1903
    %v1968 = vunpack.c.h.b16 %v1903
    %v1969 = vunpack.c.l.b16 %v1904
    %v1970 = vunpack.c.h.b16 %v1904
    %v1971 = vunpack.c.l.b16 %v1905
    %v1972 = vunpack.c.h.b16 %v1905
    %v1973 = vunpack.c.l.b16 %v1906
    %v1974 = vunpack.c.h.b16 %v1906
    %v1975 = vunpack.c.l.b16 %v1907
    %v1976 = vunpack.c.h.b16 %v1907
    %v1977 = vunpack.c.l.b16 %v1908
    %v1978 = vunpack.c.h.b16 %v1908
    %v1979 = vunpack.c.l.b16 %v1909
    %v1980 = vunpack.c.h.b16 %v1909
    %v1981 = vunpack.c.l.b16 %v1910
    %v1982 = vunpack.c.h.b16 %v1910
    %v1983 = vunpack.c.l.b16 %v1911
    %v1984 = vunpack.c.h.b16 %v1911
    %v1985 = vunpack.c.l.b16 %v1912
    %v1986 = vunpack.c.h.b16 %v1912
    %v1987 = vunpack.c.l.b16 %v1913
    %v1988 = vunpack.c.h.b16 %v1913
    %v1989 = vunpack.c.l.b16 %v1914
    %v1990 = vunpack.c.h.b16 %v1914
    %v1991 = vunpack.c.l.b16 %v1915
    %v1992 = vunpack.c.h.b16 %v1915
    %v1993 = vunpack.c.l.b16 %v1916
    %v1994 = vunpack.c.h.b16 %v1916
    %v1995 = vunpack.c.l.b16 %v1917
    %v1996 = vunpack.c.h.b16 %v1917
    %v1997 = vunpack.c.l.b16 %v1918
    %v1998 = vunpack.c.h.b16 %v1918
    %v1999 = vunpack.c.l.b16 %v1919
    %v2000 = vunpack.c.h.b16 %v1919
    %v2001 = vunpack.c.l.b16 %v1920
    %v2002 = vunpack.c.h.b16 %v1920
    %v2003 = vunpack.c.l.b16 %v1921
    %v2004 = vunpack.c.h.b16 %v1921
    %v2005 = vunpack.c.l.b16 %v1922
    %v2006 = vunpack.c.h.b16 %v1922
    %v2007 = vunpack.c.l.b16 %v1923
    %v2008 = vunpack.c.h.b16 %v1923
    %v2009 = vunpack.c.l.b16 %v1924
    %v2010 = vunpack.c.h.b16 %v1924
    %v2011 = vunpack.c.l.b16 %v1925
    %v2012 = vunpack.c.h.b16 %v1925
    %v2013 = vunpack.c.l.b16 %v1926
    %v2014 = vunpack.c.h.b16 %v1926
    %v2015 = vunpack.c.l.b16 %v1927
    %v2016 = vunpack.c.h.b16 %v1927
    %v2017 = vunpack.c.l.b16 %v1928
    %v2018 = vunpack.c.h.b16 %v1928
    %v2019 = vunpack.c.l.b16 %v1929
    %v2020 = vunpack.c.h.b16 %v1929
    %v2021 = vunpack.c.l.b16 %v1930
    %v2022 = vunpack.c.h.b16 %v1930
    %v2023 = vunpack.c.l.b16 %v1931
    %v2024 = vunpack.c.h.b16 %v1931
    %v2025 = vunpack.c.l.b16 %v1932
    %v2026 = vunpack.c.h.b16 %v1932
    %v2027 = vunpack.c.l.b16 %v1933
    %v2028 = vunpack.c.h.b16 %v1933
    %v2029 = vunpack.c.l.b16 %v1934
    %v2030 = vunpack.c.h.b16 %v1934
    %v2031 = vpack.c.b16 %v1969, %v1967
    %v2032 = vpack.c.b16 %v1970, %v1968
    %v2033 = vpack.c.b16 %v1973, %v1971
    %v2034 = vpack.c.b16 %v1974, %v1972
    %v2035 = vpack.c.b16 %v1977, %v1975
    %v2036 = vpack.c.b16 %v1978, %v1976
    %v2037 = vpack.c.b16 %v1981, %v1979
    %v2038 = vpack.c.b16 %v1982, %v1980
    %v2039 = vpack.c.b16 %v1985, %v1983
    %v2040 = vpack.c.b16 %v1986, %v1984
    %v2041 = vpack.c.b16 %v1989, %v1987
    %v2042 = vpack.c.b16 %v1990, %v1988
    %v2043 = vpack.c.b16 %v1993, %v1991
    %v2044 = vpack.c.b16 %v1994, %v1992
    %v2045 = vpack.c.b16 %v1997, %v1995
    %v2046 = vpack.c.b16 %v1998, %v1996
    %v2047 = vpack.c.b16 %v2001, %v1999
    %v2048 = vpack.c.b16 %v2002, %v2000
    %v2049 = vpack.c.b16 %v2005, %v2003
    %v2050 = vpack.c.b16 %v2006, %v2004
    %v2051 = vpack.c.b16 %v2009, %v2007
    %v2052 = vpack.c.b16 %v2010, %v2008
    %v2053 = vpack.c.b16 %v2013, %v2011
    %v2054 = vpack.c.b16 %v2014, %v2012
    %v2055 = vpack.c.b16 %v2017, %v2015
    %v2056 = vpack.c.b16 %v2018, %v2016
    %v2057 = vpack.c.b16 %v2021, %v2019
    %v2058 = vpack.c.b16 %v2022, %v2020
    %v2059 = vpack.c.b16 %v2025, %v2023
    %v2060 = vpack.c.b16 %v2026, %v2024
    %v2061 = vpack.c.b16 %v2029, %v2027
    %v2062 = vpack.c.b16 %v2030, %v2028
    %2095 = vmatprep.subr.bf16.mxu0 %v2032
    %2096 = vmatpush1.bf16.msra.mxu0 %v2031
    %2097 = vmatprep.subr.bf16.mxu0 %v2034
    %2098 = vmatpush1.bf16.msra.mxu0 %v2033
    %2099 = vmatprep.subr.bf16.mxu0 %v2036
    %2100 = vmatpush1.bf16.msra.mxu0 %v2035
    %2101 = vmatprep.subr.bf16.mxu0 %v2038
    %2102 = vmatpush1.bf16.msra.mxu0 %v2037
    %2103 = vmatprep.subr.bf16.mxu0 %v2040
    %2104 = vmatpush1.bf16.msra.mxu0 %v2039
    %2105 = vmatprep.subr.bf16.mxu0 %v2042
    %2106 = vmatpush1.bf16.msra.mxu0 %v2041
    %2107 = vmatprep.subr.bf16.mxu0 %v2044
    %2108 = vmatpush1.bf16.msra.mxu0 %v2043
    %2109 = vmatprep.subr.bf16.mxu0 %v2046
    %2110 = vmatpush1.bf16.msra.mxu0 %v2045
    %2111 = vmatprep.subr.bf16.mxu0 %v2048
    %2112 = vmatpush1.bf16.msra.mxu0 %v2047
    %2113 = vmatprep.subr.bf16.mxu0 %v2050
    %2114 = vmatpush1.bf16.msra.mxu0 %v2049
    %2115 = vmatprep.subr.bf16.mxu0 %v2052
    %2116 = vmatpush1.bf16.msra.mxu0 %v2051
    %2117 = vmatprep.subr.bf16.mxu0 %v2054
    %2118 = vmatpush1.bf16.msra.mxu0 %v2053
    %2119 = vmatprep.subr.bf16.mxu0 %v2056
    %2120 = vmatpush1.bf16.msra.mxu0 %v2055
    %2121 = vmatprep.subr.bf16.mxu0 %v2058
    %2122 = vmatpush1.bf16.msra.mxu0 %v2057
    %2123 = vmatprep.subr.bf16.mxu0 %v2060
    %2124 = vmatpush1.bf16.msra.mxu0 %v2059
    %2125 = vmatprep.subr.bf16.mxu0 %v2062
    %2126 = vmatpush1.bf16.msra.mxu0 %v2061
    %2127 = vmatprep.mubr.bf16.mxu0 %v1902
    %2128 = vmatmul.mubr.bf16.gmra.mrb[0].mxu0 %v1901
    %v2129 = vpop.f32.mrb[0].mxu0
    %v2130 = vadd.f32 0.0, %v2129
    %v2131 = vpop.f32.mrb[0].mxu0
    %v2132 = vadd.f32 0.0, %v2131
    %v2133 = vpop.f32.mrb[0].mxu0
    %v2134 = vadd.f32 0.0, %v2133
    %v2135 = vpop.f32.mrb[0].mxu0
    %v2136 = vadd.f32 0.0, %v2135
    %2137 = vdwg.mxu0
    %v2138 = vadd.f32 %v888, %v2130
    %v2139 = vadd.f32 %v890, %v2132
    %v2140 = vadd.f32 %v960, %v2134
    %v2141 = vadd.f32 %v962, %v2136
    %v2142 = vadd.f32 %v2138, %v2140
    %v2143 = vadd.f32 %v2139, %v2141
    %v2144 = vmul.f32 %v2142, 0.5
    %v2145 = vmul.f32 %v2143, 0.5
    %v2146 = vpack.c.bf16 %v2144, %v2144
    %v2147 = vpack.c.bf16 %v2145, %v2145
    %v2148 = vld [vmem:[#allocation5] sm:$0xff]
    %v2149 = vld [vmem:[#allocation5 + $0x8] sm:$0xff]
    %v2150 = vld [vmem:[#allocation5 + $0x10] sm:$0xff]
    %v2151 = vld [vmem:[#allocation5 + $0x18] sm:$0xff]
    %v2152 = vld [vmem:[#allocation5 + $0x20] sm:$0xff]
    %v2153 = vld [vmem:[#allocation5 + $0x28] sm:$0xff]
    %v2154 = vld [vmem:[#allocation5 + $0x30] sm:$0xff]
    %v2155 = vld [vmem:[#allocation5 + $0x38] sm:$0xff]
    %v2156 = vld [vmem:[#allocation5 + $0x40] sm:$0xff]
    %v2157 = vld [vmem:[#allocation5 + $0x48] sm:$0xff]
    %v2158 = vld [vmem:[#allocation5 + $0x50] sm:$0xff]
    %v2159 = vld [vmem:[#allocation5 + $0x58] sm:$0xff]
    %v2160 = vld [vmem:[#allocation5 + $0x60] sm:$0xff]
    %v2161 = vld [vmem:[#allocation5 + $0x68] sm:$0xff]
    %v2162 = vld [vmem:[#allocation5 + $0x70] sm:$0xff]
    %v2163 = vld [vmem:[#allocation5 + $0x78] sm:$0xff]
    %v2164 = vld [vmem:[#allocation5 + $0x80] sm:$0xff]
    %v2165 = vld [vmem:[#allocation5 + $0x88] sm:$0xff]
    %v2166 = vld [vmem:[#allocation5 + $0x90] sm:$0xff]
    %v2167 = vld [vmem:[#allocation5 + $0x98] sm:$0xff]
    %v2168 = vld [vmem:[#allocation5 + $0xa0] sm:$0xff]
    %v2169 = vld [vmem:[#allocation5 + $0xa8] sm:$0xff]
    %v2170 = vld [vmem:[#allocation5 + $0xb0] sm:$0xff]
    %v2171 = vld [vmem:[#allocation5 + $0xb8] sm:$0xff]
    %v2172 = vld [vmem:[#allocation5 + $0xc0] sm:$0xff]
    %v2173 = vld [vmem:[#allocation5 + $0xc8] sm:$0xff]
    %v2174 = vld [vmem:[#allocation5 + $0xd0] sm:$0xff]
    %v2175 = vld [vmem:[#allocation5 + $0xd8] sm:$0xff]
    %v2176 = vld [vmem:[#allocation5 + $0xe0] sm:$0xff]
    %v2177 = vld [vmem:[#allocation5 + $0xe8] sm:$0xff]
    %v2178 = vld [vmem:[#allocation5 + $0xf0] sm:$0xff]
    %v2179 = vld [vmem:[#allocation5 + $0xf8] sm:$0xff]
    %v2180 = vld [vmem:[#allocation5 + $0x100] sm:$0xff]
    %v2181 = vld [vmem:[#allocation5 + $0x108] sm:$0xff]
    %v2182 = vld [vmem:[#allocation5 + $0x110] sm:$0xff]
    %v2183 = vld [vmem:[#allocation5 + $0x118] sm:$0xff]
    %v2184 = vld [vmem:[#allocation5 + $0x120] sm:$0xff]
    %v2185 = vld [vmem:[#allocation5 + $0x128] sm:$0xff]
    %v2186 = vld [vmem:[#allocation5 + $0x130] sm:$0xff]
    %v2187 = vld [vmem:[#allocation5 + $0x138] sm:$0xff]
    %v2188 = vld [vmem:[#allocation5 + $0x140] sm:$0xff]
    %v2189 = vld [vmem:[#allocation5 + $0x148] sm:$0xff]
    %v2190 = vld [vmem:[#allocation5 + $0x150] sm:$0xff]
    %v2191 = vld [vmem:[#allocation5 + $0x158] sm:$0xff]
    %v2192 = vld [vmem:[#allocation5 + $0x160] sm:$0xff]
    %v2193 = vld [vmem:[#allocation5 + $0x168] sm:$0xff]
    %v2194 = vld [vmem:[#allocation5 + $0x170] sm:$0xff]
    %v2195 = vld [vmem:[#allocation5 + $0x178] sm:$0xff]
    %v2196 = vld [vmem:[#allocation5 + $0x180] sm:$0xff]
    %v2197 = vld [vmem:[#allocation5 + $0x188] sm:$0xff]
    %v2198 = vld [vmem:[#allocation5 + $0x190] sm:$0xff]
    %v2199 = vld [vmem:[#allocation5 + $0x198] sm:$0xff]
    %v2200 = vld [vmem:[#allocation5 + $0x1a0] sm:$0xff]
    %v2201 = vld [vmem:[#allocation5 + $0x1a8] sm:$0xff]
    %v2202 = vld [vmem:[#allocation5 + $0x1b0] sm:$0xff]
    %v2203 = vld [vmem:[#allocation5 + $0x1b8] sm:$0xff]
    %v2204 = vld [vmem:[#allocation5 + $0x1c0] sm:$0xff]
    %v2205 = vld [vmem:[#allocation5 + $0x1c8] sm:$0xff]
    %v2206 = vld [vmem:[#allocation5 + $0x1d0] sm:$0xff]
    %v2207 = vld [vmem:[#allocation5 + $0x1d8] sm:$0xff]
    %v2208 = vld [vmem:[#allocation5 + $0x1e0] sm:$0xff]
    %v2209 = vld [vmem:[#allocation5 + $0x1e8] sm:$0xff]
    %v2210 = vld [vmem:[#allocation5 + $0x1f0] sm:$0xff]
    %v2211 = vld [vmem:[#allocation5 + $0x1f8] sm:$0xff]
    %v2212 = vld [vmem:[%s12] sm:$0xf]
    %v2214 = vlaneseq
    %v2215 = vshrl.u32 %v2214, 7
    %v2216 = vsub.s32 0, %v2215
    %v2217 = vrot.slane %v2212, %v2216
    %v2218 = vlaneseq
    %v2219 = vshrl.u32 %v2218, 7
    %v2220 = vsub.s32 1, %v2219
    %v2221 = vrot.slane %v2212, %v2220
    %v2222 = vlaneseq
    %v2223 = vshrl.u32 %v2222, 7
    %v2224 = vsub.s32 2, %v2223
    %v2225 = vrot.slane %v2212, %v2224
    %v2226 = vlaneseq
    %v2227 = vshrl.u32 %v2226, 7
    %v2228 = vsub.s32 3, %v2227
    %v2229 = vrot.slane %v2212, %v2228
    %v2298 = vunpack.c.l.b16 %v2148
    %v2299 = vunpack.c.h.b16 %v2148
    %v2300 = vunpack.c.l.b16 %v2149
    %v2301 = vunpack.c.h.b16 %v2149
    %v2302 = vunpack.c.l.b16 %v2150
    %v2303 = vunpack.c.h.b16 %v2150
    %v2304 = vunpack.c.l.b16 %v2151
    %v2305 = vunpack.c.h.b16 %v2151
    %v2306 = vunpack.c.l.b16 %v2152
    %v2307 = vunpack.c.h.b16 %v2152
    %v2308 = vunpack.c.l.b16 %v2153
    %v2309 = vunpack.c.h.b16 %v2153
    %v2310 = vunpack.c.l.b16 %v2154
    %v2311 = vunpack.c.h.b16 %v2154
    %v2312 = vunpack.c.l.b16 %v2155
    %v2313 = vunpack.c.h.b16 %v2155
    %v2314 = vunpack.c.l.b16 %v2156
    %v2315 = vunpack.c.h.b16 %v2156
    %v2316 = vunpack.c.l.b16 %v2157
    %v2317 = vunpack.c.h.b16 %v2157
    %v2318 = vunpack.c.l.b16 %v2158
    %v2319 = vunpack.c.h.b16 %v2158
    %v2320 = vunpack.c.l.b16 %v2159
    %v2321 = vunpack.c.h.b16 %v2159
    %v2322 = vunpack.c.l.b16 %v2160
    %v2323 = vunpack.c.h.b16 %v2160
    %v2324 = vunpack.c.l.b16 %v2161
    %v2325 = vunpack.c.h.b16 %v2161
    %v2326 = vunpack.c.l.b16 %v2162
    %v2327 = vunpack.c.h.b16 %v2162
    %v2328 = vunpack.c.l.b16 %v2163
    %v2329 = vunpack.c.h.b16 %v2163
    %v2330 = vunpack.c.l.b16 %v2164
    %v2331 = vunpack.c.h.b16 %v2164
    %v2332 = vunpack.c.l.b16 %v2165
    %v2333 = vunpack.c.h.b16 %v2165
    %v2334 = vunpack.c.l.b16 %v2166
    %v2335 = vunpack.c.h.b16 %v2166
    %v2336 = vunpack.c.l.b16 %v2167
    %v2337 = vunpack.c.h.b16 %v2167
    %v2338 = vunpack.c.l.b16 %v2168
    %v2339 = vunpack.c.h.b16 %v2168
    %v2340 = vunpack.c.l.b16 %v2169
    %v2341 = vunpack.c.h.b16 %v2169
    %v2342 = vunpack.c.l.b16 %v2170
    %v2343 = vunpack.c.h.b16 %v2170
    %v2344 = vunpack.c.l.b16 %v2171
    %v2345 = vunpack.c.h.b16 %v2171
    %v2346 = vunpack.c.l.b16 %v2172
    %v2347 = vunpack.c.h.b16 %v2172
    %v2348 = vunpack.c.l.b16 %v2173
    %v2349 = vunpack.c.h.b16 %v2173
    %v2350 = vunpack.c.l.b16 %v2174
    %v2351 = vunpack.c.h.b16 %v2174
    %v2352 = vunpack.c.l.b16 %v2175
    %v2353 = vunpack.c.h.b16 %v2175
    %v2354 = vunpack.c.l.b16 %v2176
    %v2355 = vunpack.c.h.b16 %v2176
    %v2356 = vunpack.c.l.b16 %v2177
    %v2357 = vunpack.c.h.b16 %v2177
    %v2358 = vunpack.c.l.b16 %v2178
    %v2359 = vunpack.c.h.b16 %v2178
    %v2360 = vunpack.c.l.b16 %v2179
    %v2361 = vunpack.c.h.b16 %v2179
    %v2362 = vunpack.c.l.b16 %v2180
    %v2363 = vunpack.c.h.b16 %v2180
    %v2364 = vunpack.c.l.b16 %v2181
    %v2365 = vunpack.c.h.b16 %v2181
    %v2366 = vunpack.c.l.b16 %v2182
    %v2367 = vunpack.c.h.b16 %v2182
    %v2368 = vunpack.c.l.b16 %v2183
    %v2369 = vunpack.c.h.b16 %v2183
    %v2370 = vunpack.c.l.b16 %v2184
    %v2371 = vunpack.c.h.b16 %v2184
    %v2372 = vunpack.c.l.b16 %v2185
    %v2373 = vunpack.c.h.b16 %v2185
    %v2374 = vunpack.c.l.b16 %v2186
    %v2375 = vunpack.c.h.b16 %v2186
    %v2376 = vunpack.c.l.b16 %v2187
    %v2377 = vunpack.c.h.b16 %v2187
    %v2378 = vunpack.c.l.b16 %v2188
    %v2379 = vunpack.c.h.b16 %v2188
    %v2380 = vunpack.c.l.b16 %v2189
    %v2381 = vunpack.c.h.b16 %v2189
    %v2382 = vunpack.c.l.b16 %v2190
    %v2383 = vunpack.c.h.b16 %v2190
    %v2384 = vunpack.c.l.b16 %v2191
    %v2385 = vunpack.c.h.b16 %v2191
    %v2386 = vunpack.c.l.b16 %v2192
    %v2387 = vunpack.c.h.b16 %v2192
    %v2388 = vunpack.c.l.b16 %v2193
    %v2389 = vunpack.c.h.b16 %v2193
    %v2390 = vunpack.c.l.b16 %v2194
    %v2391 = vunpack.c.h.b16 %v2194
    %v2392 = vunpack.c.l.b16 %v2195
    %v2393 = vunpack.c.h.b16 %v2195
    %v2394 = vunpack.c.l.b16 %v2196
    %v2395 = vunpack.c.h.b16 %v2196
    %v2396 = vunpack.c.l.b16 %v2197
    %v2397 = vunpack.c.h.b16 %v2197
    %v2398 = vunpack.c.l.b16 %v2198
    %v2399 = vunpack.c.h.b16 %v2198
    %v2400 = vunpack.c.l.b16 %v2199
    %v2401 = vunpack.c.h.b16 %v2199
    %v2402 = vunpack.c.l.b16 %v2200
    %v2403 = vunpack.c.h.b16 %v2200
    %v2404 = vunpack.c.l.b16 %v2201
    %v2405 = vunpack.c.h.b16 %v2201
    %v2406 = vunpack.c.l.b16 %v2202
    %v2407 = vunpack.c.h.b16 %v2202
    %v2408 = vunpack.c.l.b16 %v2203
    %v2409 = vunpack.c.h.b16 %v2203
    %v2410 = vunpack.c.l.b16 %v2204
    %v2411 = vunpack.c.h.b16 %v2204
    %v2412 = vunpack.c.l.b16 %v2205
    %v2413 = vunpack.c.h.b16 %v2205
    %v2414 = vunpack.c.l.b16 %v2206
    %v2415 = vunpack.c.h.b16 %v2206
    %v2416 = vunpack.c.l.b16 %v2207
    %v2417 = vunpack.c.h.b16 %v2207
    %v2418 = vunpack.c.l.b16 %v2208
    %v2419 = vunpack.c.h.b16 %v2208
    %v2420 = vunpack.c.l.b16 %v2209
    %v2421 = vunpack.c.h.b16 %v2209
    %v2422 = vunpack.c.l.b16 %v2210
    %v2423 = vunpack.c.h.b16 %v2210
    %v2424 = vunpack.c.l.b16 %v2211
    %v2425 = vunpack.c.h.b16 %v2211
    %v2426 = vpack.c.b16 %v2302, %v2298
    %v2427 = vpack.c.b16 %v2303, %v2299
    %v2428 = vpack.c.b16 %v2304, %v2300
    %v2429 = vpack.c.b16 %v2305, %v2301
    %v2430 = vpack.c.b16 %v2310, %v2306
    %v2431 = vpack.c.b16 %v2311, %v2307
    %v2432 = vpack.c.b16 %v2312, %v2308
    %v2433 = vpack.c.b16 %v2313, %v2309
    %v2434 = vpack.c.b16 %v2318, %v2314
    %v2435 = vpack.c.b16 %v2319, %v2315
    %v2436 = vpack.c.b16 %v2320, %v2316
    %v2437 = vpack.c.b16 %v2321, %v2317
    %v2438 = vpack.c.b16 %v2326, %v2322
    %v2439 = vpack.c.b16 %v2327, %v2323
    %v2440 = vpack.c.b16 %v2328, %v2324
    %v2441 = vpack.c.b16 %v2329, %v2325
    %v2442 = vpack.c.b16 %v2334, %v2330
    %v2443 = vpack.c.b16 %v2335, %v2331
    %v2444 = vpack.c.b16 %v2336, %v2332
    %v2445 = vpack.c.b16 %v2337, %v2333
    %v2446 = vpack.c.b16 %v2342, %v2338
    %v2447 = vpack.c.b16 %v2343, %v2339
    %v2448 = vpack.c.b16 %v2344, %v2340
    %v2449 = vpack.c.b16 %v2345, %v2341
    %v2450 = vpack.c.b16 %v2350, %v2346
    %v2451 = vpack.c.b16 %v2351, %v2347
    %v2452 = vpack.c.b16 %v2352, %v2348
    %v2453 = vpack.c.b16 %v2353, %v2349
    %v2454 = vpack.c.b16 %v2358, %v2354
    %v2455 = vpack.c.b16 %v2359, %v2355
    %v2456 = vpack.c.b16 %v2360, %v2356
    %v2457 = vpack.c.b16 %v2361, %v2357
    %v2458 = vpack.c.b16 %v2366, %v2362
    %v2459 = vpack.c.b16 %v2367, %v2363
    %v2460 = vpack.c.b16 %v2368, %v2364
    %v2461 = vpack.c.b16 %v2369, %v2365
    %v2462 = vpack.c.b16 %v2374, %v2370
    %v2463 = vpack.c.b16 %v2375, %v2371
    %v2464 = vpack.c.b16 %v2376, %v2372
    %v2465 = vpack.c.b16 %v2377, %v2373
    %v2466 = vpack.c.b16 %v2382, %v2378
    %v2467 = vpack.c.b16 %v2383, %v2379
    %v2468 = vpack.c.b16 %v2384, %v2380
    %v2469 = vpack.c.b16 %v2385, %v2381
    %v2470 = vpack.c.b16 %v2390, %v2386
    %v2471 = vpack.c.b16 %v2391, %v2387
    %v2472 = vpack.c.b16 %v2392, %v2388
    %v2473 = vpack.c.b16 %v2393, %v2389
    %v2474 = vpack.c.b16 %v2398, %v2394
    %v2475 = vpack.c.b16 %v2399, %v2395
    %v2476 = vpack.c.b16 %v2400, %v2396
    %v2477 = vpack.c.b16 %v2401, %v2397
    %v2478 = vpack.c.b16 %v2406, %v2402
    %v2479 = vpack.c.b16 %v2407, %v2403
    %v2480 = vpack.c.b16 %v2408, %v2404
    %v2481 = vpack.c.b16 %v2409, %v2405
    %v2482 = vpack.c.b16 %v2414, %v2410
    %v2483 = vpack.c.b16 %v2415, %v2411
    %v2484 = vpack.c.b16 %v2416, %v2412
    %v2485 = vpack.c.b16 %v2417, %v2413
    %v2486 = vpack.c.b16 %v2422, %v2418
    %v2487 = vpack.c.b16 %v2423, %v2419
    %v2488 = vpack.c.b16 %v2424, %v2420
    %v2489 = vpack.c.b16 %v2425, %v2421
    %2554 = vmatprep.subr.bf16.mxu0 %v2427
    %2555 = vmatpush1.bf16.msra.mxu0 %v2426
    %2556 = vmatprep.subr.bf16.mxu0 %v2431
    %2557 = vmatpush1.bf16.msra.mxu0 %v2430
    %2558 = vmatprep.subr.bf16.mxu0 %v2435
    %2559 = vmatpush1.bf16.msra.mxu0 %v2434
    %2560 = vmatprep.subr.bf16.mxu0 %v2439
    %2561 = vmatpush1.bf16.msra.mxu0 %v2438
    %2562 = vmatprep.subr.bf16.mxu0 %v2443
    %2563 = vmatpush1.bf16.msra.mxu0 %v2442
    %2564 = vmatprep.subr.bf16.mxu0 %v2447
    %2565 = vmatpush1.bf16.msra.mxu0 %v2446
    %2566 = vmatprep.subr.bf16.mxu0 %v2451
    %2567 = vmatpush1.bf16.msra.mxu0 %v2450
    %2568 = vmatprep.subr.bf16.mxu0 %v2455
    %2569 = vmatpush1.bf16.msra.mxu0 %v2454
    %2570 = vmatprep.subr.bf16.mxu0 %v2459
    %2571 = vmatpush1.bf16.msra.mxu0 %v2458
    %2572 = vmatprep.subr.bf16.mxu0 %v2463
    %2573 = vmatpush1.bf16.msra.mxu0 %v2462
    %2574 = vmatprep.subr.bf16.mxu0 %v2467
    %2575 = vmatpush1.bf16.msra.mxu0 %v2466
    %2576 = vmatprep.subr.bf16.mxu0 %v2471
    %2577 = vmatpush1.bf16.msra.mxu0 %v2470
    %2578 = vmatprep.subr.bf16.mxu0 %v2475
    %2579 = vmatpush1.bf16.msra.mxu0 %v2474
    %2580 = vmatprep.subr.bf16.mxu0 %v2479
    %2581 = vmatpush1.bf16.msra.mxu0 %v2478
    %2582 = vmatprep.subr.bf16.mxu0 %v2483
    %2583 = vmatpush1.bf16.msra.mxu0 %v2482
    %2584 = vmatprep.subr.bf16.mxu0 %v2487
    %2585 = vmatpush1.bf16.msra.mxu0 %v2486
    %2586 = vmatprep.mubr.bf16.mxu0 %v2147
    %2587 = vmatmul.mubr.bf16.gmra.mrb[0].mxu0 %v2146
    %v2588 = vpop.f32.mrb[0].mxu0
    %v2589 = vadd.f32 %v2217, %v2588
    %v2590 = vpop.f32.mrb[0].mxu0
    %v2591 = vadd.f32 %v2221, %v2590
    %v2592 = vpop.f32.mrb[0].mxu0
    %v2593 = vpop.f32.mrb[0].mxu0
    %2594 = vdwg.mxu0
    %2595 = vmatprep.subr.bf16.mxu0 %v2429
    %2596 = vmatpush1.bf16.msra.mxu0 %v2428
    %2597 = vmatprep.subr.bf16.mxu0 %v2433
    %2598 = vmatpush1.bf16.msra.mxu0 %v2432
    %2599 = vmatprep.subr.bf16.mxu0 %v2437
    %2600 = vmatpush1.bf16.msra.mxu0 %v2436
    %2601 = vmatprep.subr.bf16.mxu0 %v2441
    %2602 = vmatpush1.bf16.msra.mxu0 %v2440
    %2603 = vmatprep.subr.bf16.mxu0 %v2445
    %2604 = vmatpush1.bf16.msra.mxu0 %v2444
    %2605 = vmatprep.subr.bf16.mxu0 %v2449
    %2606 = vmatpush1.bf16.msra.mxu0 %v2448
    %2607 = vmatprep.subr.bf16.mxu0 %v2453
    %2608 = vmatpush1.bf16.msra.mxu0 %v2452
    %2609 = vmatprep.subr.bf16.mxu0 %v2457
    %2610 = vmatpush1.bf16.msra.mxu0 %v2456
    %2611 = vmatprep.subr.bf16.mxu0 %v2461
    %2612 = vmatpush1.bf16.msra.mxu0 %v2460
    %2613 = vmatprep.subr.bf16.mxu0 %v2465
    %2614 = vmatpush1.bf16.msra.mxu0 %v2464
    %2615 = vmatprep.subr.bf16.mxu0 %v2469
    %2616 = vmatpush1.bf16.msra.mxu0 %v2468
    %2617 = vmatprep.subr.bf16.mxu0 %v2473
    %2618 = vmatpush1.bf16.msra.mxu0 %v2472
    %2619 = vmatprep.subr.bf16.mxu0 %v2477
    %2620 = vmatpush1.bf16.msra.mxu0 %v2476
    %2621 = vmatprep.subr.bf16.mxu0 %v2481
    %2622 = vmatpush1.bf16.msra.mxu0 %v2480
    %2623 = vmatprep.subr.bf16.mxu0 %v2485
    %2624 = vmatpush1.bf16.msra.mxu0 %v2484
    %2625 = vmatprep.subr.bf16.mxu0 %v2489
    %2626 = vmatpush1.bf16.msra.mxu0 %v2488
    %2627 = vmatprep.mubr.bf16.mxu0 %v2147
    %2628 = vmatmul.mubr.bf16.gmra.mrb[0].mxu0 %v2146
    %v2629 = vpop.f32.mrb[0].mxu0
    %v2630 = vadd.f32 %v2225, %v2629
    %v2631 = vpop.f32.mrb[0].mxu0
    %v2632 = vadd.f32 %v2229, %v2631
    %v2633 = vpop.f32.mrb[0].mxu0
    %v2634 = vpop.f32.mrb[0].mxu0
    %2635 = vdwg.mxu0
    %v2636 = vmax.f32 %v2589, 0.0
    %v2637 = vmax.f32 %v2591, 0.0
    %v2638 = vmax.f32 %v2630, 0.0
    %v2639 = vmax.f32 %v2632, 0.0
    %v2640 = vpack.c.bf16 %v2636, %v2636
    %v2641 = vpack.c.bf16 %v2637, %v2637
    %v2642 = vpack.c.bf16 %v2638, %v2638
    %v2643 = vpack.c.bf16 %v2639, %v2639
    %v2644 = vld [vmem:[#allocation7] sm:$0xf]
    %v2645 = vld [vmem:[#allocation7 + $0x4] sm:$0xf]
    %v2646 = vld [vmem:[#allocation7 + $0x8] sm:$0xf]
    %v2647 = vld [vmem:[#allocation7 + $0xc] sm:$0xf]
    %v2648 = vld [vmem:[#allocation7 + $0x10] sm:$0xf]
    %v2649 = vld [vmem:[#allocation7 + $0x14] sm:$0xf]
    %v2650 = vld [vmem:[#allocation7 + $0x18] sm:$0xf]
    %v2651 = vld [vmem:[#allocation7 + $0x1c] sm:$0xf]
    %v2652 = vld [vmem:[#allocation7 + $0x20] sm:$0xf]
    %v2653 = vld [vmem:[#allocation7 + $0x24] sm:$0xf]
    %v2654 = vld [vmem:[#allocation7 + $0x28] sm:$0xf]
    %v2655 = vld [vmem:[#allocation7 + $0x2c] sm:$0xf]
    %v2656 = vld [vmem:[#allocation7 + $0x30] sm:$0xf]
    %v2657 = vld [vmem:[#allocation7 + $0x34] sm:$0xf]
    %v2658 = vld [vmem:[#allocation7 + $0x38] sm:$0xf]
    %v2659 = vld [vmem:[#allocation7 + $0x3c] sm:$0xf]
    %v2660 = vld [vmem:[#allocation7 + $0x40] sm:$0xf]
    %v2661 = vld [vmem:[#allocation7 + $0x44] sm:$0xf]
    %v2662 = vld [vmem:[#allocation7 + $0x48] sm:$0xf]
    %v2663 = vld [vmem:[#allocation7 + $0x4c] sm:$0xf]
    %v2664 = vld [vmem:[#allocation7 + $0x50] sm:$0xf]
    %v2665 = vld [vmem:[#allocation7 + $0x54] sm:$0xf]
    %v2666 = vld [vmem:[#allocation7 + $0x58] sm:$0xf]
    %v2667 = vld [vmem:[#allocation7 + $0x5c] sm:$0xf]
    %v2668 = vld [vmem:[#allocation7 + $0x60] sm:$0xf]
    %v2669 = vld [vmem:[#allocation7 + $0x64] sm:$0xf]
    %v2670 = vld [vmem:[#allocation7 + $0x68] sm:$0xf]
    %v2671 = vld [vmem:[#allocation7 + $0x6c] sm:$0xf]
    %v2672 = vld [vmem:[#allocation7 + $0x70] sm:$0xf]
    %v2673 = vld [vmem:[#allocation7 + $0x74] sm:$0xf]
    %v2674 = vld [vmem:[#allocation7 + $0x78] sm:$0xf]
    %v2675 = vld [vmem:[#allocation7 + $0x7c] sm:$0xf]
    %v2676 = vld [vmem:[#allocation7 + $0x80] sm:$0xf]
    %v2677 = vld [vmem:[#allocation7 + $0x84] sm:$0xf]
    %v2678 = vld [vmem:[#allocation7 + $0x88] sm:$0xf]
    %v2679 = vld [vmem:[#allocation7 + $0x8c] sm:$0xf]
    %v2680 = vld [vmem:[#allocation7 + $0x90] sm:$0xf]
    %v2681 = vld [vmem:[#allocation7 + $0x94] sm:$0xf]
    %v2682 = vld [vmem:[#allocation7 + $0x98] sm:$0xf]
    %v2683 = vld [vmem:[#allocation7 + $0x9c] sm:$0xf]
    %v2684 = vld [vmem:[#allocation7 + $0xa0] sm:$0xf]
    %v2685 = vld [vmem:[#allocation7 + $0xa4] sm:$0xf]
    %v2686 = vld [vmem:[#allocation7 + $0xa8] sm:$0xf]
    %v2687 = vld [vmem:[#allocation7 + $0xac] sm:$0xf]
    %v2688 = vld [vmem:[#allocation7 + $0xb0] sm:$0xf]
    %v2689 = vld [vmem:[#allocation7 + $0xb4] sm:$0xf]
    %v2690 = vld [vmem:[#allocation7 + $0xb8] sm:$0xf]
    %v2691 = vld [vmem:[#allocation7 + $0xbc] sm:$0xf]
    %v2692 = vld [vmem:[#allocation7 + $0xc0] sm:$0xf]
    %v2693 = vld [vmem:[#allocation7 + $0xc4] sm:$0xf]
    %v2694 = vld [vmem:[#allocation7 + $0xc8] sm:$0xf]
    %v2695 = vld [vmem:[#allocation7 + $0xcc] sm:$0xf]
    %v2696 = vld [vmem:[#allocation7 + $0xd0] sm:$0xf]
    %v2697 = vld [vmem:[#allocation7 + $0xd4] sm:$0xf]
    %v2698 = vld [vmem:[#allocation7 + $0xd8] sm:$0xf]
    %v2699 = vld [vmem:[#allocation7 + $0xdc] sm:$0xf]
    %v2700 = vld [vmem:[#allocation7 + $0xe0] sm:$0xf]
    %v2701 = vld [vmem:[#allocation7 + $0xe4] sm:$0xf]
    %v2702 = vld [vmem:[#allocation7 + $0xe8] sm:$0xf]
    %v2703 = vld [vmem:[#allocation7 + $0xec] sm:$0xf]
    %v2704 = vld [vmem:[#allocation7 + $0xf0] sm:$0xf]
    %v2705 = vld [vmem:[#allocation7 + $0xf4] sm:$0xf]
    %v2706 = vld [vmem:[#allocation7 + $0xf8] sm:$0xf]
    %v2707 = vld [vmem:[#allocation7 + $0xfc] sm:$0xf]
    %v2708 = vld [vmem:[%s14] sm:$0x1]
    %v2710 = vlaneseq
    %v2711 = vshrl.u32 %v2710, 7
    %v2712 = vsub.s32 0, %v2711
    %v2713 = vrot.slane %v2708, %v2712
    %v2779 = vunpack.c.l.b16 %v2644
    %v2780 = vunpack.c.l.b16 %v2645
    %v2781 = vunpack.c.l.b16 %v2646
    %v2782 = vunpack.c.l.b16 %v2647
    %v2783 = vunpack.c.l.b16 %v2648
    %v2784 = vunpack.c.l.b16 %v2649
    %v2785 = vunpack.c.l.b16 %v2650
    %v2786 = vunpack.c.l.b16 %v2651
    %v2787 = vunpack.c.l.b16 %v2652
    %v2788 = vunpack.c.l.b16 %v2653
    %v2789 = vunpack.c.l.b16 %v2654
    %v2790 = vunpack.c.l.b16 %v2655
    %v2791 = vunpack.c.l.b16 %v2656
    %v2792 = vunpack.c.l.b16 %v2657
    %v2793 = vunpack.c.l.b16 %v2658
    %v2794 = vunpack.c.l.b16 %v2659
    %v2795 = vunpack.c.l.b16 %v2660
    %v2796 = vunpack.c.l.b16 %v2661
    %v2797 = vunpack.c.l.b16 %v2662
    %v2798 = vunpack.c.l.b16 %v2663
    %v2799 = vunpack.c.l.b16 %v2664
    %v2800 = vunpack.c.l.b16 %v2665
    %v2801 = vunpack.c.l.b16 %v2666
    %v2802 = vunpack.c.l.b16 %v2667
    %v2803 = vunpack.c.l.b16 %v2668
    %v2804 = vunpack.c.l.b16 %v2669
    %v2805 = vunpack.c.l.b16 %v2670
    %v2806 = vunpack.c.l.b16 %v2671
    %v2807 = vunpack.c.l.b16 %v2672
    %v2808 = vunpack.c.l.b16 %v2673
    %v2809 = vunpack.c.l.b16 %v2674
    %v2810 = vunpack.c.l.b16 %v2675
    %v2811 = vunpack.c.l.b16 %v2676
    %v2812 = vunpack.c.l.b16 %v2677
    %v2813 = vunpack.c.l.b16 %v2678
    %v2814 = vunpack.c.l.b16 %v2679
    %v2815 = vunpack.c.l.b16 %v2680
    %v2816 = vunpack.c.l.b16 %v2681
    %v2817 = vunpack.c.l.b16 %v2682
    %v2818 = vunpack.c.l.b16 %v2683
    %v2819 = vunpack.c.l.b16 %v2684
    %v2820 = vunpack.c.l.b16 %v2685
    %v2821 = vunpack.c.l.b16 %v2686
    %v2822 = vunpack.c.l.b16 %v2687
    %v2823 = vunpack.c.l.b16 %v2688
    %v2824 = vunpack.c.l.b16 %v2689
    %v2825 = vunpack.c.l.b16 %v2690
    %v2826 = vunpack.c.l.b16 %v2691
    %v2827 = vunpack.c.l.b16 %v2692
    %v2828 = vunpack.c.l.b16 %v2693
    %v2829 = vunpack.c.l.b16 %v2694
    %v2830 = vunpack.c.l.b16 %v2695
    %v2831 = vunpack.c.l.b16 %v2696
    %v2832 = vunpack.c.l.b16 %v2697
    %v2833 = vunpack.c.l.b16 %v2698
    %v2834 = vunpack.c.l.b16 %v2699
    %v2835 = vunpack.c.l.b16 %v2700
    %v2836 = vunpack.c.l.b16 %v2701
    %v2837 = vunpack.c.l.b16 %v2702
    %v2838 = vunpack.c.l.b16 %v2703
    %v2839 = vunpack.c.l.b16 %v2704
    %v2840 = vunpack.c.l.b16 %v2705
    %v2841 = vunpack.c.l.b16 %v2706
    %v2842 = vunpack.c.l.b16 %v2707
    %v2843 = vpack.c.b16 %v2780, %v2779
    %v2844 = vpack.c.b16 %v2782, %v2781
    %v2845 = vpack.c.b16 %v2784, %v2783
    %v2846 = vpack.c.b16 %v2786, %v2785
    %v2847 = vpack.c.b16 %v2788, %v2787
    %v2848 = vpack.c.b16 %v2790, %v2789
    %v2849 = vpack.c.b16 %v2792, %v2791
    %v2850 = vpack.c.b16 %v2794, %v2793
    %v2851 = vpack.c.b16 %v2796, %v2795
    %v2852 = vpack.c.b16 %v2798, %v2797
    %v2853 = vpack.c.b16 %v2800, %v2799
    %v2854 = vpack.c.b16 %v2802, %v2801
    %v2855 = vpack.c.b16 %v2804, %v2803
    %v2856 = vpack.c.b16 %v2806, %v2805
    %v2857 = vpack.c.b16 %v2808, %v2807
    %v2858 = vpack.c.b16 %v2810, %v2809
    %v2859 = vpack.c.b16 %v2812, %v2811
    %v2860 = vpack.c.b16 %v2814, %v2813
    %v2861 = vpack.c.b16 %v2816, %v2815
    %v2862 = vpack.c.b16 %v2818, %v2817
    %v2863 = vpack.c.b16 %v2820, %v2819
    %v2864 = vpack.c.b16 %v2822, %v2821
    %v2865 = vpack.c.b16 %v2824, %v2823
    %v2866 = vpack.c.b16 %v2826, %v2825
    %v2867 = vpack.c.b16 %v2828, %v2827
    %v2868 = vpack.c.b16 %v2830, %v2829
    %v2869 = vpack.c.b16 %v2832, %v2831
    %v2870 = vpack.c.b16 %v2834, %v2833
    %v2871 = vpack.c.b16 %v2836, %v2835
    %v2872 = vpack.c.b16 %v2838, %v2837
    %v2873 = vpack.c.b16 %v2840, %v2839
    %v2874 = vpack.c.b16 %v2842, %v2841
    %2907 = vmatprep.subr.bf16.mxu0 0
    %2908 = vmatpush1.bf16.msra.mxu0 %v2843
    %2909 = vmatprep.subr.bf16.mxu0 0
    %2910 = vmatpush1.bf16.msra.mxu0 %v2844
    %2911 = vmatprep.subr.bf16.mxu0 0
    %2912 = vmatpush1.bf16.msra.mxu0 %v2845
    %2913 = vmatprep.subr.bf16.mxu0 0
    %2914 = vmatpush1.bf16.msra.mxu0 %v2846
    %2915 = vmatprep.subr.bf16.mxu0 0
    %2916 = vmatpush1.bf16.msra.mxu0 %v2847
    %2917 = vmatprep.subr.bf16.mxu0 0
    %2918 = vmatpush1.bf16.msra.mxu0 %v2848
    %2919 = vmatprep.subr.bf16.mxu0 0
    %2920 = vmatpush1.bf16.msra.mxu0 %v2849
    %2921 = vmatprep.subr.bf16.mxu0 0
    %2922 = vmatpush1.bf16.msra.mxu0 %v2850
    %2923 = vmatprep.subr.bf16.mxu0 0
    %2924 = vmatpush1.bf16.msra.mxu0 %v2851
    %2925 = vmatprep.subr.bf16.mxu0 0
    %2926 = vmatpush1.bf16.msra.mxu0 %v2852
    %2927 = vmatprep.subr.bf16.mxu0 0
    %2928 = vmatpush1.bf16.msra.mxu0 %v2853
    %2929 = vmatprep.subr.bf16.mxu0 0
    %2930 = vmatpush1.bf16.msra.mxu0 %v2854
    %2931 = vmatprep.subr.bf16.mxu0 0
    %2932 = vmatpush1.bf16.msra.mxu0 %v2855
    %2933 = vmatprep.subr.bf16.mxu0 0
    %2934 = vmatpush1.bf16.msra.mxu0 %v2856
    %2935 = vmatprep.subr.bf16.mxu0 0
    %2936 = vmatpush1.bf16.msra.mxu0 %v2857
    %2937 = vmatprep.subr.bf16.mxu0 0
    %2938 = vmatpush1.bf16.msra.mxu0 %v2858
    %2939 = vmatprep.mubr.bf16.mxu0 %v2641
    %2940 = vmatmul.mubr.bf16.gmra.mrb[0].mxu0 %v2640
    %v2941 = vpop.f32.mrb[0].mxu0
    %v2942 = vadd.f32 %v2713, %v2941
    %v2943 = vpop.f32.mrb[0].mxu0
    %v2944 = vpop.f32.mrb[0].mxu0
    %v2945 = vpop.f32.mrb[0].mxu0
    %2946 = vdwg.mxu0
    %2947 = vmatprep.subr.bf16.mxu0 0
    %2948 = vmatpush1.bf16.msra.mxu0 %v2859
    %2949 = vmatprep.subr.bf16.mxu0 0
    %2950 = vmatpush1.bf16.msra.mxu0 %v2860
    %2951 = vmatprep.subr.bf16.mxu0 0
    %2952 = vmatpush1.bf16.msra.mxu0 %v2861
    %2953 = vmatprep.subr.bf16.mxu0 0
    %2954 = vmatpush1.bf16.msra.mxu0 %v2862
    %2955 = vmatprep.subr.bf16.mxu0 0
    %2956 = vmatpush1.bf16.msra.mxu0 %v2863
    %2957 = vmatprep.subr.bf16.mxu0 0
    %2958 = vmatpush1.bf16.msra.mxu0 %v2864
    %2959 = vmatprep.subr.bf16.mxu0 0
    %2960 = vmatpush1.bf16.msra.mxu0 %v2865
    %2961 = vmatprep.subr.bf16.mxu0 0
    %2962 = vmatpush1.bf16.msra.mxu0 %v2866
    %2963 = vmatprep.subr.bf16.mxu0 0
    %2964 = vmatpush1.bf16.msra.mxu0 %v2867
    %2965 = vmatprep.subr.bf16.mxu0 0
    %2966 = vmatpush1.bf16.msra.mxu0 %v2868
    %2967 = vmatprep.subr.bf16.mxu0 0
    %2968 = vmatpush1.bf16.msra.mxu0 %v2869
    %2969 = vmatprep.subr.bf16.mxu0 0
    %2970 = vmatpush1.bf16.msra.mxu0 %v2870
    %2971 = vmatprep.subr.bf16.mxu0 0
    %2972 = vmatpush1.bf16.msra.mxu0 %v2871
    %2973 = vmatprep.subr.bf16.mxu0 0
    %2974 = vmatpush1.bf16.msra.mxu0 %v2872
    %2975 = vmatprep.subr.bf16.mxu0 0
    %2976 = vmatpush1.bf16.msra.mxu0 %v2873
    %2977 = vmatprep.subr.bf16.mxu0 0
    %2978 = vmatpush1.bf16.msra.mxu0 %v2874
    %2979 = vmatprep.mubr.bf16.mxu0 %v2643
    %2980 = vmatmul.mubr.bf16.gmra.mrb[0].mxu0 %v2642
    %v2981 = vpop.f32.mrb[0].mxu0
    %v2982 = vadd.f32 %v2942, %v2981
    %v2983 = vpop.f32.mrb[0].mxu0
    %v2984 = vpop.f32.mrb[0].mxu0
    %v2985 = vpop.f32.mrb[0].mxu0
    %2986 = vdwg.mxu0
    %v2987 = vmax.f32 %v2982, 0.0
    %v2988 = vpack.c.bf16 %v2987, %v2987
    %v2989 = vld [vmem:[%s15] sm:$0xf]
    %v2990 = vld [vmem:[%s15 + $0x4] sm:$0xf]
    %v2991 = vld [vmem:[%s15 + $0x8] sm:$0xf]
    %v2992 = vld [vmem:[%s15 + $0xc] sm:$0xf]
    %v2993 = vld [vmem:[%s15 + $0x10] sm:$0xf]
    %v2994 = vld [vmem:[%s15 + $0x14] sm:$0xf]
    %v2995 = vld [vmem:[%s15 + $0x18] sm:$0xf]
    %v2996 = vld [vmem:[%s15 + $0x1c] sm:$0xf]
    %v2997 = vld [vmem:[%s15 + $0x20] sm:$0xf]
    %v2998 = vld [vmem:[%s15 + $0x24] sm:$0xf]
    %v2999 = vld [vmem:[%s15 + $0x28] sm:$0xf]
    %v3000 = vld [vmem:[%s15 + $0x2c] sm:$0xf]
    %v3001 = vld [vmem:[%s15 + $0x30] sm:$0xf]
    %v3002 = vld [vmem:[%s15 + $0x34] sm:$0xf]
    %v3003 = vld [vmem:[%s15 + $0x38] sm:$0xf]
    %v3004 = vld [vmem:[%s15 + $0x3c] sm:$0xf]
    %v3005 = vld [vmem:[%s16] sm:$0x1]
    %v3007 = vlaneseq
    %v3008 = vshrl.u32 %v3007, 7
    %v3009 = vsub.s32 0, %v3008
    %v3010 = vrot.slane %v3005, %v3009
    %v3028 = vunpack.c.l.b16 %v2989
    %v3029 = vunpack.c.l.b16 %v2990
    %v3030 = vunpack.c.l.b16 %v2991
    %v3031 = vunpack.c.l.b16 %v2992
    %v3032 = vunpack.c.l.b16 %v2993
    %v3033 = vunpack.c.l.b16 %v2994
    %v3034 = vunpack.c.l.b16 %v2995
    %v3035 = vunpack.c.l.b16 %v2996
    %v3036 = vunpack.c.l.b16 %v2997
    %v3037 = vunpack.c.l.b16 %v2998
    %v3038 = vunpack.c.l.b16 %v2999
    %v3039 = vunpack.c.l.b16 %v3000
    %v3040 = vunpack.c.l.b16 %v3001
    %v3041 = vunpack.c.l.b16 %v3002
    %v3042 = vunpack.c.l.b16 %v3003
    %v3043 = vunpack.c.l.b16 %v3004
    %v3044 = vpack.c.b16 %v3029, %v3028
    %v3045 = vpack.c.b16 %v3031, %v3030
    %v3046 = vpack.c.b16 %v3033, %v3032
    %v3047 = vpack.c.b16 %v3035, %v3034
    %v3048 = vpack.c.b16 %v3037, %v3036
    %v3049 = vpack.c.b16 %v3039, %v3038
    %v3050 = vpack.c.b16 %v3041, %v3040
    %v3051 = vpack.c.b16 %v3043, %v3042
    %3060 = vmatprep.subr.bf16.mxu0 0
    %3061 = vmatpush1.bf16.msra.mxu0 %v3044
    %3062 = vmatprep.subr.bf16.mxu0 0
    %3063 = vmatpush1.bf16.msra.mxu0 %v3045
    %3064 = vmatprep.subr.bf16.mxu0 0
    %3065 = vmatpush1.bf16.msra.mxu0 %v3046
    %3066 = vmatprep.subr.bf16.mxu0 0
    %3067 = vmatpush1.bf16.msra.mxu0 %v3047
    %3068 = vmatprep.subr.bf16.mxu0 0
    %3069 = vmatpush1.bf16.msra.mxu0 %v3048
    %3070 = vmatprep.subr.bf16.mxu0 0
    %3071 = vmatpush1.bf16.msra.mxu0 %v3049
    %3072 = vmatprep.subr.bf16.mxu0 0
    %3073 = vmatpush1.bf16.msra.mxu0 %v3050
    %3074 = vmatprep.subr.bf16.mxu0 0
    %3075 = vmatpush1.bf16.msra.mxu0 %v3051
    %3076 = vmatprep.subr.bf16.mxu0 0
    %3077 = vmatpush1.bf16.msra.mxu0 0
    %3078 = vmatprep.subr.bf16.mxu0 0
    %3079 = vmatpush1.bf16.msra.mxu0 0
    %3080 = vmatprep.subr.bf16.mxu0 0
    %3081 = vmatpush1.bf16.msra.mxu0 0
    %3082 = vmatprep.subr.bf16.mxu0 0
    %3083 = vmatpush1.bf16.msra.mxu0 0
    %3084 = vmatprep.subr.bf16.mxu0 0
    %3085 = vmatpush1.bf16.msra.mxu0 0
    %3086 = vmatprep.subr.bf16.mxu0 0
    %3087 = vmatpush1.bf16.msra.mxu0 0
    %3088 = vmatprep.subr.bf16.mxu0 0
    %3089 = vmatpush1.bf16.msra.mxu0 0
    %3090 = vmatprep.subr.bf16.mxu0 0
    %3091 = vmatpush1.bf16.msra.mxu0 0
    %3092 = vmatprep.mubr.bf16.mxu0 0
    %3093 = vmatmul.mubr.bf16.gmra.mrb[0].mxu0 %v2988
    %v3094 = vpop.f32.mrb[0].mxu0
    %v3095 = vadd.f32 %v3010, %v3094
    %v3096 = vpop.f32.mrb[0].mxu0
    %v3097 = vpop.f32.mrb[0].mxu0
    %v3098 = vpop.f32.mrb[0].mxu0
    %3099 = vdwg.mxu0
    %3100 = vst [vmem:[#allocation8] sm:$0xff] %v3095
    // Predicated region
    $region90: #{tpu_custom_call.1} parent=1 // pred_check
      _
    $region91: #{tpu_custom_call.1} parent=1 // pred_check_branch
      %3102 = sbr.rel (0) target = $region93
    $region92: #{tpu_custom_call.1} parent=1 // pred_region
      %s3104 = ssub.s32 128, 128
      %3105 = vsyncadd [#allocation4], %s3104
      %s3107 = sshll.u32 [#allocation8], 4
      %s3108 = int_to_ptr.vmem [resolvable:$true] %s3107
      %3110 = dma.vmem_to_hbm [thread:$0]  %s3108, 128, %s19, [#allocation4]
    $region93: #{tpu_custom_call.1} parent=1 // pred_fallthru
      _
    // Predicated region
    $region94: #{tpu_custom_call.1} parent=1 // pred_check
      _
    $region95: #{tpu_custom_call.1} parent=1 // pred_check_branch
      %3112 = sbr.rel (0) target = $region97
    $region96: #{tpu_custom_call.1} parent=1 // pred_region
      %3113 = dma.done [#allocation4], 128
    $region97: #{tpu_custom_call.1} parent=1 // pred_fallthru
      _
    %3114 = vsyncpa [#allocation3], 1
    %3115 = vsyncpa [#allocation6], 1
    %3116 = vsyncpa [#allocation4], 1

</llo_original>
